<compile_context>
chip_gen: v7x
topology: tpu7x:2x2x1
jax: 0.10.0
libtpu: 0.0.40
codegen_flags: <defaults>
</compile_context>

<pallas_src>
import jax
import jax.numpy as jnp
from jax.experimental import pallas as pl
from jax.experimental.pallas import tpu as pltpu

C = 64          # channel width fixed by the module definition
NEG_SLOPE = 0.1


def _leaky(x):
    return jnp.where(x >= 0, x, NEG_SLOPE * x)


# ----------------------------------------------------------------------------
# Fused kernel: conv3x3+bias+LeakyReLU -> conv3x3+bias+LeakyReLU -> *mod,
# one batch element per grid step, intermediate kept in VMEM.
# ----------------------------------------------------------------------------
def tmb_fused_kernel(x_ref, w1_ref, b1_ref, w2_ref, b2_ref, m_ref, o_ref,
                     xpad_s, f1p_s):
    # x_ref : (1, H, W, C) f32        m_ref : (1, 1, C) f32 (per-batch mod vec)
    # w*_ref: (3, 3C, C)   bf16       b*_ref: (1, C)    f32
    # o_ref : (1, H, W, C) f32
    # xpad_s / f1p_s : VMEM (H+2, W+2, C) bf16 zero-padded activation scratch
    H, W = x_ref.shape[1], x_ref.shape[2]

    def conv3x3(src_ref, w_ref, b_ref):
        # dx taps folded into the contraction: 3 matmuls of K=3C instead of
        # nine K=C matmuls (deeper MXU contraction, fewer push/pop sequences).
        acc = jnp.zeros((H * W, C), jnp.float32)
        for dy in range(3):
            rows = src_ref[dy:dy + H]                      # (H, W+2, C) bf16
            patch = jnp.concatenate(
                [rows[:, 0:W, :], rows[:, 1:W + 1, :], rows[:, 2:W + 2, :]],
                axis=-1).reshape(H * W, 3 * C)             # (H*W, 3C) bf16
            acc += jnp.dot(patch, w_ref[dy],
                           preferred_element_type=jnp.float32)
        return _leaky(acc + b_ref[...])                    # (H*W, C) f32

    # Stage the padded input tile in VMEM as the bf16 MXU operand.  Re-zero
    # each step so the zero border is valid regardless of grid iteration
    # order / which core runs this step.
    xpad_s[...] = jnp.zeros(xpad_s.shape, xpad_s.dtype)
    xpad_s[1:H + 1, 1:W + 1, :] = x_ref[0].astype(jnp.bfloat16)

    f1 = conv3x3(xpad_s, w1_ref, b1_ref)                   # conv1 + LeakyReLU

    # Intermediate activation never leaves VMEM (no HBM round trip, no pad op).
    f1p_s[...] = jnp.zeros(f1p_s.shape, f1p_s.dtype)
    f1p_s[1:H + 1, 1:W + 1, :] = f1.reshape(H, W, C).astype(jnp.bfloat16)

    f2 = conv3x3(f1p_s, w2_ref, b2_ref)                    # conv2 + LeakyReLU

    out = f2 * m_ref[0]                                    # fused modulation
    o_ref[0] = out.reshape(H, W, C).astype(o_ref.dtype)


def tmb_forward(x_nhwc, t, params):
    """x_nhwc: (N, H, W, C) f32; t: (N,) f32 per-batch scalar time."""
    N, H, W, _ = x_nhwc.shape

    # t_process: tiny (N, C) MLP in plain JAX, fused into the conv epilogue.
    m = _leaky(t[:, None] * params["tw1"])                 # (N, C)
    m = _leaky(m @ params["tw2"])
    m = _leaky(m @ params["tw3"])
    m = m.reshape(N, 1, C)

    # Group conv weights by dy and cast to bf16 MXU operands.
    w1 = params["fw1"].reshape(3, 3 * C, C).astype(jnp.bfloat16)
    w2 = params["fw2"].reshape(3, 3 * C, C).astype(jnp.bfloat16)

    return pl.pallas_call(
        tmb_fused_kernel,
        out_shape=jax.ShapeDtypeStruct((N, H, W, C), jnp.float32),
        grid=(N,),
        in_specs=[
            pl.BlockSpec((1, H, W, C), lambda n: (n, 0, 0, 0)),
            pl.BlockSpec((3, 3 * C, C), lambda n: (0, 0, 0)),
            pl.BlockSpec((1, C), lambda n: (0, 0)),
            pl.BlockSpec((3, 3 * C, C), lambda n: (0, 0, 0)),
            pl.BlockSpec((1, C), lambda n: (0, 0)),
            pl.BlockSpec((1, 1, C), lambda n: (n, 0, 0)),
        ],
        out_specs=pl.BlockSpec((1, H, W, C), lambda n: (n, 0, 0, 0)),
        scratch_shapes=[
            pltpu.VMEM((H + 2, W + 2, C), jnp.bfloat16),   # padded input
            pltpu.VMEM((H + 2, W + 2, C), jnp.bfloat16),   # padded conv1 out
        ],
        compiler_params=pltpu.CompilerParams(
            dimension_semantics=("parallel",),
            vmem_limit_bytes=32 * 1024 * 1024),
    )(x_nhwc, w1, params["fb1"], w2, params["fb2"], m)


# ----------------------------------------------------------------------------
# Pure-JAX reference (f32 everywhere) for correctness checking.
# ----------------------------------------------------------------------------
def tmb_reference(x_nhwc, t, params):
    dn = ("NHWC", "HWIO", "NHWC")
    f = jax.lax.conv_general_dilated(
        x_nhwc, params["fw1"].reshape(3, 3, C, C), (1, 1), "SAME",
        dimension_numbers=dn) + params["fb1"]
    f = _leaky(f)
    f = jax.lax.conv_general_dilated(
        f, params["fw2"].reshape(3, 3, C, C), (1, 1), "SAME",
        dimension_numbers=dn) + params["fb2"]
    f = _leaky(f)
    m = _leaky(t[:, None] * params["tw1"])                 # (N, C)
    m = _leaky(m @ params["tw2"])
    m = _leaky(m @ params["tw3"])
    return f * m[:, None, None, :]


def make_params(key):
    ks = jax.random.split(key, 7)
    s = 0.05
    return {
        # f_process: two 3x3 convs with bias; weights stored (9, Cin, Cout)
        "fw1": jax.random.normal(ks[0], (9, C, C), jnp.float32) * s,
        "fb1": jax.random.normal(ks[1], (1, C), jnp.float32) * s,
        "fw2": jax.random.normal(ks[2], (9, C, C), jnp.float32) * s,
        "fb2": jax.random.normal(ks[3], (1, C), jnp.float32) * s,
        # t_process: three 1x1 convs, no bias
        "tw1": jax.random.normal(ks[4], (1, C), jnp.float32) * s,
        "tw2": jax.random.normal(ks[5], (C, C), jnp.float32) * s,
        "tw3": jax.random.normal(ks[6], (C, C), jnp.float32) * s,
    }


if __name__ == "__main__":
    key = jax.random.PRNGKey(0)
    kx, kt, kp = jax.random.split(key, 3)

    N, H, W = 2, 16, 16
    # PyTorch inputs would be x:(N,64,H,W) NCHW and t:(N,1,1,1); build NHWC/flat.
    x_nchw = jax.random.normal(kx, (N, C, H, W), jnp.float32)
    x_nhwc = jnp.transpose(x_nchw, (0, 2, 3, 1))           # (N, H, W, C)
    t = jax.random.uniform(kt, (N,), jnp.float32)          # per-batch scalar

    params = make_params(kp)

    out = tmb_forward(x_nhwc, t, params)
    out = jax.block_until_ready(out)

    ref = tmb_reference(x_nhwc, t, params)
    assert out.shape == (N, H, W, C)
    # bf16 matmul operands inside the kernel -> slightly looser tolerance.
    assert jnp.allclose(out, ref, atol=2e-2, rtol=2e-2), "mismatch vs reference"

    print("KERNEL_OK")
</pallas_src>

<mosaic_0001>
module attributes {stable_mosaic.version = 11 : i64} {
  func.func @tmb_fused_kernel(%arg0: i32, %arg1: memref<1x16x16x64xf32, #tpu.memory_space<vmem>>, %arg2: memref<3x192x64xbf16, #tpu.memory_space<vmem>>, %arg3: memref<1x64xf32, #tpu.memory_space<vmem>>, %arg4: memref<3x192x64xbf16, #tpu.memory_space<vmem>>, %arg5: memref<1x64xf32, #tpu.memory_space<vmem>>, %arg6: memref<1x1x64xf32, #tpu.memory_space<vmem>>, %arg7: memref<1x16x16x64xf32, #tpu.memory_space<vmem>>, %arg8: memref<18x18x64xbf16, #tpu.memory_space<vmem>>, %arg9: memref<18x18x64xbf16, #tpu.memory_space<vmem>>) attributes {dimension_semantics = [#tpu.dimension_semantics<parallel>], iteration_bounds = array<i64: 2>, scalar_prefetch = 0 : i64, scratch_operands = 2 : i64, tpu.core_type = #tpu.core_type<tc>, window_params = [{transform_indices = @transform_0, window_bounds = array<i64: 1, 16, 16, 64>}, {pipeline_mode = #tpu.pipeline_mode<synchronous>, transform_indices = @transform_1, window_bounds = array<i64: 3, 192, 64>}, {pipeline_mode = #tpu.pipeline_mode<synchronous>, transform_indices = @transform_2, window_bounds = array<i64: 1, 64>}, {pipeline_mode = #tpu.pipeline_mode<synchronous>, transform_indices = @transform_3, window_bounds = array<i64: 3, 192, 64>}, {pipeline_mode = #tpu.pipeline_mode<synchronous>, transform_indices = @transform_4, window_bounds = array<i64: 1, 64>}, {transform_indices = @transform_5, window_bounds = array<i64: 1, 1, 64>}, {transform_indices = @transform_6, window_bounds = array<i64: 1, 16, 16, 64>}]} {
    %cst = arith.constant 0.000000e+00 : bf16
    %0 = vector.broadcast %cst : bf16 to vector<18x18x64xbf16>
    %c0 = arith.constant 0 : index
    %c0_0 = arith.constant 0 : index
    %c0_1 = arith.constant 0 : index
    %1 = vector.load %arg8[%c0, %c0_0, %c0_1] : memref<18x18x64xbf16, #tpu.memory_space<vmem>>, vector<18x18x64xbf16>
    tpu.vector_store %arg8[%c0, %c0_0, %c0_1], %0 {strides = array<i32>} : memref<18x18x64xbf16, #tpu.memory_space<vmem>>, vector<18x18x64xbf16>,
    %c0_2 = arith.constant 0 : index
    %c0_3 = arith.constant 0 : index
    %c0_4 = arith.constant 0 : index
    %c0_5 = arith.constant 0 : index
    %2 = vector.load %arg1[%c0_2, %c0_3, %c0_4, %c0_5] : memref<1x16x16x64xf32, #tpu.memory_space<vmem>>, vector<1x16x16x64xf32>
    %3 = vector.shape_cast %2 : vector<1x16x16x64xf32> to vector<16x16x64xf32>
    %4 = arith.truncf %3 : vector<16x16x64xf32> to vector<16x16x64xbf16>
    %c1 = arith.constant 1 : index
    %c1_6 = arith.constant 1 : index
    %c0_7 = arith.constant 0 : index
    %5 = vector.load %arg8[%c1, %c1_6, %c0_7] : memref<18x18x64xbf16, #tpu.memory_space<vmem>>, vector<16x16x64xbf16>
    tpu.vector_store %arg8[%c1, %c1_6, %c0_7], %4 {strides = array<i32>} : memref<18x18x64xbf16, #tpu.memory_space<vmem>>, vector<16x16x64xbf16>,
    %cst_8 = arith.constant 0.000000e+00 : f32
    %6 = vector.broadcast %cst_8 : f32 to vector<256x64xf32>
    %c0_9 = arith.constant 0 : index
    %c0_10 = arith.constant 0 : index
    %c0_11 = arith.constant 0 : index
    %7 = vector.load %arg8[%c0_9, %c0_10, %c0_11] : memref<18x18x64xbf16, #tpu.memory_space<vmem>>, vector<16x18x64xbf16>
    %8 = vector.extract_strided_slice %7 {offsets = [0, 0, 0], sizes = [16, 16, 64], strides = [1, 1, 1]} : vector<16x18x64xbf16> to vector<16x16x64xbf16>
    %9 = vector.extract_strided_slice %7 {offsets = [0, 1, 0], sizes = [16, 16, 64], strides = [1, 1, 1]} : vector<16x18x64xbf16> to vector<16x16x64xbf16>
    %10 = vector.extract_strided_slice %7 {offsets = [0, 2, 0], sizes = [16, 16, 64], strides = [1, 1, 1]} : vector<16x18x64xbf16> to vector<16x16x64xbf16>
    %11 = tpu.concatenate %8, %9, %10 in 2 : vector<16x16x64xbf16>, vector<16x16x64xbf16>, vector<16x16x64xbf16> -> vector<16x16x192xbf16>
    %12 = vector.shape_cast %11 : vector<16x16x192xbf16> to vector<256x192xbf16>
    %c0_12 = arith.constant 0 : index
    %c0_13 = arith.constant 0 : index
    %c0_14 = arith.constant 0 : index
    %13 = vector.load %arg2[%c0_12, %c0_13, %c0_14] : memref<3x192x64xbf16, #tpu.memory_space<vmem>>, vector<1x192x64xbf16>
    %14 = vector.shape_cast %13 : vector<1x192x64xbf16> to vector<192x64xbf16>
    %cst_15 = arith.constant dense<0.000000e+00> : vector<256x64xf32>
    %15 = tpu.matmul %12, %14, %cst_15 {dimension_numbers = #tpu.dot_dimension_numbers<[1], [0], [0], [1], [0, 0, 1, 1], [], []>} : vector<256x192xbf16>, vector<192x64xbf16>, vector<256x64xf32> -> vector<256x64xf32>
    %16 = arith.addf %6, %15 : vector<256x64xf32>
    %c1_16 = arith.constant 1 : index
    %c0_17 = arith.constant 0 : index
    %c0_18 = arith.constant 0 : index
    %17 = vector.load %arg8[%c1_16, %c0_17, %c0_18] : memref<18x18x64xbf16, #tpu.memory_space<vmem>>, vector<16x18x64xbf16>
    %18 = vector.extract_strided_slice %17 {offsets = [0, 0, 0], sizes = [16, 16, 64], strides = [1, 1, 1]} : vector<16x18x64xbf16> to vector<16x16x64xbf16>
    %19 = vector.extract_strided_slice %17 {offsets = [0, 1, 0], sizes = [16, 16, 64], strides = [1, 1, 1]} : vector<16x18x64xbf16> to vector<16x16x64xbf16>
    %20 = vector.extract_strided_slice %17 {offsets = [0, 2, 0], sizes = [16, 16, 64], strides = [1, 1, 1]} : vector<16x18x64xbf16> to vector<16x16x64xbf16>
    %21 = tpu.concatenate %18, %19, %20 in 2 : vector<16x16x64xbf16>, vector<16x16x64xbf16>, vector<16x16x64xbf16> -> vector<16x16x192xbf16>
    %22 = vector.shape_cast %21 : vector<16x16x192xbf16> to vector<256x192xbf16>
    %c1_19 = arith.constant 1 : index
    %c0_20 = arith.constant 0 : index
    %c0_21 = arith.constant 0 : index
    %23 = vector.load %arg2[%c1_19, %c0_20, %c0_21] : memref<3x192x64xbf16, #tpu.memory_space<vmem>>, vector<1x192x64xbf16>
    %24 = vector.shape_cast %23 : vector<1x192x64xbf16> to vector<192x64xbf16>
    %cst_22 = arith.constant dense<0.000000e+00> : vector<256x64xf32>
    %25 = tpu.matmul %22, %24, %cst_22 {dimension_numbers = #tpu.dot_dimension_numbers<[1], [0], [0], [1], [0, 0, 1, 1], [], []>} : vector<256x192xbf16>, vector<192x64xbf16>, vector<256x64xf32> -> vector<256x64xf32>
    %26 = arith.addf %16, %25 : vector<256x64xf32>
    %c2 = arith.constant 2 : index
    %c0_23 = arith.constant 0 : index
    %c0_24 = arith.constant 0 : index
    %27 = vector.load %arg8[%c2, %c0_23, %c0_24] : memref<18x18x64xbf16, #tpu.memory_space<vmem>>, vector<16x18x64xbf16>
    %28 = vector.extract_strided_slice %27 {offsets = [0, 0, 0], sizes = [16, 16, 64], strides = [1, 1, 1]} : vector<16x18x64xbf16> to vector<16x16x64xbf16>
    %29 = vector.extract_strided_slice %27 {offsets = [0, 1, 0], sizes = [16, 16, 64], strides = [1, 1, 1]} : vector<16x18x64xbf16> to vector<16x16x64xbf16>
    %30 = vector.extract_strided_slice %27 {offsets = [0, 2, 0], sizes = [16, 16, 64], strides = [1, 1, 1]} : vector<16x18x64xbf16> to vector<16x16x64xbf16>
    %31 = tpu.concatenate %28, %29, %30 in 2 : vector<16x16x64xbf16>, vector<16x16x64xbf16>, vector<16x16x64xbf16> -> vector<16x16x192xbf16>
    %32 = vector.shape_cast %31 : vector<16x16x192xbf16> to vector<256x192xbf16>
    %c2_25 = arith.constant 2 : index
    %c0_26 = arith.constant 0 : index
    %c0_27 = arith.constant 0 : index
    %33 = vector.load %arg2[%c2_25, %c0_26, %c0_27] : memref<3x192x64xbf16, #tpu.memory_space<vmem>>, vector<1x192x64xbf16>
    %34 = vector.shape_cast %33 : vector<1x192x64xbf16> to vector<192x64xbf16>
    %cst_28 = arith.constant dense<0.000000e+00> : vector<256x64xf32>
    %35 = tpu.matmul %32, %34, %cst_28 {dimension_numbers = #tpu.dot_dimension_numbers<[1], [0], [0], [1], [0, 0, 1, 1], [], []>} : vector<256x192xbf16>, vector<192x64xbf16>, vector<256x64xf32> -> vector<256x64xf32>
    %36 = arith.addf %26, %35 : vector<256x64xf32>
    %c0_29 = arith.constant 0 : index
    %c0_30 = arith.constant 0 : index
    %37 = vector.load %arg3[%c0_29, %c0_30] : memref<1x64xf32, #tpu.memory_space<vmem>>, vector<1x64xf32>
    %38 = vector.broadcast %37 : vector<1x64xf32> to vector<256x64xf32>
    %39 = arith.addf %36, %38 : vector<256x64xf32>
    %cst_31 = arith.constant 0.000000e+00 : f32
    %40 = vector.broadcast %cst_31 : f32 to vector<256x64xf32>
    %41 = arith.cmpf oge, %39, %40 : vector<256x64xf32>
    %cst_32 = arith.constant 1.000000e-01 : f32
    %42 = vector.broadcast %cst_32 : f32 to vector<256x64xf32>
    %43 = arith.mulf %42, %39 : vector<256x64xf32>
    %44 = arith.select %41, %39, %43 : vector<256x64xi1>, vector<256x64xf32>
    %cst_33 = arith.constant 0.000000e+00 : bf16
    %45 = vector.broadcast %cst_33 : bf16 to vector<18x18x64xbf16>
    %c0_34 = arith.constant 0 : index
    %c0_35 = arith.constant 0 : index
    %c0_36 = arith.constant 0 : index
    %46 = vector.load %arg9[%c0_34, %c0_35, %c0_36] : memref<18x18x64xbf16, #tpu.memory_space<vmem>>, vector<18x18x64xbf16>
    tpu.vector_store %arg9[%c0_34, %c0_35, %c0_36], %45 {strides = array<i32>} : memref<18x18x64xbf16, #tpu.memory_space<vmem>>, vector<18x18x64xbf16>,
    %47 = vector.shape_cast %44 : vector<256x64xf32> to vector<16x16x64xf32>
    %48 = arith.truncf %47 : vector<16x16x64xf32> to vector<16x16x64xbf16>
    %c1_37 = arith.constant 1 : index
    %c1_38 = arith.constant 1 : index
    %c0_39 = arith.constant 0 : index
    %49 = vector.load %arg9[%c1_37, %c1_38, %c0_39] : memref<18x18x64xbf16, #tpu.memory_space<vmem>>, vector<16x16x64xbf16>
    tpu.vector_store %arg9[%c1_37, %c1_38, %c0_39], %48 {strides = array<i32>} : memref<18x18x64xbf16, #tpu.memory_space<vmem>>, vector<16x16x64xbf16>,
    %cst_40 = arith.constant 0.000000e+00 : f32
    %50 = vector.broadcast %cst_40 : f32 to vector<256x64xf32>
    %c0_41 = arith.constant 0 : index
    %c0_42 = arith.constant 0 : index
    %c0_43 = arith.constant 0 : index
    %51 = vector.load %arg9[%c0_41, %c0_42, %c0_43] : memref<18x18x64xbf16, #tpu.memory_space<vmem>>, vector<16x18x64xbf16>
    %52 = vector.extract_strided_slice %51 {offsets = [0, 0, 0], sizes = [16, 16, 64], strides = [1, 1, 1]} : vector<16x18x64xbf16> to vector<16x16x64xbf16>
    %53 = vector.extract_strided_slice %51 {offsets = [0, 1, 0], sizes = [16, 16, 64], strides = [1, 1, 1]} : vector<16x18x64xbf16> to vector<16x16x64xbf16>
    %54 = vector.extract_strided_slice %51 {offsets = [0, 2, 0], sizes = [16, 16, 64], strides = [1, 1, 1]} : vector<16x18x64xbf16> to vector<16x16x64xbf16>
    %55 = tpu.concatenate %52, %53, %54 in 2 : vector<16x16x64xbf16>, vector<16x16x64xbf16>, vector<16x16x64xbf16> -> vector<16x16x192xbf16>
    %56 = vector.shape_cast %55 : vector<16x16x192xbf16> to vector<256x192xbf16>
    %c0_44 = arith.constant 0 : index
    %c0_45 = arith.constant 0 : index
    %c0_46 = arith.constant 0 : index
    %57 = vector.load %arg4[%c0_44, %c0_45, %c0_46] : memref<3x192x64xbf16, #tpu.memory_space<vmem>>, vector<1x192x64xbf16>
    %58 = vector.shape_cast %57 : vector<1x192x64xbf16> to vector<192x64xbf16>
    %cst_47 = arith.constant dense<0.000000e+00> : vector<256x64xf32>
    %59 = tpu.matmul %56, %58, %cst_47 {dimension_numbers = #tpu.dot_dimension_numbers<[1], [0], [0], [1], [0, 0, 1, 1], [], []>} : vector<256x192xbf16>, vector<192x64xbf16>, vector<256x64xf32> -> vector<256x64xf32>
    %60 = arith.addf %50, %59 : vector<256x64xf32>
    %c1_48 = arith.constant 1 : index
    %c0_49 = arith.constant 0 : index
    %c0_50 = arith.constant 0 : index
    %61 = vector.load %arg9[%c1_48, %c0_49, %c0_50] : memref<18x18x64xbf16, #tpu.memory_space<vmem>>, vector<16x18x64xbf16>
    %62 = vector.extract_strided_slice %61 {offsets = [0, 0, 0], sizes = [16, 16, 64], strides = [1, 1, 1]} : vector<16x18x64xbf16> to vector<16x16x64xbf16>
    %63 = vector.extract_strided_slice %61 {offsets = [0, 1, 0], sizes = [16, 16, 64], strides = [1, 1, 1]} : vector<16x18x64xbf16> to vector<16x16x64xbf16>
    %64 = vector.extract_strided_slice %61 {offsets = [0, 2, 0], sizes = [16, 16, 64], strides = [1, 1, 1]} : vector<16x18x64xbf16> to vector<16x16x64xbf16>
    %65 = tpu.concatenate %62, %63, %64 in 2 : vector<16x16x64xbf16>, vector<16x16x64xbf16>, vector<16x16x64xbf16> -> vector<16x16x192xbf16>
    %66 = vector.shape_cast %65 : vector<16x16x192xbf16> to vector<256x192xbf16>
    %c1_51 = arith.constant 1 : index
    %c0_52 = arith.constant 0 : index
    %c0_53 = arith.constant 0 : index
    %67 = vector.load %arg4[%c1_51, %c0_52, %c0_53] : memref<3x192x64xbf16, #tpu.memory_space<vmem>>, vector<1x192x64xbf16>
    %68 = vector.shape_cast %67 : vector<1x192x64xbf16> to vector<192x64xbf16>
    %cst_54 = arith.constant dense<0.000000e+00> : vector<256x64xf32>
    %69 = tpu.matmul %66, %68, %cst_54 {dimension_numbers = #tpu.dot_dimension_numbers<[1], [0], [0], [1], [0, 0, 1, 1], [], []>} : vector<256x192xbf16>, vector<192x64xbf16>, vector<256x64xf32> -> vector<256x64xf32>
    %70 = arith.addf %60, %69 : vector<256x64xf32>
    %c2_55 = arith.constant 2 : index
    %c0_56 = arith.constant 0 : index
    %c0_57 = arith.constant 0 : index
    %71 = vector.load %arg9[%c2_55, %c0_56, %c0_57] : memref<18x18x64xbf16, #tpu.memory_space<vmem>>, vector<16x18x64xbf16>
    %72 = vector.extract_strided_slice %71 {offsets = [0, 0, 0], sizes = [16, 16, 64], strides = [1, 1, 1]} : vector<16x18x64xbf16> to vector<16x16x64xbf16>
    %73 = vector.extract_strided_slice %71 {offsets = [0, 1, 0], sizes = [16, 16, 64], strides = [1, 1, 1]} : vector<16x18x64xbf16> to vector<16x16x64xbf16>
    %74 = vector.extract_strided_slice %71 {offsets = [0, 2, 0], sizes = [16, 16, 64], strides = [1, 1, 1]} : vector<16x18x64xbf16> to vector<16x16x64xbf16>
    %75 = tpu.concatenate %72, %73, %74 in 2 : vector<16x16x64xbf16>, vector<16x16x64xbf16>, vector<16x16x64xbf16> -> vector<16x16x192xbf16>
    %76 = vector.shape_cast %75 : vector<16x16x192xbf16> to vector<256x192xbf16>
    %c2_58 = arith.constant 2 : index
    %c0_59 = arith.constant 0 : index
    %c0_60 = arith.constant 0 : index
    %77 = vector.load %arg4[%c2_58, %c0_59, %c0_60] : memref<3x192x64xbf16, #tpu.memory_space<vmem>>, vector<1x192x64xbf16>
    %78 = vector.shape_cast %77 : vector<1x192x64xbf16> to vector<192x64xbf16>
    %cst_61 = arith.constant dense<0.000000e+00> : vector<256x64xf32>
    %79 = tpu.matmul %76, %78, %cst_61 {dimension_numbers = #tpu.dot_dimension_numbers<[1], [0], [0], [1], [0, 0, 1, 1], [], []>} : vector<256x192xbf16>, vector<192x64xbf16>, vector<256x64xf32> -> vector<256x64xf32>
    %80 = arith.addf %70, %79 : vector<256x64xf32>
    %c0_62 = arith.constant 0 : index
    %c0_63 = arith.constant 0 : index
    %81 = vector.load %arg5[%c0_62, %c0_63] : memref<1x64xf32, #tpu.memory_space<vmem>>, vector<1x64xf32>
    %82 = vector.broadcast %81 : vector<1x64xf32> to vector<256x64xf32>
    %83 = arith.addf %80, %82 : vector<256x64xf32>
    %cst_64 = arith.constant 0.000000e+00 : f32
    %84 = vector.broadcast %cst_64 : f32 to vector<256x64xf32>
    %85 = arith.cmpf oge, %83, %84 : vector<256x64xf32>
    %cst_65 = arith.constant 1.000000e-01 : f32
    %86 = vector.broadcast %cst_65 : f32 to vector<256x64xf32>
    %87 = arith.mulf %86, %83 : vector<256x64xf32>
    %88 = arith.select %85, %83, %87 : vector<256x64xi1>, vector<256x64xf32>
    %c0_66 = arith.constant 0 : index
    %c0_67 = arith.constant 0 : index
    %c0_68 = arith.constant 0 : index
    %89 = vector.load %arg6[%c0_66, %c0_67, %c0_68] : memref<1x1x64xf32, #tpu.memory_space<vmem>>, vector<1x1x64xf32>
    %90 = vector.shape_cast %89 : vector<1x1x64xf32> to vector<1x64xf32>
    %91 = vector.broadcast %90 : vector<1x64xf32> to vector<256x64xf32>
    %92 = arith.mulf %88, %91 : vector<256x64xf32>
    %93 = vector.shape_cast %92 : vector<256x64xf32> to vector<16x16x64xf32>
    %c0_69 = arith.constant 0 : index
    %c0_70 = arith.constant 0 : index
    %c0_71 = arith.constant 0 : index
    %c0_72 = arith.constant 0 : index
    %94 = vector.load %arg7[%c0_69, %c0_70, %c0_71, %c0_72] : memref<1x16x16x64xf32, #tpu.memory_space<vmem>>, vector<1x16x16x64xf32>
    %95 = vector.shape_cast %94 : vector<1x16x16x64xf32> to vector<16x16x64xf32>
    %96 = vector.shape_cast %93 : vector<16x16x64xf32> to vector<1x16x16x64xf32>
    tpu.vector_store %arg7[%c0_69, %c0_70, %c0_71, %c0_72], %96 {strides = array<i32>} : memref<1x16x16x64xf32, #tpu.memory_space<vmem>>, vector<1x16x16x64xf32>,
    return
  }
  func.func @transform_0(%arg0: i32) -> (i32, i32, i32, i32) {
    %c0_i32 = arith.constant 0 : i32
    %c0_i32_0 = arith.constant 0 : i32
    %c0_i32_1 = arith.constant 0 : i32
    %c0_i32_2 = arith.constant 0 : i32
    return %arg0, %c0_i32, %c0_i32_0, %c0_i32_1 : i32, i32, i32, i32
  }
  func.func @transform_1(%arg0: i32) -> (i32, i32, i32) {
    %c0_i32 = arith.constant 0 : i32
    %c0_i32_0 = arith.constant 0 : i32
    %c0_i32_1 = arith.constant 0 : i32
    %c0_i32_2 = arith.constant 0 : i32
    return %c0_i32, %c0_i32_0, %c0_i32_1 : i32, i32, i32
  }
  func.func @transform_2(%arg0: i32) -> (i32, i32) {
    %c0_i32 = arith.constant 0 : i32
    %c0_i32_0 = arith.constant 0 : i32
    %c0_i32_1 = arith.constant 0 : i32
    return %c0_i32, %c0_i32_0 : i32, i32
  }
  func.func @transform_3(%arg0: i32) -> (i32, i32, i32) {
    %c0_i32 = arith.constant 0 : i32
    %c0_i32_0 = arith.constant 0 : i32
    %c0_i32_1 = arith.constant 0 : i32
    %c0_i32_2 = arith.constant 0 : i32
    return %c0_i32, %c0_i32_0, %c0_i32_1 : i32, i32, i32
  }
  func.func @transform_4(%arg0: i32) -> (i32, i32) {
    %c0_i32 = arith.constant 0 : i32
    %c0_i32_0 = arith.constant 0 : i32
    %c0_i32_1 = arith.constant 0 : i32
    return %c0_i32, %c0_i32_0 : i32, i32
  }
  func.func @transform_5(%arg0: i32) -> (i32, i32, i32) {
    %c0_i32 = arith.constant 0 : i32
    %c0_i32_0 = arith.constant 0 : i32
    %c0_i32_1 = arith.constant 0 : i32
    return %arg0, %c0_i32, %c0_i32_0 : i32, i32, i32
  }
  func.func @transform_6(%arg0: i32) -> (i32, i32, i32, i32) {
    %c0_i32 = arith.constant 0 : i32
    %c0_i32_0 = arith.constant 0 : i32
    %c0_i32_1 = arith.constant 0 : i32
    %c0_i32_2 = arith.constant 0 : i32
    return %arg0, %c0_i32, %c0_i32_0, %c0_i32_1 : i32, i32, i32, i32
  }
}

</mosaic_0001>

<llo_original>
// kernel: tpu_custom_call.1
$region0: #{tpu_custom_call.1}
  #allocation0 [shape = 'u32[]', space=smem, size = 0x4, offset = 0x4, fixed_abs, tag = 'smem constant byte address 0x4 - core index']
  #allocation1 [shape = 'u32[144,128]{1,0:T(1,128)}', space=vmem, size = 0x12000, scoped, tag = 'internal scratch']
  #allocation2 [shape = 'bf16[18,18,64]{2,1,0:T(8,128)(2,1)}', space=vmem, size = 0x1b000, scoped, tag = 'scratch operand']
  #allocation3 [shape = 'bf16[18,18,64]{2,1,0:T(8,128)(2,1)}', space=vmem, size = 0x1b000, scoped, tag = 'scratch operand']
  %s0 = inlined_call_operand.vmem [shape: f32[2,16,16,64], index: 0, kind: input, shape index: {}]
  %s1 = inlined_call_operand.vmem [shape: bf16[3,192,64], index: 1, kind: input, shape index: {}]
  %s2 = inlined_call_operand.vmem [shape: f32[1,64], index: 2, kind: input, shape index: {}]
  %s3 = inlined_call_operand.vmem [shape: bf16[3,192,64], index: 3, kind: input, shape index: {}]
  %s4 = inlined_call_operand.vmem [shape: f32[1,64], index: 4, kind: input, shape index: {}]
  %s5 = inlined_call_operand.vmem [shape: f32[2,1,64], index: 5, kind: input, shape index: {}]
  %s6 = inlined_call_operand.hbm [shape: f32[2,16,16,64], index: 6, kind: output, shape index: {}]
  %s7 = sld [smem:[#allocation0]]
  $region57: #{tpu_custom_call.1} parent=0
    _
  %s9 = ssub.s32 1, %s7
  %s10 = scalar_select 0, %s9, %s7
  $region1: #{tpu_custom_call.1} parent=0
    #allocation4 [shape = 'u8[262144]{0}', space=vmem, size = 0x40000, scoped, tag = 'output window, operand 0']
    #allocation5 [shape = 's32[2]{0}', space=sflag, size = 0x8, scoped, tag = 'scoped memory for tpu_custom_call.1']
    %11 = vsyncpa [#allocation5], 0
    %s12 = scalar_lea.sflag [#allocation5], 1
    %13 = vsyncpa %s12, 0
    loop: start=0, step=1, limit=4
    $region2: #{tpu_custom_call.1} parent=1 // loop_pre_header
      _
    $region3: #{tpu_custom_call.1} parent=1 // loop_header
      %s15 = sphi 0, %s19
      %p16 = scmp.ge.s32.totalorder %s15, 4
      %s25 = sphi 0, %s27
      %s28 = sphi 0, %s25
      %s29 = sphi 0, %s28
      %s45 = sphi 0, %s29
      %s49 = sphi 0, %s49
      %s51 = sphi 0, %s49
      %s52 = sphi 0, %s51
      %s66 = sphi 0, %s52
      %s70 = sphi 0, %s70
      %s72 = sphi 0, %s70
      %s73 = sphi 0, %s72
      %s87 = sphi 0, %s73
      %s91 = sphi 0, %s91
      %s93 = sphi 0, %s91
      %s94 = sphi 0, %s93
      %s108 = sphi 0, %s94
      %s112 = sphi 0, %s112
      %s114 = sphi 0, %s112
      %s115 = sphi 0, %s114
      %s129 = sphi 0, %s115
      %s135 = sphi 0, %s137
      %s138 = sphi 0, %s135
      %s139 = sphi 0, %s138
      %s155 = sphi 0, %s139
      %s161 = sphi 0, %s163
      %s164 = sphi 0, %s161
      %s165 = sphi 0, %s164
      %s181 = sphi 0, %s165
    $region4: #{tpu_custom_call.1} parent=1 // loop_header_branch
      %18 = sbr.rel (%p16) target = $region8
    $region5: #{tpu_custom_call.1} parent=1 // loop_body
      %s20 = ssub.s32 %s15, 1
      %s21 = ssub.s32 %s15, 2
      %s22 = sadd.s32 %s15, 1
      %s23 = ssub.s32 %s15, %s22
      %p24 = scmp.eq.s32.totalorder %s23, 0
      %s26 = sadd.s32 %s25, 1
      %s27 = scalar_select %p24, %s25, %s26
      %p30 = pneg %p24
      %p31 = scmp.eq.s32.totalorder %s15, 1
      %p32 = por %p30, %p31
      %p33 = scmp.ne.s32.totalorder %s25, %s28
      %p34 = scmp.eq.s32.totalorder %s15, 0
      %p35 = por %p33, %p34
      %p36 = scmp.ne.s32.totalorder %s25, %s28
      %p37 = scmp.eq.s32.totalorder %s20, 1
      %p38 = por %p36, %p37
      %p39 = scmp.ne.s32.totalorder %s28, %s29
      %p40 = scmp.eq.s32.totalorder %s20, 0
      %p41 = por %p39, %p40
      %p42 = scmp.ne.s32.totalorder %s28, %s29
      %p43 = scmp.eq.s32.totalorder %s21, 1
      %p44 = por %p42, %p43
      %p46 = scmp.ne.s32.totalorder %s29, %s45
      %p47 = scmp.eq.s32.totalorder %s21, 0
      %p48 = por %p46, %p47
      %s50 = sadd.s32 %s49, 1
      %p53 = scmp.eq.s32.totalorder %s15, 1
      %p54 = scmp.ne.s32.totalorder %s49, %s51
      %p55 = scmp.eq.s32.totalorder %s15, 0
      %p56 = por %p54, %p55
      %p57 = scmp.ne.s32.totalorder %s49, %s51
      %p58 = scmp.eq.s32.totalorder %s20, 1
      %p59 = por %p57, %p58
      %p60 = scmp.ne.s32.totalorder %s51, %s52
      %p61 = scmp.eq.s32.totalorder %s20, 0
      %p62 = por %p60, %p61
      %p63 = scmp.ne.s32.totalorder %s51, %s52
      %p64 = scmp.eq.s32.totalorder %s21, 1
      %p65 = por %p63, %p64
      %p67 = scmp.ne.s32.totalorder %s52, %s66
      %p68 = scmp.eq.s32.totalorder %s21, 0
      %p69 = por %p67, %p68
      %s71 = sadd.s32 %s70, 1
      %p74 = scmp.eq.s32.totalorder %s15, 1
      %p75 = scmp.ne.s32.totalorder %s70, %s72
      %p76 = scmp.eq.s32.totalorder %s15, 0
      %p77 = por %p75, %p76
      %p78 = scmp.ne.s32.totalorder %s70, %s72
      %p79 = scmp.eq.s32.totalorder %s20, 1
      %p80 = por %p78, %p79
      %p81 = scmp.ne.s32.totalorder %s72, %s73
      %p82 = scmp.eq.s32.totalorder %s20, 0
      %p83 = por %p81, %p82
      %p84 = scmp.ne.s32.totalorder %s72, %s73
      %p85 = scmp.eq.s32.totalorder %s21, 1
      %p86 = por %p84, %p85
      %p88 = scmp.ne.s32.totalorder %s73, %s87
      %p89 = scmp.eq.s32.totalorder %s21, 0
      %p90 = por %p88, %p89
      %s92 = sadd.s32 %s91, 1
      %p95 = scmp.eq.s32.totalorder %s15, 1
      %p96 = scmp.ne.s32.totalorder %s91, %s93
      %p97 = scmp.eq.s32.totalorder %s15, 0
      %p98 = por %p96, %p97
      %p99 = scmp.ne.s32.totalorder %s91, %s93
      %p100 = scmp.eq.s32.totalorder %s20, 1
      %p101 = por %p99, %p100
      %p102 = scmp.ne.s32.totalorder %s93, %s94
      %p103 = scmp.eq.s32.totalorder %s20, 0
      %p104 = por %p102, %p103
      %p105 = scmp.ne.s32.totalorder %s93, %s94
      %p106 = scmp.eq.s32.totalorder %s21, 1
      %p107 = por %p105, %p106
      %p109 = scmp.ne.s32.totalorder %s94, %s108
      %p110 = scmp.eq.s32.totalorder %s21, 0
      %p111 = por %p109, %p110
      %s113 = sadd.s32 %s112, 1
      %p116 = scmp.eq.s32.totalorder %s15, 1
      %p117 = scmp.ne.s32.totalorder %s112, %s114
      %p118 = scmp.eq.s32.totalorder %s15, 0
      %p119 = por %p117, %p118
      %p120 = scmp.ne.s32.totalorder %s112, %s114
      %p121 = scmp.eq.s32.totalorder %s20, 1
      %p122 = por %p120, %p121
      %p123 = scmp.ne.s32.totalorder %s114, %s115
      %p124 = scmp.eq.s32.totalorder %s20, 0
      %p125 = por %p123, %p124
      %p126 = scmp.ne.s32.totalorder %s114, %s115
      %p127 = scmp.eq.s32.totalorder %s21, 1
      %p128 = por %p126, %p127
      %p130 = scmp.ne.s32.totalorder %s115, %s129
      %p131 = scmp.eq.s32.totalorder %s21, 0
      %p132 = por %p130, %p131
      %s133 = ssub.s32 %s15, %s22
      %p134 = scmp.eq.s32.totalorder %s133, 0
      %s136 = sadd.s32 %s135, 1
      %s137 = scalar_select %p134, %s135, %s136
      %p140 = pneg %p134
      %p141 = scmp.eq.s32.totalorder %s15, 1
      %p142 = por %p140, %p141
      %p143 = scmp.ne.s32.totalorder %s135, %s138
      %p144 = scmp.eq.s32.totalorder %s15, 0
      %p145 = por %p143, %p144
      %p146 = scmp.ne.s32.totalorder %s135, %s138
      %p147 = scmp.eq.s32.totalorder %s20, 1
      %p148 = por %p146, %p147
      %p149 = scmp.ne.s32.totalorder %s138, %s139
      %p150 = scmp.eq.s32.totalorder %s20, 0
      %p151 = por %p149, %p150
      %p152 = scmp.ne.s32.totalorder %s138, %s139
      %p153 = scmp.eq.s32.totalorder %s21, 1
      %p154 = por %p152, %p153
      %p156 = scmp.ne.s32.totalorder %s139, %s155
      %p157 = scmp.eq.s32.totalorder %s21, 0
      %p158 = por %p156, %p157
      %s159 = ssub.s32 %s15, %s22
      %p160 = scmp.eq.s32.totalorder %s159, 0
      %s162 = sadd.s32 %s161, 1
      %s163 = scalar_select %p160, %s161, %s162
      %p166 = pneg %p160
      %p167 = scmp.eq.s32.totalorder %s15, 1
      %p168 = por %p166, %p167
      %p169 = scmp.ne.s32.totalorder %s161, %s164
      %p170 = scmp.eq.s32.totalorder %s15, 0
      %p171 = por %p169, %p170
      %p172 = scmp.ne.s32.totalorder %s161, %s164
      %p173 = scmp.eq.s32.totalorder %s20, 1
      %p174 = por %p172, %p173
      %p175 = scmp.ne.s32.totalorder %s164, %s165
      %p176 = scmp.eq.s32.totalorder %s20, 0
      %p177 = por %p175, %p176
      %p178 = scmp.ne.s32.totalorder %s164, %s165
      %p179 = scmp.eq.s32.totalorder %s21, 1
      %p180 = por %p178, %p179
      %p182 = scmp.ne.s32.totalorder %s165, %s181
      %p183 = scmp.eq.s32.totalorder %s21, 0
      %p184 = por %p182, %p183
      %p185 = scmp.le.s32.totalorder 1, %s15
      %p186 = scmp.lt.s32.totalorder %s15, 3
      %p187 = pnand %p185, %p186
      %p188 = pneg %p187
      // Predicated region
      $region9: #{tpu_custom_call.1} parent=5 // pred_check
        _
      $region10: #{tpu_custom_call.1} parent=5 // pred_check_branch
        %190 = sbr.rel (%p187) target = $region12
      $region11: #{tpu_custom_call.1} parent=5 // pred_region
        %s191 = ssub.s32 %s15, 1
        // Predicated region
        $region13: #{tpu_custom_call.1} parent=11 // pred_check
          %p192 = pneg %p62
        $region14: #{tpu_custom_call.1} parent=11 // pred_check_branch
          %194 = sbr.rel (%p192) target = $region16
        $region15: #{tpu_custom_call.1} parent=11 // pred_region
          _
        $region16: #{tpu_custom_call.1} parent=11 // pred_fallthru
          _
        // Predicated region
        $region17: #{tpu_custom_call.1} parent=11 // pred_check
          %p195 = pneg %p83
        $region18: #{tpu_custom_call.1} parent=11 // pred_check_branch
          %197 = sbr.rel (%p195) target = $region20
        $region19: #{tpu_custom_call.1} parent=11 // pred_region
          _
        $region20: #{tpu_custom_call.1} parent=11 // pred_fallthru
          _
        // Predicated region
        $region21: #{tpu_custom_call.1} parent=11 // pred_check
          %p198 = pneg %p104
        $region22: #{tpu_custom_call.1} parent=11 // pred_check_branch
          %200 = sbr.rel (%p198) target = $region24
        $region23: #{tpu_custom_call.1} parent=11 // pred_region
          _
        $region24: #{tpu_custom_call.1} parent=11 // pred_fallthru
          _
        // Predicated region
        $region25: #{tpu_custom_call.1} parent=11 // pred_check
          %p201 = pneg %p125
        $region26: #{tpu_custom_call.1} parent=11 // pred_check_branch
          %203 = sbr.rel (%p201) target = $region28
        $region27: #{tpu_custom_call.1} parent=11 // pred_region
          _
        $region28: #{tpu_custom_call.1} parent=11 // pred_fallthru
          _
      $region12: #{tpu_custom_call.1} parent=5 // pred_fallthru
        _
      %p204 = scmp.lt.s32.totalorder %s15, 2
      // Predicated region
      $region29: #{tpu_custom_call.1} parent=5 // pred_check
        %p205 = pneg %p204
      $region30: #{tpu_custom_call.1} parent=5 // pred_check_branch
        %207 = sbr.rel (%p205) target = $region32
      $region31: #{tpu_custom_call.1} parent=5 // pred_region
        // Predicated region
        $region33: #{tpu_custom_call.1} parent=31 // pred_check
          %p208 = pneg %p35
        $region34: #{tpu_custom_call.1} parent=31 // pred_check_branch
          %210 = sbr.rel (%p208) target = $region36
        $region35: #{tpu_custom_call.1} parent=31 // pred_region
          %p211 = scmp.lt.s32.totalorder %s15, 1
          %s212 = scalar_select %p211, %s15, 1
          %s213 = smul.addr %s212, 32
          %s214 = smul.addr %s213, 8
          %s215 = scalar_lea.vmem %s0, %s214
        $region36: #{tpu_custom_call.1} parent=31 // pred_fallthru
          _
        // Predicated region
        $region37: #{tpu_custom_call.1} parent=31 // pred_check
          %p216 = pneg %p145
        $region38: #{tpu_custom_call.1} parent=31 // pred_check_branch
          %218 = sbr.rel (%p216) target = $region40
        $region39: #{tpu_custom_call.1} parent=31 // pred_region
          %p219 = scmp.lt.s32.totalorder %s15, 1
          %s220 = scalar_select %p219, %s15, 1
          %s221 = scalar_lea.vmem %s5, %s220
        $region40: #{tpu_custom_call.1} parent=31 // pred_fallthru
          _
      $region32: #{tpu_custom_call.1} parent=5 // pred_fallthru
        _
      %p222 = scmp.le.s32.totalorder 1, %s15
      %p223 = scmp.lt.s32.totalorder %s15, 3
      %p224 = pnand %p222, %p223
      %p225 = pneg %p224
      // Predicated region
      $region41: #{tpu_custom_call.1} parent=5 // pred_check
        _
      $region42: #{tpu_custom_call.1} parent=5 // pred_check_branch
        %227 = sbr.rel (%p224) target = $region44
      $region43: #{tpu_custom_call.1} parent=5 // pred_region
        %s228 = ssub.s32 %s15, 1
        %p229 = scmp.lt.s32.totalorder %s20, 1
        %s230 = scalar_select %p229, %s20, 1
        %s231 = smul.addr %s230, 32
        %s232 = smul.addr %s231, 8
        %s233 = scalar_lea.vmem %s0, %s232
        %p234 = pneg %p41
        %p235 = pneg %p38
        %p236 = pneg %p62
        %p237 = pneg %p59
        %p238 = pneg %p83
        %p239 = pneg %p80
        %p240 = pneg %p104
        %p241 = pneg %p101
        %p242 = pneg %p125
        %p243 = pneg %p122
        %p244 = scmp.lt.s32.totalorder %s20, 1
        %s245 = scalar_select %p244, %s20, 1
        %s246 = scalar_lea.vmem %s5, %s245
        %p247 = pneg %p151
        %p248 = pneg %p148
        %p249 = pneg %p177
        %p250 = pneg %p174
        %s251 = sand.u32 %s164, 1
        %s252 = scalar_lea.sflag [#allocation5], %s251
        %s253 = sand.u32 %s164, 1
        %s254 = smul.addr %s253, 256
        %s255 = scalar_lea.vmem [#allocation4], %s254
        %p256 = scmp.lt.s32.totalorder %s20, 1
        %s257 = scalar_select %p256, %s20, 1
        %s258 = smul.addr %s257, 32
        %s259 = smul.addr %s258, 8
        %s260 = scalar_lea.vmem %s0, %s259
        %p261 = scmp.lt.s32.totalorder %s20, 1
        %s262 = scalar_select %p261, %s20, 1
        %s263 = scalar_lea.vmem %s5, %s262
        %vm265 = vcmask 519168
        %266 = vst.msk [vmem:[#allocation2] sm:$0xf] %vm265, 0
        %267 = vst.msk [vmem:[#allocation2 + $0x4] sm:$0xf] %vm265, 0
        %vm268 = vcmask 516096
        %269 = vst.msk [vmem:[#allocation2 + $0x8] sm:$0x1] %vm268, 0
        %270 = vst.msk [vmem:[#allocation2 + $0xc] sm:$0xf] %vm265, 0
        %271 = vst.msk [vmem:[#allocation2 + $0x10] sm:$0xf] %vm265, 0
        %272 = vst.msk [vmem:[#allocation2 + $0x14] sm:$0x1] %vm268, 0
        %273 = vst.msk [vmem:[#allocation2 + $0x18] sm:$0xf] %vm265, 0
        %274 = vst.msk [vmem:[#allocation2 + $0x1c] sm:$0xf] %vm265, 0
        %275 = vst.msk [vmem:[#allocation2 + $0x20] sm:$0x1] %vm268, 0
        %276 = vst.msk [vmem:[#allocation2 + $0x24] sm:$0xf] %vm265, 0
        %277 = vst.msk [vmem:[#allocation2 + $0x28] sm:$0xf] %vm265, 0
        %278 = vst.msk [vmem:[#allocation2 + $0x2c] sm:$0x1] %vm268, 0
        %279 = vst.msk [vmem:[#allocation2 + $0x30] sm:$0xf] %vm265, 0
        %280 = vst.msk [vmem:[#allocation2 + $0x34] sm:$0xf] %vm265, 0
        %281 = vst.msk [vmem:[#allocation2 + $0x38] sm:$0x1] %vm268, 0
        %282 = vst.msk [vmem:[#allocation2 + $0x3c] sm:$0xf] %vm265, 0
        %283 = vst.msk [vmem:[#allocation2 + $0x40] sm:$0xf] %vm265, 0
        %284 = vst.msk [vmem:[#allocation2 + $0x44] sm:$0x1] %vm268, 0
        %285 = vst.msk [vmem:[#allocation2 + $0x48] sm:$0xf] %vm265, 0
        %286 = vst.msk [vmem:[#allocation2 + $0x4c] sm:$0xf] %vm265, 0
        %287 = vst.msk [vmem:[#allocation2 + $0x50] sm:$0x1] %vm268, 0
        %288 = vst.msk [vmem:[#allocation2 + $0x54] sm:$0xf] %vm265, 0
        %289 = vst.msk [vmem:[#allocation2 + $0x58] sm:$0xf] %vm265, 0
        %290 = vst.msk [vmem:[#allocation2 + $0x5c] sm:$0x1] %vm268, 0
        %291 = vst.msk [vmem:[#allocation2 + $0x60] sm:$0xf] %vm265, 0
        %292 = vst.msk [vmem:[#allocation2 + $0x64] sm:$0xf] %vm265, 0
        %293 = vst.msk [vmem:[#allocation2 + $0x68] sm:$0x1] %vm268, 0
        %294 = vst.msk [vmem:[#allocation2 + $0x6c] sm:$0xf] %vm265, 0
        %295 = vst.msk [vmem:[#allocation2 + $0x70] sm:$0xf] %vm265, 0
        %296 = vst.msk [vmem:[#allocation2 + $0x74] sm:$0x1] %vm268, 0
        %297 = vst.msk [vmem:[#allocation2 + $0x78] sm:$0xf] %vm265, 0
        %298 = vst.msk [vmem:[#allocation2 + $0x7c] sm:$0xf] %vm265, 0
        %299 = vst.msk [vmem:[#allocation2 + $0x80] sm:$0x1] %vm268, 0
        %300 = vst.msk [vmem:[#allocation2 + $0x84] sm:$0xf] %vm265, 0
        %301 = vst.msk [vmem:[#allocation2 + $0x88] sm:$0xf] %vm265, 0
        %302 = vst.msk [vmem:[#allocation2 + $0x8c] sm:$0x1] %vm268, 0
        %303 = vst.msk [vmem:[#allocation2 + $0x90] sm:$0xf] %vm265, 0
        %304 = vst.msk [vmem:[#allocation2 + $0x94] sm:$0xf] %vm265, 0
        %305 = vst.msk [vmem:[#allocation2 + $0x98] sm:$0x1] %vm268, 0
        %306 = vst.msk [vmem:[#allocation2 + $0x9c] sm:$0xf] %vm265, 0
        %307 = vst.msk [vmem:[#allocation2 + $0xa0] sm:$0xf] %vm265, 0
        %308 = vst.msk [vmem:[#allocation2 + $0xa4] sm:$0x1] %vm268, 0
        %309 = vst.msk [vmem:[#allocation2 + $0xa8] sm:$0xf] %vm265, 0
        %310 = vst.msk [vmem:[#allocation2 + $0xac] sm:$0xf] %vm265, 0
        %311 = vst.msk [vmem:[#allocation2 + $0xb0] sm:$0x1] %vm268, 0
        %312 = vst.msk [vmem:[#allocation2 + $0xb4] sm:$0xf] %vm265, 0
        %313 = vst.msk [vmem:[#allocation2 + $0xb8] sm:$0xf] %vm265, 0
        %314 = vst.msk [vmem:[#allocation2 + $0xbc] sm:$0x1] %vm268, 0
        %315 = vst.msk [vmem:[#allocation2 + $0xc0] sm:$0xf] %vm265, 0
        %316 = vst.msk [vmem:[#allocation2 + $0xc4] sm:$0xf] %vm265, 0
        %317 = vst.msk [vmem:[#allocation2 + $0xc8] sm:$0x1] %vm268, 0
        %318 = vst.msk [vmem:[#allocation2 + $0xcc] sm:$0xf] %vm265, 0
        %319 = vst.msk [vmem:[#allocation2 + $0xd0] sm:$0xf] %vm265, 0
        %320 = vst.msk [vmem:[#allocation2 + $0xd4] sm:$0x1] %vm268, 0
        %v321 = vld [vmem:[%s260] sm:$0xff]
        %v322 = vld [vmem:[%s260 + $0x8] sm:$0xff]
        %v323 = vld [vmem:[%s260 + $0x10] sm:$0xff]
        %v324 = vld [vmem:[%s260 + $0x18] sm:$0xff]
        %v325 = vld [vmem:[%s260 + $0x20] sm:$0xff]
        %v326 = vld [vmem:[%s260 + $0x28] sm:$0xff]
        %v327 = vld [vmem:[%s260 + $0x30] sm:$0xff]
        %v328 = vld [vmem:[%s260 + $0x38] sm:$0xff]
        %v329 = vld [vmem:[%s260 + $0x40] sm:$0xff]
        %v330 = vld [vmem:[%s260 + $0x48] sm:$0xff]
        %v331 = vld [vmem:[%s260 + $0x50] sm:$0xff]
        %v332 = vld [vmem:[%s260 + $0x58] sm:$0xff]
        %v333 = vld [vmem:[%s260 + $0x60] sm:$0xff]
        %v334 = vld [vmem:[%s260 + $0x68] sm:$0xff]
        %v335 = vld [vmem:[%s260 + $0x70] sm:$0xff]
        %v336 = vld [vmem:[%s260 + $0x78] sm:$0xff]
        %v337 = vld [vmem:[%s260 + $0x80] sm:$0xff]
        %v338 = vld [vmem:[%s260 + $0x88] sm:$0xff]
        %v339 = vld [vmem:[%s260 + $0x90] sm:$0xff]
        %v340 = vld [vmem:[%s260 + $0x98] sm:$0xff]
        %v341 = vld [vmem:[%s260 + $0xa0] sm:$0xff]
        %v342 = vld [vmem:[%s260 + $0xa8] sm:$0xff]
        %v343 = vld [vmem:[%s260 + $0xb0] sm:$0xff]
        %v344 = vld [vmem:[%s260 + $0xb8] sm:$0xff]
        %v345 = vld [vmem:[%s260 + $0xc0] sm:$0xff]
        %v346 = vld [vmem:[%s260 + $0xc8] sm:$0xff]
        %v347 = vld [vmem:[%s260 + $0xd0] sm:$0xff]
        %v348 = vld [vmem:[%s260 + $0xd8] sm:$0xff]
        %v349 = vld [vmem:[%s260 + $0xe0] sm:$0xff]
        %v350 = vld [vmem:[%s260 + $0xe8] sm:$0xff]
        %v351 = vld [vmem:[%s260 + $0xf0] sm:$0xff]
        %v352 = vld [vmem:[%s260 + $0xf8] sm:$0xff]
        %v353 = vpack.c.bf16 %v322, %v321
        %v354 = vpack.c.bf16 %v324, %v323
        %v355 = vpack.c.bf16 %v326, %v325
        %v356 = vpack.c.bf16 %v328, %v327
        %v357 = vpack.c.bf16 %v330, %v329
        %v358 = vpack.c.bf16 %v332, %v331
        %v359 = vpack.c.bf16 %v334, %v333
        %v360 = vpack.c.bf16 %v336, %v335
        %v361 = vpack.c.bf16 %v338, %v337
        %v362 = vpack.c.bf16 %v340, %v339
        %v363 = vpack.c.bf16 %v342, %v341
        %v364 = vpack.c.bf16 %v344, %v343
        %v365 = vpack.c.bf16 %v346, %v345
        %v366 = vpack.c.bf16 %v348, %v347
        %v367 = vpack.c.bf16 %v350, %v349
        %v368 = vpack.c.bf16 %v352, %v351
        %v385 = vunpack.c.l.b16 %v353
        %v386 = vunpack.c.h.b16 %v353
        %v387 = vunpack.c.l.b16 %v354
        %v388 = vunpack.c.h.b16 %v354
        %v389 = vunpack.c.l.b16 %v355
        %v390 = vunpack.c.h.b16 %v355
        %v391 = vunpack.c.l.b16 %v356
        %v392 = vunpack.c.h.b16 %v356
        %v393 = vunpack.c.l.b16 %v357
        %v394 = vunpack.c.h.b16 %v357
        %v395 = vunpack.c.l.b16 %v358
        %v396 = vunpack.c.h.b16 %v358
        %v397 = vunpack.c.l.b16 %v359
        %v398 = vunpack.c.h.b16 %v359
        %v399 = vunpack.c.l.b16 %v360
        %v400 = vunpack.c.h.b16 %v360
        %v401 = vunpack.c.l.b16 %v361
        %v402 = vunpack.c.h.b16 %v361
        %v403 = vunpack.c.l.b16 %v362
        %v404 = vunpack.c.h.b16 %v362
        %v405 = vunpack.c.l.b16 %v363
        %v406 = vunpack.c.h.b16 %v363
        %v407 = vunpack.c.l.b16 %v364
        %v408 = vunpack.c.h.b16 %v364
        %v409 = vunpack.c.l.b16 %v365
        %v410 = vunpack.c.h.b16 %v365
        %v411 = vunpack.c.l.b16 %v366
        %v412 = vunpack.c.h.b16 %v366
        %v413 = vunpack.c.l.b16 %v367
        %v414 = vunpack.c.h.b16 %v367
        %v415 = vunpack.c.l.b16 %v368
        %v416 = vunpack.c.h.b16 %v368
        %v417 = vpack.c.b16 %v385, %v385
        %v418 = vpack.c.b16 %v386, %v386
        %v419 = vpack.c.b16 %v387, %v387
        %v420 = vpack.c.b16 %v388, %v388
        %v421 = vpack.c.b16 %v389, %v389
        %v422 = vpack.c.b16 %v390, %v390
        %v423 = vpack.c.b16 %v391, %v391
        %v424 = vpack.c.b16 %v392, %v392
        %v425 = vpack.c.b16 %v393, %v393
        %v426 = vpack.c.b16 %v394, %v394
        %v427 = vpack.c.b16 %v395, %v395
        %v428 = vpack.c.b16 %v396, %v396
        %v429 = vpack.c.b16 %v397, %v397
        %v430 = vpack.c.b16 %v398, %v398
        %v431 = vpack.c.b16 %v399, %v399
        %v432 = vpack.c.b16 %v400, %v400
        %v433 = vpack.c.b16 %v401, %v401
        %v434 = vpack.c.b16 %v402, %v402
        %v435 = vpack.c.b16 %v403, %v403
        %v436 = vpack.c.b16 %v404, %v404
        %v437 = vpack.c.b16 %v405, %v405
        %v438 = vpack.c.b16 %v406, %v406
        %v439 = vpack.c.b16 %v407, %v407
        %v440 = vpack.c.b16 %v408, %v408
        %v441 = vpack.c.b16 %v409, %v409
        %v442 = vpack.c.b16 %v410, %v410
        %v443 = vpack.c.b16 %v411, %v411
        %v444 = vpack.c.b16 %v412, %v412
        %v445 = vpack.c.b16 %v413, %v413
        %v446 = vpack.c.b16 %v414, %v414
        %v447 = vpack.c.b16 %v415, %v415
        %v448 = vpack.c.b16 %v416, %v416
        %vm449 = vsmask.f32 256
        %vm450 = vsmask.f32 4368
        %vm451 = vmor %vm449, %vm450
        %v453 = vshrl.u32 %v417, 16
        %v455 = vrot.slane %v453, 7
        %v456 = vshll.u32 %v417, 16
        %v458 = vor.u32 %v455, %v456
        %v459 = vrot.slane %v455, 4
        %v461 = vshrl.u32 %v418, 16
        %v463 = vrot.slane %v461, 7
        %v464 = vshll.u32 %v418, 16
        %v466 = vor.u32 %v463, %v464
        %v467 = vsel %vm451, %v459, %v466
        %v468 = vrot.slane %v463, 4
        %v470 = vshrl.u32 %v419, 16
        %v472 = vrot.slane %v470, 7
        %v473 = vshll.u32 %v419, 16
        %v475 = vor.u32 %v472, %v473
        %v476 = vrot.slane %v472, 4
        %v478 = vshrl.u32 %v420, 16
        %v480 = vrot.slane %v478, 7
        %v481 = vshll.u32 %v420, 16
        %v483 = vor.u32 %v480, %v481
        %v484 = vsel %vm451, %v476, %v483
        %v485 = vrot.slane %v480, 4
        %v487 = vshrl.u32 %v421, 16
        %v489 = vrot.slane %v487, 7
        %v490 = vshll.u32 %v421, 16
        %v492 = vor.u32 %v489, %v490
        %v493 = vrot.slane %v489, 4
        %v495 = vshrl.u32 %v422, 16
        %v497 = vrot.slane %v495, 7
        %v498 = vshll.u32 %v422, 16
        %v500 = vor.u32 %v497, %v498
        %v501 = vsel %vm451, %v493, %v500
        %v502 = vrot.slane %v497, 4
        %v504 = vshrl.u32 %v423, 16
        %v506 = vrot.slane %v504, 7
        %v507 = vshll.u32 %v423, 16
        %v509 = vor.u32 %v506, %v507
        %v510 = vrot.slane %v506, 4
        %v512 = vshrl.u32 %v424, 16
        %v514 = vrot.slane %v512, 7
        %v515 = vshll.u32 %v424, 16
        %v517 = vor.u32 %v514, %v515
        %v518 = vsel %vm451, %v510, %v517
        %v519 = vrot.slane %v514, 4
        %v521 = vshrl.u32 %v425, 16
        %v523 = vrot.slane %v521, 7
        %v524 = vshll.u32 %v425, 16
        %v526 = vor.u32 %v523, %v524
        %v527 = vrot.slane %v523, 4
        %v529 = vshrl.u32 %v426, 16
        %v531 = vrot.slane %v529, 7
        %v532 = vshll.u32 %v426, 16
        %v534 = vor.u32 %v531, %v532
        %v535 = vsel %vm451, %v527, %v534
        %v536 = vrot.slane %v531, 4
        %v538 = vshrl.u32 %v427, 16
        %v540 = vrot.slane %v538, 7
        %v541 = vshll.u32 %v427, 16
        %v543 = vor.u32 %v540, %v541
        %v544 = vrot.slane %v540, 4
        %v546 = vshrl.u32 %v428, 16
        %v548 = vrot.slane %v546, 7
        %v549 = vshll.u32 %v428, 16
        %v551 = vor.u32 %v548, %v549
        %v552 = vsel %vm451, %v544, %v551
        %v553 = vrot.slane %v548, 4
        %v555 = vshrl.u32 %v429, 16
        %v557 = vrot.slane %v555, 7
        %v558 = vshll.u32 %v429, 16
        %v560 = vor.u32 %v557, %v558
        %v561 = vrot.slane %v557, 4
        %v563 = vshrl.u32 %v430, 16
        %v565 = vrot.slane %v563, 7
        %v566 = vshll.u32 %v430, 16
        %v568 = vor.u32 %v565, %v566
        %v569 = vsel %vm451, %v561, %v568
        %v570 = vrot.slane %v565, 4
        %v572 = vshrl.u32 %v431, 16
        %v574 = vrot.slane %v572, 7
        %v575 = vshll.u32 %v431, 16
        %v577 = vor.u32 %v574, %v575
        %v578 = vrot.slane %v574, 4
        %v580 = vshrl.u32 %v432, 16
        %v582 = vrot.slane %v580, 7
        %v583 = vshll.u32 %v432, 16
        %v585 = vor.u32 %v582, %v583
        %v586 = vsel %vm451, %v578, %v585
        %v587 = vrot.slane %v582, 4
        %v589 = vshrl.u32 %v433, 16
        %v591 = vrot.slane %v589, 7
        %v592 = vshll.u32 %v433, 16
        %v594 = vor.u32 %v591, %v592
        %v595 = vrot.slane %v591, 4
        %v597 = vshrl.u32 %v434, 16
        %v599 = vrot.slane %v597, 7
        %v600 = vshll.u32 %v434, 16
        %v602 = vor.u32 %v599, %v600
        %v603 = vsel %vm451, %v595, %v602
        %v604 = vrot.slane %v599, 4
        %v606 = vshrl.u32 %v435, 16
        %v608 = vrot.slane %v606, 7
        %v609 = vshll.u32 %v435, 16
        %v611 = vor.u32 %v608, %v609
        %v612 = vrot.slane %v608, 4
        %v614 = vshrl.u32 %v436, 16
        %v616 = vrot.slane %v614, 7
        %v617 = vshll.u32 %v436, 16
        %v619 = vor.u32 %v616, %v617
        %v620 = vsel %vm451, %v612, %v619
        %v621 = vrot.slane %v616, 4
        %v623 = vshrl.u32 %v437, 16
        %v625 = vrot.slane %v623, 7
        %v626 = vshll.u32 %v437, 16
        %v628 = vor.u32 %v625, %v626
        %v629 = vrot.slane %v625, 4
        %v631 = vshrl.u32 %v438, 16
        %v633 = vrot.slane %v631, 7
        %v634 = vshll.u32 %v438, 16
        %v636 = vor.u32 %v633, %v634
        %v637 = vsel %vm451, %v629, %v636
        %v638 = vrot.slane %v633, 4
        %v640 = vshrl.u32 %v439, 16
        %v642 = vrot.slane %v640, 7
        %v643 = vshll.u32 %v439, 16
        %v645 = vor.u32 %v642, %v643
        %v646 = vrot.slane %v642, 4
        %v648 = vshrl.u32 %v440, 16
        %v650 = vrot.slane %v648, 7
        %v651 = vshll.u32 %v440, 16
        %v653 = vor.u32 %v650, %v651
        %v654 = vsel %vm451, %v646, %v653
        %v655 = vrot.slane %v650, 4
        %v657 = vshrl.u32 %v441, 16
        %v659 = vrot.slane %v657, 7
        %v660 = vshll.u32 %v441, 16
        %v662 = vor.u32 %v659, %v660
        %v663 = vrot.slane %v659, 4
        %v665 = vshrl.u32 %v442, 16
        %v667 = vrot.slane %v665, 7
        %v668 = vshll.u32 %v442, 16
        %v670 = vor.u32 %v667, %v668
        %v671 = vsel %vm451, %v663, %v670
        %v672 = vrot.slane %v667, 4
        %v674 = vshrl.u32 %v443, 16
        %v676 = vrot.slane %v674, 7
        %v677 = vshll.u32 %v443, 16
        %v679 = vor.u32 %v676, %v677
        %v680 = vrot.slane %v676, 4
        %v682 = vshrl.u32 %v444, 16
        %v684 = vrot.slane %v682, 7
        %v685 = vshll.u32 %v444, 16
        %v687 = vor.u32 %v684, %v685
        %v688 = vsel %vm451, %v680, %v687
        %v689 = vrot.slane %v684, 4
        %v691 = vshrl.u32 %v445, 16
        %v693 = vrot.slane %v691, 7
        %v694 = vshll.u32 %v445, 16
        %v696 = vor.u32 %v693, %v694
        %v697 = vrot.slane %v693, 4
        %v699 = vshrl.u32 %v446, 16
        %v701 = vrot.slane %v699, 7
        %v702 = vshll.u32 %v446, 16
        %v704 = vor.u32 %v701, %v702
        %v705 = vsel %vm451, %v697, %v704
        %v706 = vrot.slane %v701, 4
        %v708 = vshrl.u32 %v447, 16
        %v710 = vrot.slane %v708, 7
        %v711 = vshll.u32 %v447, 16
        %v713 = vor.u32 %v710, %v711
        %v714 = vrot.slane %v710, 4
        %v716 = vshrl.u32 %v448, 16
        %v718 = vrot.slane %v716, 7
        %v719 = vshll.u32 %v448, 16
        %v721 = vor.u32 %v718, %v719
        %v722 = vsel %vm451, %v714, %v721
        %v723 = vrot.slane %v718, 4
        %s772 = scalar_lea.vmem [#allocation2], 12
        %vm773 = vcmask 519168
        %vm774 = vsmask.f32 7938
        %vm775 = vmand %vm773, %vm774
        %v776 = vld [vmem:[%s772] sm:$0xf]
        %v777 = vsel %vm775, %v458, %v776
        %778 = vst [vmem:[%s772] sm:$0xf] %v777
        %779 = vst.msk [vmem:[%s772 + $0x4] sm:$0xf] %vm265, %v467
        %vm780 = vcmask 516096
        %vm781 = vmand %vm780, %vm449
        %v782 = vld [vmem:[%s772 + $0x8] sm:$0x1]
        %v783 = vsel %vm781, %v468, %v782
        %784 = vst [vmem:[%s772 + $0x8] sm:$0x1] %v783
        %v785 = vld [vmem:[%s772 + $0xc] sm:$0xf]
        %v786 = vsel %vm775, %v475, %v785
        %787 = vst [vmem:[%s772 + $0xc] sm:$0xf] %v786
        %788 = vst.msk [vmem:[%s772 + $0x10] sm:$0xf] %vm265, %v484
        %v789 = vld [vmem:[%s772 + $0x14] sm:$0x1]
        %v790 = vsel %vm781, %v485, %v789
        %791 = vst [vmem:[%s772 + $0x14] sm:$0x1] %v790
        %v792 = vld [vmem:[%s772 + $0x18] sm:$0xf]
        %v793 = vsel %vm775, %v492, %v792
        %794 = vst [vmem:[%s772 + $0x18] sm:$0xf] %v793
        %795 = vst.msk [vmem:[%s772 + $0x1c] sm:$0xf] %vm265, %v501
        %v796 = vld [vmem:[%s772 + $0x20] sm:$0x1]
        %v797 = vsel %vm781, %v502, %v796
        %798 = vst [vmem:[%s772 + $0x20] sm:$0x1] %v797
        %v799 = vld [vmem:[%s772 + $0x24] sm:$0xf]
        %v800 = vsel %vm775, %v509, %v799
        %801 = vst [vmem:[%s772 + $0x24] sm:$0xf] %v800
        %802 = vst.msk [vmem:[%s772 + $0x28] sm:$0xf] %vm265, %v518
        %v803 = vld [vmem:[%s772 + $0x2c] sm:$0x1]
        %v804 = vsel %vm781, %v519, %v803
        %805 = vst [vmem:[%s772 + $0x2c] sm:$0x1] %v804
        %v806 = vld [vmem:[%s772 + $0x30] sm:$0xf]
        %v807 = vsel %vm775, %v526, %v806
        %808 = vst [vmem:[%s772 + $0x30] sm:$0xf] %v807
        %809 = vst.msk [vmem:[%s772 + $0x34] sm:$0xf] %vm265, %v535
        %v810 = vld [vmem:[%s772 + $0x38] sm:$0x1]
        %v811 = vsel %vm781, %v536, %v810
        %812 = vst [vmem:[%s772 + $0x38] sm:$0x1] %v811
        %v813 = vld [vmem:[%s772 + $0x3c] sm:$0xf]
        %v814 = vsel %vm775, %v543, %v813
        %815 = vst [vmem:[%s772 + $0x3c] sm:$0xf] %v814
        %816 = vst.msk [vmem:[%s772 + $0x40] sm:$0xf] %vm265, %v552
        %v817 = vld [vmem:[%s772 + $0x44] sm:$0x1]
        %v818 = vsel %vm781, %v553, %v817
        %819 = vst [vmem:[%s772 + $0x44] sm:$0x1] %v818
        %v820 = vld [vmem:[%s772 + $0x48] sm:$0xf]
        %v821 = vsel %vm775, %v560, %v820
        %822 = vst [vmem:[%s772 + $0x48] sm:$0xf] %v821
        %823 = vst.msk [vmem:[%s772 + $0x4c] sm:$0xf] %vm265, %v569
        %v824 = vld [vmem:[%s772 + $0x50] sm:$0x1]
        %v825 = vsel %vm781, %v570, %v824
        %826 = vst [vmem:[%s772 + $0x50] sm:$0x1] %v825
        %v827 = vld [vmem:[%s772 + $0x54] sm:$0xf]
        %v828 = vsel %vm775, %v577, %v827
        %829 = vst [vmem:[%s772 + $0x54] sm:$0xf] %v828
        %830 = vst.msk [vmem:[%s772 + $0x58] sm:$0xf] %vm265, %v586
        %v831 = vld [vmem:[%s772 + $0x5c] sm:$0x1]
        %v832 = vsel %vm781, %v587, %v831
        %833 = vst [vmem:[%s772 + $0x5c] sm:$0x1] %v832
        %v834 = vld [vmem:[%s772 + $0x60] sm:$0xf]
        %v835 = vsel %vm775, %v594, %v834
        %836 = vst [vmem:[%s772 + $0x60] sm:$0xf] %v835
        %837 = vst.msk [vmem:[%s772 + $0x64] sm:$0xf] %vm265, %v603
        %v838 = vld [vmem:[%s772 + $0x68] sm:$0x1]
        %v839 = vsel %vm781, %v604, %v838
        %840 = vst [vmem:[%s772 + $0x68] sm:$0x1] %v839
        %v841 = vld [vmem:[%s772 + $0x6c] sm:$0xf]
        %v842 = vsel %vm775, %v611, %v841
        %843 = vst [vmem:[%s772 + $0x6c] sm:$0xf] %v842
        %844 = vst.msk [vmem:[%s772 + $0x70] sm:$0xf] %vm265, %v620
        %v845 = vld [vmem:[%s772 + $0x74] sm:$0x1]
        %v846 = vsel %vm781, %v621, %v845
        %847 = vst [vmem:[%s772 + $0x74] sm:$0x1] %v846
        %v848 = vld [vmem:[%s772 + $0x78] sm:$0xf]
        %v849 = vsel %vm775, %v628, %v848
        %850 = vst [vmem:[%s772 + $0x78] sm:$0xf] %v849
        %851 = vst.msk [vmem:[%s772 + $0x7c] sm:$0xf] %vm265, %v637
        %v852 = vld [vmem:[%s772 + $0x80] sm:$0x1]
        %v853 = vsel %vm781, %v638, %v852
        %854 = vst [vmem:[%s772 + $0x80] sm:$0x1] %v853
        %v855 = vld [vmem:[%s772 + $0x84] sm:$0xf]
        %v856 = vsel %vm775, %v645, %v855
        %857 = vst [vmem:[%s772 + $0x84] sm:$0xf] %v856
        %858 = vst.msk [vmem:[%s772 + $0x88] sm:$0xf] %vm265, %v654
        %v859 = vld [vmem:[%s772 + $0x8c] sm:$0x1]
        %v860 = vsel %vm781, %v655, %v859
        %861 = vst [vmem:[%s772 + $0x8c] sm:$0x1] %v860
        %v862 = vld [vmem:[%s772 + $0x90] sm:$0xf]
        %v863 = vsel %vm775, %v662, %v862
        %864 = vst [vmem:[%s772 + $0x90] sm:$0xf] %v863
        %865 = vst.msk [vmem:[%s772 + $0x94] sm:$0xf] %vm265, %v671
        %v866 = vld [vmem:[%s772 + $0x98] sm:$0x1]
        %v867 = vsel %vm781, %v672, %v866
        %868 = vst [vmem:[%s772 + $0x98] sm:$0x1] %v867
        %v869 = vld [vmem:[%s772 + $0x9c] sm:$0xf]
        %v870 = vsel %vm775, %v679, %v869
        %871 = vst [vmem:[%s772 + $0x9c] sm:$0xf] %v870
        %872 = vst.msk [vmem:[%s772 + $0xa0] sm:$0xf] %vm265, %v688
        %v873 = vld [vmem:[%s772 + $0xa4] sm:$0x1]
        %v874 = vsel %vm781, %v689, %v873
        %875 = vst [vmem:[%s772 + $0xa4] sm:$0x1] %v874
        %v876 = vld [vmem:[%s772 + $0xa8] sm:$0xf]
        %v877 = vsel %vm775, %v696, %v876
        %878 = vst [vmem:[%s772 + $0xa8] sm:$0xf] %v877
        %879 = vst.msk [vmem:[%s772 + $0xac] sm:$0xf] %vm265, %v705
        %v880 = vld [vmem:[%s772 + $0xb0] sm:$0x1]
        %v881 = vsel %vm781, %v706, %v880
        %882 = vst [vmem:[%s772 + $0xb0] sm:$0x1] %v881
        %v883 = vld [vmem:[%s772 + $0xb4] sm:$0xf]
        %v884 = vsel %vm775, %v713, %v883
        %885 = vst [vmem:[%s772 + $0xb4] sm:$0xf] %v884
        %886 = vst.msk [vmem:[%s772 + $0xb8] sm:$0xf] %vm265, %v722
        %v887 = vld [vmem:[%s772 + $0xbc] sm:$0x1]
        %v888 = vsel %vm781, %v723, %v887
        %889 = vst [vmem:[%s772 + $0xbc] sm:$0x1] %v888
        %v890 = vld [vmem:[#allocation2] sm:$0xf]
        %v891 = vld [vmem:[#allocation2 + $0x4] sm:$0xf]
        %v892 = vld [vmem:[#allocation2 + $0x8] sm:$0x1]
        %v893 = vld [vmem:[#allocation2 + $0xc] sm:$0xf]
        %v894 = vld [vmem:[#allocation2 + $0x10] sm:$0xf]
        %v895 = vld [vmem:[#allocation2 + $0x14] sm:$0x1]
        %v896 = vld [vmem:[#allocation2 + $0x18] sm:$0xf]
        %v897 = vld [vmem:[#allocation2 + $0x1c] sm:$0xf]
        %v898 = vld [vmem:[#allocation2 + $0x20] sm:$0x1]
        %v899 = vld [vmem:[#allocation2 + $0x24] sm:$0xf]
        %v900 = vld [vmem:[#allocation2 + $0x28] sm:$0xf]
        %v901 = vld [vmem:[#allocation2 + $0x2c] sm:$0x1]
        %v902 = vld [vmem:[#allocation2 + $0x30] sm:$0xf]
        %v903 = vld [vmem:[#allocation2 + $0x34] sm:$0xf]
        %v904 = vld [vmem:[#allocation2 + $0x38] sm:$0x1]
        %v905 = vld [vmem:[#allocation2 + $0x3c] sm:$0xf]
        %v906 = vld [vmem:[#allocation2 + $0x40] sm:$0xf]
        %v907 = vld [vmem:[#allocation2 + $0x44] sm:$0x1]
        %v908 = vld [vmem:[#allocation2 + $0x48] sm:$0xf]
        %v909 = vld [vmem:[#allocation2 + $0x4c] sm:$0xf]
        %v910 = vld [vmem:[#allocation2 + $0x50] sm:$0x1]
        %v911 = vld [vmem:[#allocation2 + $0x54] sm:$0xf]
        %v912 = vld [vmem:[#allocation2 + $0x58] sm:$0xf]
        %v913 = vld [vmem:[#allocation2 + $0x5c] sm:$0x1]
        %v914 = vld [vmem:[#allocation2 + $0x60] sm:$0xf]
        %v915 = vld [vmem:[#allocation2 + $0x64] sm:$0xf]
        %v916 = vld [vmem:[#allocation2 + $0x68] sm:$0x1]
        %v917 = vld [vmem:[#allocation2 + $0x6c] sm:$0xf]
        %v918 = vld [vmem:[#allocation2 + $0x70] sm:$0xf]
        %v919 = vld [vmem:[#allocation2 + $0x74] sm:$0x1]
        %v920 = vld [vmem:[#allocation2 + $0x78] sm:$0xf]
        %v921 = vld [vmem:[#allocation2 + $0x7c] sm:$0xf]
        %v922 = vld [vmem:[#allocation2 + $0x80] sm:$0x1]
        %v923 = vld [vmem:[#allocation2 + $0x84] sm:$0xf]
        %v924 = vld [vmem:[#allocation2 + $0x88] sm:$0xf]
        %v925 = vld [vmem:[#allocation2 + $0x8c] sm:$0x1]
        %v926 = vld [vmem:[#allocation2 + $0x90] sm:$0xf]
        %v927 = vld [vmem:[#allocation2 + $0x94] sm:$0xf]
        %v928 = vld [vmem:[#allocation2 + $0x98] sm:$0x1]
        %v929 = vld [vmem:[#allocation2 + $0x9c] sm:$0xf]
        %v930 = vld [vmem:[#allocation2 + $0xa0] sm:$0xf]
        %v931 = vld [vmem:[#allocation2 + $0xa4] sm:$0x1]
        %v932 = vld [vmem:[#allocation2 + $0xa8] sm:$0xf]
        %v933 = vld [vmem:[#allocation2 + $0xac] sm:$0xf]
        %v934 = vld [vmem:[#allocation2 + $0xb0] sm:$0x1]
        %v935 = vld [vmem:[#allocation2 + $0xb4] sm:$0xf]
        %v936 = vld [vmem:[#allocation2 + $0xb8] sm:$0xf]
        %v937 = vld [vmem:[#allocation2 + $0xbc] sm:$0x1]
        %v970 = vunpack.c.l.b16 %v890
        %v971 = vunpack.c.l.b16 %v891
        %v972 = vunpack.c.l.b16 %v893
        %v973 = vunpack.c.l.b16 %v894
        %v974 = vunpack.c.l.b16 %v896
        %v975 = vunpack.c.l.b16 %v897
        %v976 = vunpack.c.l.b16 %v899
        %v977 = vunpack.c.l.b16 %v900
        %v978 = vunpack.c.l.b16 %v902
        %v979 = vunpack.c.l.b16 %v903
        %v980 = vunpack.c.l.b16 %v905
        %v981 = vunpack.c.l.b16 %v906
        %v982 = vunpack.c.l.b16 %v908
        %v983 = vunpack.c.l.b16 %v909
        %v984 = vunpack.c.l.b16 %v911
        %v985 = vunpack.c.l.b16 %v912
        %v986 = vunpack.c.l.b16 %v914
        %v987 = vunpack.c.l.b16 %v915
        %v988 = vunpack.c.l.b16 %v917
        %v989 = vunpack.c.l.b16 %v918
        %v990 = vunpack.c.l.b16 %v920
        %v991 = vunpack.c.l.b16 %v921
        %v992 = vunpack.c.l.b16 %v923
        %v993 = vunpack.c.l.b16 %v924
        %v994 = vunpack.c.l.b16 %v926
        %v995 = vunpack.c.l.b16 %v927
        %v996 = vunpack.c.l.b16 %v929
        %v997 = vunpack.c.l.b16 %v930
        %v998 = vunpack.c.l.b16 %v932
        %v999 = vunpack.c.l.b16 %v933
        %v1000 = vunpack.c.l.b16 %v935
        %v1001 = vunpack.c.l.b16 %v936
        %v1002 = vpack.c.b16 %v971, %v970
        %v1003 = vpack.c.b16 %v973, %v972
        %v1004 = vpack.c.b16 %v975, %v974
        %v1005 = vpack.c.b16 %v977, %v976
        %v1006 = vpack.c.b16 %v979, %v978
        %v1007 = vpack.c.b16 %v981, %v980
        %v1008 = vpack.c.b16 %v983, %v982
        %v1009 = vpack.c.b16 %v985, %v984
        %v1010 = vpack.c.b16 %v987, %v986
        %v1011 = vpack.c.b16 %v989, %v988
        %v1012 = vpack.c.b16 %v991, %v990
        %v1013 = vpack.c.b16 %v993, %v992
        %v1014 = vpack.c.b16 %v995, %v994
        %v1015 = vpack.c.b16 %v997, %v996
        %v1016 = vpack.c.b16 %v999, %v998
        %v1017 = vpack.c.b16 %v1001, %v1000
        %v1034 = vunpack.c.l.b16 %v892
        %v1035 = vunpack.c.l.b16 %v895
        %v1036 = vunpack.c.l.b16 %v898
        %v1037 = vunpack.c.l.b16 %v901
        %v1038 = vunpack.c.l.b16 %v904
        %v1039 = vunpack.c.l.b16 %v907
        %v1040 = vunpack.c.l.b16 %v910
        %v1041 = vunpack.c.l.b16 %v913
        %v1042 = vunpack.c.l.b16 %v916
        %v1043 = vunpack.c.l.b16 %v919
        %v1044 = vunpack.c.l.b16 %v922
        %v1045 = vunpack.c.l.b16 %v925
        %v1046 = vunpack.c.l.b16 %v928
        %v1047 = vunpack.c.l.b16 %v931
        %v1048 = vunpack.c.l.b16 %v934
        %v1049 = vunpack.c.l.b16 %v937
        %v1050 = vpack.c.b16 %v1034, %v1034
        %v1051 = vpack.c.b16 %v1035, %v1035
        %v1052 = vpack.c.b16 %v1036, %v1036
        %v1053 = vpack.c.b16 %v1037, %v1037
        %v1054 = vpack.c.b16 %v1038, %v1038
        %v1055 = vpack.c.b16 %v1039, %v1039
        %v1056 = vpack.c.b16 %v1040, %v1040
        %v1057 = vpack.c.b16 %v1041, %v1041
        %v1058 = vpack.c.b16 %v1042, %v1042
        %v1059 = vpack.c.b16 %v1043, %v1043
        %v1060 = vpack.c.b16 %v1044, %v1044
        %v1061 = vpack.c.b16 %v1045, %v1045
        %v1062 = vpack.c.b16 %v1046, %v1046
        %v1063 = vpack.c.b16 %v1047, %v1047
        %v1064 = vpack.c.b16 %v1048, %v1048
        %v1065 = vpack.c.b16 %v1049, %v1049
        %vm1066 = vsmask.f32 7424
        %v1068 = vshrl.u32 %v1002, 16
        %v1070 = vshll.u32 %v1002, 16
        %v1072 = vrot.slane %v1070, 1
        %v1073 = vor.u32 %v1068, %v1072
        %v1075 = vshll.u32 %v1050, 16
        %v1077 = vrot.slane %v1075, 1
        %v1078 = vsel %vm1066, %v1073, %v1077
        %v1080 = vshrl.u32 %v1003, 16
        %v1082 = vshll.u32 %v1003, 16
        %v1084 = vrot.slane %v1082, 1
        %v1085 = vor.u32 %v1080, %v1084
        %v1087 = vshll.u32 %v1051, 16
        %v1089 = vrot.slane %v1087, 1
        %v1090 = vsel %vm1066, %v1085, %v1089
        %v1092 = vshrl.u32 %v1004, 16
        %v1094 = vshll.u32 %v1004, 16
        %v1096 = vrot.slane %v1094, 1
        %v1097 = vor.u32 %v1092, %v1096
        %v1099 = vshll.u32 %v1052, 16
        %v1101 = vrot.slane %v1099, 1
        %v1102 = vsel %vm1066, %v1097, %v1101
        %v1104 = vshrl.u32 %v1005, 16
        %v1106 = vshll.u32 %v1005, 16
        %v1108 = vrot.slane %v1106, 1
        %v1109 = vor.u32 %v1104, %v1108
        %v1111 = vshll.u32 %v1053, 16
        %v1113 = vrot.slane %v1111, 1
        %v1114 = vsel %vm1066, %v1109, %v1113
        %v1116 = vshrl.u32 %v1006, 16
        %v1118 = vshll.u32 %v1006, 16
        %v1120 = vrot.slane %v1118, 1
        %v1121 = vor.u32 %v1116, %v1120
        %v1123 = vshll.u32 %v1054, 16
        %v1125 = vrot.slane %v1123, 1
        %v1126 = vsel %vm1066, %v1121, %v1125
        %v1128 = vshrl.u32 %v1007, 16
        %v1130 = vshll.u32 %v1007, 16
        %v1132 = vrot.slane %v1130, 1
        %v1133 = vor.u32 %v1128, %v1132
        %v1135 = vshll.u32 %v1055, 16
        %v1137 = vrot.slane %v1135, 1
        %v1138 = vsel %vm1066, %v1133, %v1137
        %v1140 = vshrl.u32 %v1008, 16
        %v1142 = vshll.u32 %v1008, 16
        %v1144 = vrot.slane %v1142, 1
        %v1145 = vor.u32 %v1140, %v1144
        %v1147 = vshll.u32 %v1056, 16
        %v1149 = vrot.slane %v1147, 1
        %v1150 = vsel %vm1066, %v1145, %v1149
        %v1152 = vshrl.u32 %v1009, 16
        %v1154 = vshll.u32 %v1009, 16
        %v1156 = vrot.slane %v1154, 1
        %v1157 = vor.u32 %v1152, %v1156
        %v1159 = vshll.u32 %v1057, 16
        %v1161 = vrot.slane %v1159, 1
        %v1162 = vsel %vm1066, %v1157, %v1161
        %v1164 = vshrl.u32 %v1010, 16
        %v1166 = vshll.u32 %v1010, 16
        %v1168 = vrot.slane %v1166, 1
        %v1169 = vor.u32 %v1164, %v1168
        %v1171 = vshll.u32 %v1058, 16
        %v1173 = vrot.slane %v1171, 1
        %v1174 = vsel %vm1066, %v1169, %v1173
        %v1176 = vshrl.u32 %v1011, 16
        %v1178 = vshll.u32 %v1011, 16
        %v1180 = vrot.slane %v1178, 1
        %v1181 = vor.u32 %v1176, %v1180
        %v1183 = vshll.u32 %v1059, 16
        %v1185 = vrot.slane %v1183, 1
        %v1186 = vsel %vm1066, %v1181, %v1185
        %v1188 = vshrl.u32 %v1012, 16
        %v1190 = vshll.u32 %v1012, 16
        %v1192 = vrot.slane %v1190, 1
        %v1193 = vor.u32 %v1188, %v1192
        %v1195 = vshll.u32 %v1060, 16
        %v1197 = vrot.slane %v1195, 1
        %v1198 = vsel %vm1066, %v1193, %v1197
        %v1200 = vshrl.u32 %v1013, 16
        %v1202 = vshll.u32 %v1013, 16
        %v1204 = vrot.slane %v1202, 1
        %v1205 = vor.u32 %v1200, %v1204
        %v1207 = vshll.u32 %v1061, 16
        %v1209 = vrot.slane %v1207, 1
        %v1210 = vsel %vm1066, %v1205, %v1209
        %v1212 = vshrl.u32 %v1014, 16
        %v1214 = vshll.u32 %v1014, 16
        %v1216 = vrot.slane %v1214, 1
        %v1217 = vor.u32 %v1212, %v1216
        %v1219 = vshll.u32 %v1062, 16
        %v1221 = vrot.slane %v1219, 1
        %v1222 = vsel %vm1066, %v1217, %v1221
        %v1224 = vshrl.u32 %v1015, 16
        %v1226 = vshll.u32 %v1015, 16
        %v1228 = vrot.slane %v1226, 1
        %v1229 = vor.u32 %v1224, %v1228
        %v1231 = vshll.u32 %v1063, 16
        %v1233 = vrot.slane %v1231, 1
        %v1234 = vsel %vm1066, %v1229, %v1233
        %v1236 = vshrl.u32 %v1016, 16
        %v1238 = vshll.u32 %v1016, 16
        %v1240 = vrot.slane %v1238, 1
        %v1241 = vor.u32 %v1236, %v1240
        %v1243 = vshll.u32 %v1064, 16
        %v1245 = vrot.slane %v1243, 1
        %v1246 = vsel %vm1066, %v1241, %v1245
        %v1248 = vshrl.u32 %v1017, 16
        %v1250 = vshll.u32 %v1017, 16
        %v1252 = vrot.slane %v1250, 1
        %v1253 = vor.u32 %v1248, %v1252
        %v1255 = vshll.u32 %v1065, 16
        %v1257 = vrot.slane %v1255, 1
        %v1258 = vsel %vm1066, %v1253, %v1257
        %1259 = vrot.lane.b32.xlu0 %v1078, 64
        %v1260 = vpop.permute.xlu0 %1259
        %1261 = vrot.lane.b32.xlu0 %v1090, 64
        %v1262 = vpop.permute.xlu0 %1261
        %1263 = vrot.lane.b32.xlu0 %v1102, 64
        %v1264 = vpop.permute.xlu0 %1263
        %1265 = vrot.lane.b32.xlu0 %v1114, 64
        %v1266 = vpop.permute.xlu0 %1265
        %1267 = vrot.lane.b32.xlu0 %v1126, 64
        %v1268 = vpop.permute.xlu0 %1267
        %1269 = vrot.lane.b32.xlu0 %v1138, 64
        %v1270 = vpop.permute.xlu0 %1269
        %1271 = vrot.lane.b32.xlu0 %v1150, 64
        %v1272 = vpop.permute.xlu0 %1271
        %1273 = vrot.lane.b32.xlu0 %v1162, 64
        %v1274 = vpop.permute.xlu0 %1273
        %1275 = vrot.lane.b32.xlu0 %v1174, 64
        %v1276 = vpop.permute.xlu0 %1275
        %1277 = vrot.lane.b32.xlu0 %v1186, 64
        %v1278 = vpop.permute.xlu0 %1277
        %1279 = vrot.lane.b32.xlu0 %v1198, 64
        %v1280 = vpop.permute.xlu0 %1279
        %1281 = vrot.lane.b32.xlu0 %v1210, 64
        %v1282 = vpop.permute.xlu0 %1281
        %1283 = vrot.lane.b32.xlu0 %v1222, 64
        %v1284 = vpop.permute.xlu0 %1283
        %1285 = vrot.lane.b32.xlu0 %v1234, 64
        %v1286 = vpop.permute.xlu0 %1285
        %1287 = vrot.lane.b32.xlu0 %v1246, 64
        %v1288 = vpop.permute.xlu0 %1287
        %1289 = vrot.lane.b32.xlu0 %v1258, 64
        %v1290 = vpop.permute.xlu0 %1289
        %vm1291 = vcmask 1046528
        %v1292 = vrot.slane %v1002, 1
        %v1293 = vrot.slane %v1050, 1
        %v1294 = vsel %vm1291, %v1292, %v1293
        %v1295 = vrot.slane %v1003, 1
        %v1296 = vrot.slane %v1051, 1
        %v1297 = vsel %vm1291, %v1295, %v1296
        %v1298 = vrot.slane %v1004, 1
        %v1299 = vrot.slane %v1052, 1
        %v1300 = vsel %vm1291, %v1298, %v1299
        %v1301 = vrot.slane %v1005, 1
        %v1302 = vrot.slane %v1053, 1
        %v1303 = vsel %vm1291, %v1301, %v1302
        %v1304 = vrot.slane %v1006, 1
        %v1305 = vrot.slane %v1054, 1
        %v1306 = vsel %vm1291, %v1304, %v1305
        %v1307 = vrot.slane %v1007, 1
        %v1308 = vrot.slane %v1055, 1
        %v1309 = vsel %vm1291, %v1307, %v1308
        %v1310 = vrot.slane %v1008, 1
        %v1311 = vrot.slane %v1056, 1
        %v1312 = vsel %vm1291, %v1310, %v1311
        %v1313 = vrot.slane %v1009, 1
        %v1314 = vrot.slane %v1057, 1
        %v1315 = vsel %vm1291, %v1313, %v1314
        %v1316 = vrot.slane %v1010, 1
        %v1317 = vrot.slane %v1058, 1
        %v1318 = vsel %vm1291, %v1316, %v1317
        %v1319 = vrot.slane %v1011, 1
        %v1320 = vrot.slane %v1059, 1
        %v1321 = vsel %vm1291, %v1319, %v1320
        %v1322 = vrot.slane %v1012, 1
        %v1323 = vrot.slane %v1060, 1
        %v1324 = vsel %vm1291, %v1322, %v1323
        %v1325 = vrot.slane %v1013, 1
        %v1326 = vrot.slane %v1061, 1
        %v1327 = vsel %vm1291, %v1325, %v1326
        %v1328 = vrot.slane %v1014, 1
        %v1329 = vrot.slane %v1062, 1
        %v1330 = vsel %vm1291, %v1328, %v1329
        %v1331 = vrot.slane %v1015, 1
        %v1332 = vrot.slane %v1063, 1
        %v1333 = vsel %vm1291, %v1331, %v1332
        %v1334 = vrot.slane %v1016, 1
        %v1335 = vrot.slane %v1064, 1
        %v1336 = vsel %vm1291, %v1334, %v1335
        %v1337 = vrot.slane %v1017, 1
        %v1338 = vrot.slane %v1065, 1
        %v1339 = vsel %vm1291, %v1337, %v1338
        %vm1340 = vcmask 523264
        %v1342 = vsel %vm1340, %v1002, %v1260
        %v1345 = vsel %vm1340, %v1003, %v1262
        %v1348 = vsel %vm1340, %v1004, %v1264
        %v1351 = vsel %vm1340, %v1005, %v1266
        %v1354 = vsel %vm1340, %v1006, %v1268
        %v1357 = vsel %vm1340, %v1007, %v1270
        %v1360 = vsel %vm1340, %v1008, %v1272
        %v1363 = vsel %vm1340, %v1009, %v1274
        %v1366 = vsel %vm1340, %v1010, %v1276
        %v1369 = vsel %vm1340, %v1011, %v1278
        %v1372 = vsel %vm1340, %v1012, %v1280
        %v1375 = vsel %vm1340, %v1013, %v1282
        %v1378 = vsel %vm1340, %v1014, %v1284
        %v1381 = vsel %vm1340, %v1015, %v1286
        %v1384 = vsel %vm1340, %v1016, %v1288
        %v1387 = vsel %vm1340, %v1017, %v1290
        %v1389 = vld [vmem:[%s1] sm:$0xf]
        %v1390 = vld [vmem:[%s1 + $0x4] sm:$0xf]
        %v1391 = vld [vmem:[%s1 + $0x8] sm:$0xf]
        %v1392 = vld [vmem:[%s1 + $0xc] sm:$0xf]
        %v1393 = vld [vmem:[%s1 + $0x10] sm:$0xf]
        %v1394 = vld [vmem:[%s1 + $0x14] sm:$0xf]
        %v1395 = vld [vmem:[%s1 + $0x18] sm:$0xf]
        %v1396 = vld [vmem:[%s1 + $0x1c] sm:$0xf]
        %v1397 = vld [vmem:[%s1 + $0x20] sm:$0xf]
        %v1398 = vld [vmem:[%s1 + $0x24] sm:$0xf]
        %v1399 = vld [vmem:[%s1 + $0x28] sm:$0xf]
        %v1400 = vld [vmem:[%s1 + $0x2c] sm:$0xf]
        %v1401 = vld [vmem:[%s1 + $0x30] sm:$0xf]
        %v1402 = vld [vmem:[%s1 + $0x34] sm:$0xf]
        %v1403 = vld [vmem:[%s1 + $0x38] sm:$0xf]
        %v1404 = vld [vmem:[%s1 + $0x3c] sm:$0xf]
        %v1405 = vld [vmem:[%s1 + $0x40] sm:$0xf]
        %v1406 = vld [vmem:[%s1 + $0x44] sm:$0xf]
        %v1407 = vld [vmem:[%s1 + $0x48] sm:$0xf]
        %v1408 = vld [vmem:[%s1 + $0x4c] sm:$0xf]
        %v1409 = vld [vmem:[%s1 + $0x50] sm:$0xf]
        %v1410 = vld [vmem:[%s1 + $0x54] sm:$0xf]
        %v1411 = vld [vmem:[%s1 + $0x58] sm:$0xf]
        %v1412 = vld [vmem:[%s1 + $0x5c] sm:$0xf]
        %v1413 = vld [vmem:[%s772] sm:$0xf]
        %v1414 = vld [vmem:[%s772 + $0x4] sm:$0xf]
        %v1415 = vld [vmem:[%s772 + $0x8] sm:$0x1]
        %v1416 = vld [vmem:[%s772 + $0xc] sm:$0xf]
        %v1417 = vld [vmem:[%s772 + $0x10] sm:$0xf]
        %v1418 = vld [vmem:[%s772 + $0x14] sm:$0x1]
        %v1419 = vld [vmem:[%s772 + $0x18] sm:$0xf]
        %v1420 = vld [vmem:[%s772 + $0x1c] sm:$0xf]
        %v1421 = vld [vmem:[%s772 + $0x20] sm:$0x1]
        %v1422 = vld [vmem:[%s772 + $0x24] sm:$0xf]
        %v1423 = vld [vmem:[%s772 + $0x28] sm:$0xf]
        %v1424 = vld [vmem:[%s772 + $0x2c] sm:$0x1]
        %v1425 = vld [vmem:[%s772 + $0x30] sm:$0xf]
        %v1426 = vld [vmem:[%s772 + $0x34] sm:$0xf]
        %v1427 = vld [vmem:[%s772 + $0x38] sm:$0x1]
        %v1428 = vld [vmem:[%s772 + $0x3c] sm:$0xf]
        %v1429 = vld [vmem:[%s772 + $0x40] sm:$0xf]
        %v1430 = vld [vmem:[%s772 + $0x44] sm:$0x1]
        %v1431 = vld [vmem:[%s772 + $0x48] sm:$0xf]
        %v1432 = vld [vmem:[%s772 + $0x4c] sm:$0xf]
        %v1433 = vld [vmem:[%s772 + $0x50] sm:$0x1]
        %v1434 = vld [vmem:[%s772 + $0x54] sm:$0xf]
        %v1435 = vld [vmem:[%s772 + $0x58] sm:$0xf]
        %v1436 = vld [vmem:[%s772 + $0x5c] sm:$0x1]
        %v1437 = vld [vmem:[%s772 + $0x60] sm:$0xf]
        %v1438 = vld [vmem:[%s772 + $0x64] sm:$0xf]
        %v1439 = vld [vmem:[%s772 + $0x68] sm:$0x1]
        %v1440 = vld [vmem:[%s772 + $0x6c] sm:$0xf]
        %v1441 = vld [vmem:[%s772 + $0x70] sm:$0xf]
        %v1442 = vld [vmem:[%s772 + $0x74] sm:$0x1]
        %v1443 = vld [vmem:[%s772 + $0x78] sm:$0xf]
        %v1444 = vld [vmem:[%s772 + $0x7c] sm:$0xf]
        %v1445 = vld [vmem:[%s772 + $0x80] sm:$0x1]
        %v1446 = vld [vmem:[%s772 + $0x84] sm:$0xf]
        %v1447 = vld [vmem:[%s772 + $0x88] sm:$0xf]
        %v1448 = vld [vmem:[%s772 + $0x8c] sm:$0x1]
        %v1449 = vld [vmem:[%s772 + $0x90] sm:$0xf]
        %v1450 = vld [vmem:[%s772 + $0x94] sm:$0xf]
        %v1451 = vld [vmem:[%s772 + $0x98] sm:$0x1]
        %v1452 = vld [vmem:[%s772 + $0x9c] sm:$0xf]
        %v1453 = vld [vmem:[%s772 + $0xa0] sm:$0xf]
        %v1454 = vld [vmem:[%s772 + $0xa4] sm:$0x1]
        %v1455 = vld [vmem:[%s772 + $0xa8] sm:$0xf]
        %v1456 = vld [vmem:[%s772 + $0xac] sm:$0xf]
        %v1457 = vld [vmem:[%s772 + $0xb0] sm:$0x1]
        %v1458 = vld [vmem:[%s772 + $0xb4] sm:$0xf]
        %v1459 = vld [vmem:[%s772 + $0xb8] sm:$0xf]
        %v1460 = vld [vmem:[%s772 + $0xbc] sm:$0x1]
        %v1493 = vunpack.c.l.b16 %v1413
        %v1494 = vunpack.c.l.b16 %v1414
        %v1495 = vunpack.c.l.b16 %v1416
        %v1496 = vunpack.c.l.b16 %v1417
        %v1497 = vunpack.c.l.b16 %v1419
        %v1498 = vunpack.c.l.b16 %v1420
        %v1499 = vunpack.c.l.b16 %v1422
        %v1500 = vunpack.c.l.b16 %v1423
        %v1501 = vunpack.c.l.b16 %v1425
        %v1502 = vunpack.c.l.b16 %v1426
        %v1503 = vunpack.c.l.b16 %v1428
        %v1504 = vunpack.c.l.b16 %v1429
        %v1505 = vunpack.c.l.b16 %v1431
        %v1506 = vunpack.c.l.b16 %v1432
        %v1507 = vunpack.c.l.b16 %v1434
        %v1508 = vunpack.c.l.b16 %v1435
        %v1509 = vunpack.c.l.b16 %v1437
        %v1510 = vunpack.c.l.b16 %v1438
        %v1511 = vunpack.c.l.b16 %v1440
        %v1512 = vunpack.c.l.b16 %v1441
        %v1513 = vunpack.c.l.b16 %v1443
        %v1514 = vunpack.c.l.b16 %v1444
        %v1515 = vunpack.c.l.b16 %v1446
        %v1516 = vunpack.c.l.b16 %v1447
        %v1517 = vunpack.c.l.b16 %v1449
        %v1518 = vunpack.c.l.b16 %v1450
        %v1519 = vunpack.c.l.b16 %v1452
        %v1520 = vunpack.c.l.b16 %v1453
        %v1521 = vunpack.c.l.b16 %v1455
        %v1522 = vunpack.c.l.b16 %v1456
        %v1523 = vunpack.c.l.b16 %v1458
        %v1524 = vunpack.c.l.b16 %v1459
        %v1525 = vpack.c.b16 %v1494, %v1493
        %v1526 = vpack.c.b16 %v1496, %v1495
        %v1527 = vpack.c.b16 %v1498, %v1497
        %v1528 = vpack.c.b16 %v1500, %v1499
        %v1529 = vpack.c.b16 %v1502, %v1501
        %v1530 = vpack.c.b16 %v1504, %v1503
        %v1531 = vpack.c.b16 %v1506, %v1505
        %v1532 = vpack.c.b16 %v1508, %v1507
        %v1533 = vpack.c.b16 %v1510, %v1509
        %v1534 = vpack.c.b16 %v1512, %v1511
        %v1535 = vpack.c.b16 %v1514, %v1513
        %v1536 = vpack.c.b16 %v1516, %v1515
        %v1537 = vpack.c.b16 %v1518, %v1517
        %v1538 = vpack.c.b16 %v1520, %v1519
        %v1539 = vpack.c.b16 %v1522, %v1521
        %v1540 = vpack.c.b16 %v1524, %v1523
        %v1557 = vunpack.c.l.b16 %v1415
        %v1558 = vunpack.c.l.b16 %v1418
        %v1559 = vunpack.c.l.b16 %v1421
        %v1560 = vunpack.c.l.b16 %v1424
        %v1561 = vunpack.c.l.b16 %v1427
        %v1562 = vunpack.c.l.b16 %v1430
        %v1563 = vunpack.c.l.b16 %v1433
        %v1564 = vunpack.c.l.b16 %v1436
        %v1565 = vunpack.c.l.b16 %v1439
        %v1566 = vunpack.c.l.b16 %v1442
        %v1567 = vunpack.c.l.b16 %v1445
        %v1568 = vunpack.c.l.b16 %v1448
        %v1569 = vunpack.c.l.b16 %v1451
        %v1570 = vunpack.c.l.b16 %v1454
        %v1571 = vunpack.c.l.b16 %v1457
        %v1572 = vunpack.c.l.b16 %v1460
        %v1573 = vpack.c.b16 %v1557, %v1557
        %v1574 = vpack.c.b16 %v1558, %v1558
        %v1575 = vpack.c.b16 %v1559, %v1559
        %v1576 = vpack.c.b16 %v1560, %v1560
        %v1577 = vpack.c.b16 %v1561, %v1561
        %v1578 = vpack.c.b16 %v1562, %v1562
        %v1579 = vpack.c.b16 %v1563, %v1563
        %v1580 = vpack.c.b16 %v1564, %v1564
        %v1581 = vpack.c.b16 %v1565, %v1565
        %v1582 = vpack.c.b16 %v1566, %v1566
        %v1583 = vpack.c.b16 %v1567, %v1567
        %v1584 = vpack.c.b16 %v1568, %v1568
        %v1585 = vpack.c.b16 %v1569, %v1569
        %v1586 = vpack.c.b16 %v1570, %v1570
        %v1587 = vpack.c.b16 %v1571, %v1571
        %v1588 = vpack.c.b16 %v1572, %v1572
        %v1590 = vshrl.u32 %v1525, 16
        %v1592 = vshll.u32 %v1525, 16
        %v1594 = vrot.slane %v1592, 1
        %v1595 = vor.u32 %v1590, %v1594
        %v1597 = vshll.u32 %v1573, 16
        %v1599 = vrot.slane %v1597, 1
        %v1600 = vsel %vm1066, %v1595, %v1599
        %v1602 = vshrl.u32 %v1526, 16
        %v1604 = vshll.u32 %v1526, 16
        %v1606 = vrot.slane %v1604, 1
        %v1607 = vor.u32 %v1602, %v1606
        %v1609 = vshll.u32 %v1574, 16
        %v1611 = vrot.slane %v1609, 1
        %v1612 = vsel %vm1066, %v1607, %v1611
        %v1614 = vshrl.u32 %v1527, 16
        %v1616 = vshll.u32 %v1527, 16
        %v1618 = vrot.slane %v1616, 1
        %v1619 = vor.u32 %v1614, %v1618
        %v1621 = vshll.u32 %v1575, 16
        %v1623 = vrot.slane %v1621, 1
        %v1624 = vsel %vm1066, %v1619, %v1623
        %v1626 = vshrl.u32 %v1528, 16
        %v1628 = vshll.u32 %v1528, 16
        %v1630 = vrot.slane %v1628, 1
        %v1631 = vor.u32 %v1626, %v1630
        %v1633 = vshll.u32 %v1576, 16
        %v1635 = vrot.slane %v1633, 1
        %v1636 = vsel %vm1066, %v1631, %v1635
        %v1638 = vshrl.u32 %v1529, 16
        %v1640 = vshll.u32 %v1529, 16
        %v1642 = vrot.slane %v1640, 1
        %v1643 = vor.u32 %v1638, %v1642
        %v1645 = vshll.u32 %v1577, 16
        %v1647 = vrot.slane %v1645, 1
        %v1648 = vsel %vm1066, %v1643, %v1647
        %v1650 = vshrl.u32 %v1530, 16
        %v1652 = vshll.u32 %v1530, 16
        %v1654 = vrot.slane %v1652, 1
        %v1655 = vor.u32 %v1650, %v1654
        %v1657 = vshll.u32 %v1578, 16
        %v1659 = vrot.slane %v1657, 1
        %v1660 = vsel %vm1066, %v1655, %v1659
        %v1662 = vshrl.u32 %v1531, 16
        %v1664 = vshll.u32 %v1531, 16
        %v1666 = vrot.slane %v1664, 1
        %v1667 = vor.u32 %v1662, %v1666
        %v1669 = vshll.u32 %v1579, 16
        %v1671 = vrot.slane %v1669, 1
        %v1672 = vsel %vm1066, %v1667, %v1671
        %v1674 = vshrl.u32 %v1532, 16
        %v1676 = vshll.u32 %v1532, 16
        %v1678 = vrot.slane %v1676, 1
        %v1679 = vor.u32 %v1674, %v1678
        %v1681 = vshll.u32 %v1580, 16
        %v1683 = vrot.slane %v1681, 1
        %v1684 = vsel %vm1066, %v1679, %v1683
        %v1686 = vshrl.u32 %v1533, 16
        %v1688 = vshll.u32 %v1533, 16
        %v1690 = vrot.slane %v1688, 1
        %v1691 = vor.u32 %v1686, %v1690
        %v1693 = vshll.u32 %v1581, 16
        %v1695 = vrot.slane %v1693, 1
        %v1696 = vsel %vm1066, %v1691, %v1695
        %v1698 = vshrl.u32 %v1534, 16
        %v1700 = vshll.u32 %v1534, 16
        %v1702 = vrot.slane %v1700, 1
        %v1703 = vor.u32 %v1698, %v1702
        %v1705 = vshll.u32 %v1582, 16
        %v1707 = vrot.slane %v1705, 1
        %v1708 = vsel %vm1066, %v1703, %v1707
        %v1710 = vshrl.u32 %v1535, 16
        %v1712 = vshll.u32 %v1535, 16
        %v1714 = vrot.slane %v1712, 1
        %v1715 = vor.u32 %v1710, %v1714
        %v1717 = vshll.u32 %v1583, 16
        %v1719 = vrot.slane %v1717, 1
        %v1720 = vsel %vm1066, %v1715, %v1719
        %v1722 = vshrl.u32 %v1536, 16
        %v1724 = vshll.u32 %v1536, 16
        %v1726 = vrot.slane %v1724, 1
        %v1727 = vor.u32 %v1722, %v1726
        %v1729 = vshll.u32 %v1584, 16
        %v1731 = vrot.slane %v1729, 1
        %v1732 = vsel %vm1066, %v1727, %v1731
        %v1734 = vshrl.u32 %v1537, 16
        %v1736 = vshll.u32 %v1537, 16
        %v1738 = vrot.slane %v1736, 1
        %v1739 = vor.u32 %v1734, %v1738
        %v1741 = vshll.u32 %v1585, 16
        %v1743 = vrot.slane %v1741, 1
        %v1744 = vsel %vm1066, %v1739, %v1743
        %v1746 = vshrl.u32 %v1538, 16
        %v1748 = vshll.u32 %v1538, 16
        %v1750 = vrot.slane %v1748, 1
        %v1751 = vor.u32 %v1746, %v1750
        %v1753 = vshll.u32 %v1586, 16
        %v1755 = vrot.slane %v1753, 1
        %v1756 = vsel %vm1066, %v1751, %v1755
        %v1758 = vshrl.u32 %v1539, 16
        %v1760 = vshll.u32 %v1539, 16
        %v1762 = vrot.slane %v1760, 1
        %v1763 = vor.u32 %v1758, %v1762
        %v1765 = vshll.u32 %v1587, 16
        %v1767 = vrot.slane %v1765, 1
        %v1768 = vsel %vm1066, %v1763, %v1767
        %v1770 = vshrl.u32 %v1540, 16
        %v1772 = vshll.u32 %v1540, 16
        %v1774 = vrot.slane %v1772, 1
        %v1775 = vor.u32 %v1770, %v1774
        %v1777 = vshll.u32 %v1588, 16
        %v1779 = vrot.slane %v1777, 1
        %v1780 = vsel %vm1066, %v1775, %v1779
        %1781 = vrot.lane.b32.xlu0 %v1600, 64
        %v1782 = vpop.permute.xlu0 %1781
        %1783 = vrot.lane.b32.xlu0 %v1612, 64
        %v1784 = vpop.permute.xlu0 %1783
        %1785 = vrot.lane.b32.xlu0 %v1624, 64
        %v1786 = vpop.permute.xlu0 %1785
        %1787 = vrot.lane.b32.xlu0 %v1636, 64
        %v1788 = vpop.permute.xlu0 %1787
        %1789 = vrot.lane.b32.xlu0 %v1648, 64
        %v1790 = vpop.permute.xlu0 %1789
        %1791 = vrot.lane.b32.xlu0 %v1660, 64
        %v1792 = vpop.permute.xlu0 %1791
        %1793 = vrot.lane.b32.xlu0 %v1672, 64
        %v1794 = vpop.permute.xlu0 %1793
        %1795 = vrot.lane.b32.xlu0 %v1684, 64
        %v1796 = vpop.permute.xlu0 %1795
        %1797 = vrot.lane.b32.xlu0 %v1696, 64
        %v1798 = vpop.permute.xlu0 %1797
        %1799 = vrot.lane.b32.xlu0 %v1708, 64
        %v1800 = vpop.permute.xlu0 %1799
        %1801 = vrot.lane.b32.xlu0 %v1720, 64
        %v1802 = vpop.permute.xlu0 %1801
        %1803 = vrot.lane.b32.xlu0 %v1732, 64
        %v1804 = vpop.permute.xlu0 %1803
        %1805 = vrot.lane.b32.xlu0 %v1744, 64
        %v1806 = vpop.permute.xlu0 %1805
        %1807 = vrot.lane.b32.xlu0 %v1756, 64
        %v1808 = vpop.permute.xlu0 %1807
        %1809 = vrot.lane.b32.xlu0 %v1768, 64
        %v1810 = vpop.permute.xlu0 %1809
        %1811 = vrot.lane.b32.xlu0 %v1780, 64
        %v1812 = vpop.permute.xlu0 %1811
        %v1813 = vrot.slane %v1525, 1
        %v1814 = vrot.slane %v1573, 1
        %v1815 = vsel %vm1291, %v1813, %v1814
        %v1816 = vrot.slane %v1526, 1
        %v1817 = vrot.slane %v1574, 1
        %v1818 = vsel %vm1291, %v1816, %v1817
        %v1819 = vrot.slane %v1527, 1
        %v1820 = vrot.slane %v1575, 1
        %v1821 = vsel %vm1291, %v1819, %v1820
        %v1822 = vrot.slane %v1528, 1
        %v1823 = vrot.slane %v1576, 1
        %v1824 = vsel %vm1291, %v1822, %v1823
        %v1825 = vrot.slane %v1529, 1
        %v1826 = vrot.slane %v1577, 1
        %v1827 = vsel %vm1291, %v1825, %v1826
        %v1828 = vrot.slane %v1530, 1
        %v1829 = vrot.slane %v1578, 1
        %v1830 = vsel %vm1291, %v1828, %v1829
        %v1831 = vrot.slane %v1531, 1
        %v1832 = vrot.slane %v1579, 1
        %v1833 = vsel %vm1291, %v1831, %v1832
        %v1834 = vrot.slane %v1532, 1
        %v1835 = vrot.slane %v1580, 1
        %v1836 = vsel %vm1291, %v1834, %v1835
        %v1837 = vrot.slane %v1533, 1
        %v1838 = vrot.slane %v1581, 1
        %v1839 = vsel %vm1291, %v1837, %v1838
        %v1840 = vrot.slane %v1534, 1
        %v1841 = vrot.slane %v1582, 1
        %v1842 = vsel %vm1291, %v1840, %v1841
        %v1843 = vrot.slane %v1535, 1
        %v1844 = vrot.slane %v1583, 1
        %v1845 = vsel %vm1291, %v1843, %v1844
        %v1846 = vrot.slane %v1536, 1
        %v1847 = vrot.slane %v1584, 1
        %v1848 = vsel %vm1291, %v1846, %v1847
        %v1849 = vrot.slane %v1537, 1
        %v1850 = vrot.slane %v1585, 1
        %v1851 = vsel %vm1291, %v1849, %v1850
        %v1852 = vrot.slane %v1538, 1
        %v1853 = vrot.slane %v1586, 1
        %v1854 = vsel %vm1291, %v1852, %v1853
        %v1855 = vrot.slane %v1539, 1
        %v1856 = vrot.slane %v1587, 1
        %v1857 = vsel %vm1291, %v1855, %v1856
        %v1858 = vrot.slane %v1540, 1
        %v1859 = vrot.slane %v1588, 1
        %v1860 = vsel %vm1291, %v1858, %v1859
        %v1862 = vsel %vm1340, %v1525, %v1782
        %v1865 = vsel %vm1340, %v1526, %v1784
        %v1868 = vsel %vm1340, %v1527, %v1786
        %v1871 = vsel %vm1340, %v1528, %v1788
        %v1874 = vsel %vm1340, %v1529, %v1790
        %v1877 = vsel %vm1340, %v1530, %v1792
        %v1880 = vsel %vm1340, %v1531, %v1794
        %v1883 = vsel %vm1340, %v1532, %v1796
        %v1886 = vsel %vm1340, %v1533, %v1798
        %v1889 = vsel %vm1340, %v1534, %v1800
        %v1892 = vsel %vm1340, %v1535, %v1802
        %v1895 = vsel %vm1340, %v1536, %v1804
        %v1898 = vsel %vm1340, %v1537, %v1806
        %v1901 = vsel %vm1340, %v1538, %v1808
        %v1904 = vsel %vm1340, %v1539, %v1810
        %v1907 = vsel %vm1340, %v1540, %v1812
        %s1909 = scalar_lea.vmem %s1, 96
        %v1910 = vld [vmem:[%s1909] sm:$0xf]
        %v1911 = vld [vmem:[%s1909 + $0x4] sm:$0xf]
        %v1912 = vld [vmem:[%s1909 + $0x8] sm:$0xf]
        %v1913 = vld [vmem:[%s1909 + $0xc] sm:$0xf]
        %v1914 = vld [vmem:[%s1909 + $0x10] sm:$0xf]
        %v1915 = vld [vmem:[%s1909 + $0x14] sm:$0xf]
        %v1916 = vld [vmem:[%s1909 + $0x18] sm:$0xf]
        %v1917 = vld [vmem:[%s1909 + $0x1c] sm:$0xf]
        %v1918 = vld [vmem:[%s1909 + $0x20] sm:$0xf]
        %v1919 = vld [vmem:[%s1909 + $0x24] sm:$0xf]
        %v1920 = vld [vmem:[%s1909 + $0x28] sm:$0xf]
        %v1921 = vld [vmem:[%s1909 + $0x2c] sm:$0xf]
        %v1922 = vld [vmem:[%s1909 + $0x30] sm:$0xf]
        %v1923 = vld [vmem:[%s1909 + $0x34] sm:$0xf]
        %v1924 = vld [vmem:[%s1909 + $0x38] sm:$0xf]
        %v1925 = vld [vmem:[%s1909 + $0x3c] sm:$0xf]
        %v1926 = vld [vmem:[%s1909 + $0x40] sm:$0xf]
        %v1927 = vld [vmem:[%s1909 + $0x44] sm:$0xf]
        %v1928 = vld [vmem:[%s1909 + $0x48] sm:$0xf]
        %v1929 = vld [vmem:[%s1909 + $0x4c] sm:$0xf]
        %v1930 = vld [vmem:[%s1909 + $0x50] sm:$0xf]
        %v1931 = vld [vmem:[%s1909 + $0x54] sm:$0xf]
        %v1932 = vld [vmem:[%s1909 + $0x58] sm:$0xf]
        %v1933 = vld [vmem:[%s1909 + $0x5c] sm:$0xf]
        %v1958 = vunpack.c.l.b16 %v1910
        %v1959 = vunpack.c.l.b16 %v1911
        %v1960 = vunpack.c.l.b16 %v1912
        %v1961 = vunpack.c.l.b16 %v1913
        %v1962 = vunpack.c.l.b16 %v1914
        %v1963 = vunpack.c.l.b16 %v1915
        %v1964 = vunpack.c.l.b16 %v1916
        %v1965 = vunpack.c.l.b16 %v1917
        %v1966 = vunpack.c.l.b16 %v1918
        %v1967 = vunpack.c.l.b16 %v1919
        %v1968 = vunpack.c.l.b16 %v1920
        %v1969 = vunpack.c.l.b16 %v1921
        %v1970 = vunpack.c.l.b16 %v1922
        %v1971 = vunpack.c.l.b16 %v1923
        %v1972 = vunpack.c.l.b16 %v1924
        %v1973 = vunpack.c.l.b16 %v1925
        %v1974 = vunpack.c.l.b16 %v1926
        %v1975 = vunpack.c.l.b16 %v1927
        %v1976 = vunpack.c.l.b16 %v1928
        %v1977 = vunpack.c.l.b16 %v1929
        %v1978 = vunpack.c.l.b16 %v1930
        %v1979 = vunpack.c.l.b16 %v1931
        %v1980 = vunpack.c.l.b16 %v1932
        %v1981 = vunpack.c.l.b16 %v1933
        %v1982 = vpack.c.b16 %v1959, %v1958
        %v1983 = vpack.c.b16 %v1961, %v1960
        %v1984 = vpack.c.b16 %v1963, %v1962
        %v1985 = vpack.c.b16 %v1965, %v1964
        %v1986 = vpack.c.b16 %v1967, %v1966
        %v1987 = vpack.c.b16 %v1969, %v1968
        %v1988 = vpack.c.b16 %v1971, %v1970
        %v1989 = vpack.c.b16 %v1973, %v1972
        %v1990 = vpack.c.b16 %v1975, %v1974
        %v1991 = vpack.c.b16 %v1977, %v1976
        %v1992 = vpack.c.b16 %v1979, %v1978
        %v1993 = vpack.c.b16 %v1981, %v1980
        %v2007 = vsel %vm1340, %v1815, 0
        %v2010 = vsel %vm1340, %v1818, 0
        %v2013 = vsel %vm1340, %v1821, 0
        %v2016 = vsel %vm1340, %v1824, 0
        %v2019 = vsel %vm1340, %v1827, 0
        %v2022 = vsel %vm1340, %v1830, 0
        %v2025 = vsel %vm1340, %v1833, 0
        %v2028 = vsel %vm1340, %v1836, 0
        %v2031 = vsel %vm1340, %v1839, 0
        %v2034 = vsel %vm1340, %v1842, 0
        %v2037 = vsel %vm1340, %v1845, 0
        %v2040 = vsel %vm1340, %v1848, 0
        %v2043 = vsel %vm1340, %v1851, 0
        %v2046 = vsel %vm1340, %v1854, 0
        %v2049 = vsel %vm1340, %v1857, 0
        %v2052 = vsel %vm1340, %v1860, 0
        %2054 = vmatprep.subr.bf16.mxu0 0
        %2055 = vmatpush1.bf16.msra.mxu0 %v1982
        %2056 = vmatprep.subr.bf16.mxu0 0
        %2057 = vmatpush1.bf16.msra.mxu0 %v1983
        %2058 = vmatprep.subr.bf16.mxu0 0
        %2059 = vmatpush1.bf16.msra.mxu0 %v1984
        %2060 = vmatprep.subr.bf16.mxu0 0
        %2061 = vmatpush1.bf16.msra.mxu0 %v1985
        %2062 = vmatprep.subr.bf16.mxu0 0
        %2063 = vmatpush1.bf16.msra.mxu0 %v1986
        %2064 = vmatprep.subr.bf16.mxu0 0
        %2065 = vmatpush1.bf16.msra.mxu0 %v1987
        %2066 = vmatprep.subr.bf16.mxu0 0
        %2067 = vmatpush1.bf16.msra.mxu0 %v1988
        %2068 = vmatprep.subr.bf16.mxu0 0
        %2069 = vmatpush1.bf16.msra.mxu0 %v1989
        %2070 = vmatprep.subr.bf16.mxu0 0
        %2071 = vmatpush1.bf16.msra.mxu0 %v1990
        %2072 = vmatprep.subr.bf16.mxu0 0
        %2073 = vmatpush1.bf16.msra.mxu0 %v1991
        %2074 = vmatprep.subr.bf16.mxu0 0
        %2075 = vmatpush1.bf16.msra.mxu0 %v1992
        %2076 = vmatprep.subr.bf16.mxu0 0
        %2077 = vmatpush1.bf16.msra.mxu0 %v1993
        %2078 = vmatprep.subr.bf16.mxu0 0
        %2079 = vmatpush1.bf16.msra.mxu0 0
        %2080 = vmatprep.subr.bf16.mxu0 0
        %2081 = vmatpush1.bf16.msra.mxu0 0
        %2082 = vmatprep.subr.bf16.mxu0 0
        %2083 = vmatpush1.bf16.msra.mxu0 0
        %2084 = vmatprep.subr.bf16.mxu0 0
        %2085 = vmatpush1.bf16.msra.mxu0 0
        %2086 = vmatprep.mubr.bf16.mxu0 %v2007
        %2087 = vmatmul.mubr.bf16.gmra.mrb[0].mxu0 %v1862
        %v2088 = vpop.f32.mrb[0].mxu0
        %v2089 = vadd.f32 0.0, %v2088
        %v2090 = vpop.f32.mrb[0].mxu0
        %v2091 = vpop.f32.mrb[0].mxu0
        %v2092 = vadd.f32 0.0, %v2091
        %v2093 = vpop.f32.mrb[0].mxu0
        %2094 = vmatprep.mubr.bf16.mxu0 %v2010
        %2095 = vmatmul.mubr.bf16.gmra.mrb[0].mxu0 %v1865
        %v2096 = vpop.f32.mrb[0].mxu0
        %v2097 = vadd.f32 0.0, %v2096
        %v2098 = vpop.f32.mrb[0].mxu0
        %v2099 = vpop.f32.mrb[0].mxu0
        %v2100 = vadd.f32 0.0, %v2099
        %v2101 = vpop.f32.mrb[0].mxu0
        %2102 = vmatprep.mubr.bf16.mxu0 %v2013
        %2103 = vmatmul.mubr.bf16.gmra.mrb[0].mxu0 %v1868
        %v2104 = vpop.f32.mrb[0].mxu0
        %v2105 = vadd.f32 0.0, %v2104
        %v2106 = vpop.f32.mrb[0].mxu0
        %v2107 = vpop.f32.mrb[0].mxu0
        %v2108 = vadd.f32 0.0, %v2107
        %v2109 = vpop.f32.mrb[0].mxu0
        %2110 = vmatprep.mubr.bf16.mxu0 %v2016
        %2111 = vmatmul.mubr.bf16.gmra.mrb[0].mxu0 %v1871
        %v2112 = vpop.f32.mrb[0].mxu0
        %v2113 = vadd.f32 0.0, %v2112
        %v2114 = vpop.f32.mrb[0].mxu0
        %v2115 = vpop.f32.mrb[0].mxu0
        %v2116 = vadd.f32 0.0, %v2115
        %v2117 = vpop.f32.mrb[0].mxu0
        %2118 = vmatprep.mubr.bf16.mxu0 %v2019
        %2119 = vmatmul.mubr.bf16.gmra.mrb[0].mxu0 %v1874
        %v2120 = vpop.f32.mrb[0].mxu0
        %v2121 = vadd.f32 0.0, %v2120
        %v2122 = vpop.f32.mrb[0].mxu0
        %v2123 = vpop.f32.mrb[0].mxu0
        %v2124 = vadd.f32 0.0, %v2123
        %v2125 = vpop.f32.mrb[0].mxu0
        %2126 = vmatprep.mubr.bf16.mxu0 %v2022
        %2127 = vmatmul.mubr.bf16.gmra.mrb[0].mxu0 %v1877
        %v2128 = vpop.f32.mrb[0].mxu0
        %v2129 = vadd.f32 0.0, %v2128
        %v2130 = vpop.f32.mrb[0].mxu0
        %v2131 = vpop.f32.mrb[0].mxu0
        %v2132 = vadd.f32 0.0, %v2131
        %v2133 = vpop.f32.mrb[0].mxu0
        %2134 = vmatprep.mubr.bf16.mxu0 %v2025
        %2135 = vmatmul.mubr.bf16.gmra.mrb[0].mxu0 %v1880
        %v2136 = vpop.f32.mrb[0].mxu0
        %v2137 = vadd.f32 0.0, %v2136
        %v2138 = vpop.f32.mrb[0].mxu0
        %v2139 = vpop.f32.mrb[0].mxu0
        %v2140 = vadd.f32 0.0, %v2139
        %v2141 = vpop.f32.mrb[0].mxu0
        %2142 = vmatprep.mubr.bf16.mxu0 %v2028
        %2143 = vmatmul.mubr.bf16.gmra.mrb[0].mxu0 %v1883
        %v2144 = vpop.f32.mrb[0].mxu0
        %v2145 = vadd.f32 0.0, %v2144
        %v2146 = vpop.f32.mrb[0].mxu0
        %v2147 = vpop.f32.mrb[0].mxu0
        %v2148 = vadd.f32 0.0, %v2147
        %v2149 = vpop.f32.mrb[0].mxu0
        %2150 = vmatprep.mubr.bf16.mxu0 %v2031
        %2151 = vmatmul.mubr.bf16.gmra.mrb[0].mxu0 %v1886
        %v2152 = vpop.f32.mrb[0].mxu0
        %v2153 = vadd.f32 0.0, %v2152
        %v2154 = vpop.f32.mrb[0].mxu0
        %v2155 = vpop.f32.mrb[0].mxu0
        %v2156 = vadd.f32 0.0, %v2155
        %v2157 = vpop.f32.mrb[0].mxu0
        %2158 = vmatprep.mubr.bf16.mxu0 %v2034
        %2159 = vmatmul.mubr.bf16.gmra.mrb[0].mxu0 %v1889
        %v2160 = vpop.f32.mrb[0].mxu0
        %v2161 = vadd.f32 0.0, %v2160
        %v2162 = vpop.f32.mrb[0].mxu0
        %v2163 = vpop.f32.mrb[0].mxu0
        %v2164 = vadd.f32 0.0, %v2163
        %v2165 = vpop.f32.mrb[0].mxu0
        %2166 = vmatprep.mubr.bf16.mxu0 %v2037
        %2167 = vmatmul.mubr.bf16.gmra.mrb[0].mxu0 %v1892
        %v2168 = vpop.f32.mrb[0].mxu0
        %v2169 = vadd.f32 0.0, %v2168
        %v2170 = vpop.f32.mrb[0].mxu0
        %v2171 = vpop.f32.mrb[0].mxu0
        %v2172 = vadd.f32 0.0, %v2171
        %v2173 = vpop.f32.mrb[0].mxu0
        %2174 = vmatprep.mubr.bf16.mxu0 %v2040
        %2175 = vmatmul.mubr.bf16.gmra.mrb[0].mxu0 %v1895
        %v2176 = vpop.f32.mrb[0].mxu0
        %v2177 = vadd.f32 0.0, %v2176
        %v2178 = vpop.f32.mrb[0].mxu0
        %v2179 = vpop.f32.mrb[0].mxu0
        %v2180 = vadd.f32 0.0, %v2179
        %v2181 = vpop.f32.mrb[0].mxu0
        %2182 = vmatprep.mubr.bf16.mxu0 %v2043
        %2183 = vmatmul.mubr.bf16.gmra.mrb[0].mxu0 %v1898
        %v2184 = vpop.f32.mrb[0].mxu0
        %v2185 = vadd.f32 0.0, %v2184
        %v2186 = vpop.f32.mrb[0].mxu0
        %v2187 = vpop.f32.mrb[0].mxu0
        %v2188 = vadd.f32 0.0, %v2187
        %v2189 = vpop.f32.mrb[0].mxu0
        %2190 = vmatprep.mubr.bf16.mxu0 %v2046
        %2191 = vmatmul.mubr.bf16.gmra.mrb[0].mxu0 %v1901
        %v2192 = vpop.f32.mrb[0].mxu0
        %v2193 = vadd.f32 0.0, %v2192
        %v2194 = vpop.f32.mrb[0].mxu0
        %v2195 = vpop.f32.mrb[0].mxu0
        %v2196 = vadd.f32 0.0, %v2195
        %v2197 = vpop.f32.mrb[0].mxu0
        %2198 = vmatprep.mubr.bf16.mxu0 %v2049
        %2199 = vmatmul.mubr.bf16.gmra.mrb[0].mxu0 %v1904
        %v2200 = vpop.f32.mrb[0].mxu0
        %v2201 = vadd.f32 0.0, %v2200
        %v2202 = vpop.f32.mrb[0].mxu0
        %v2203 = vpop.f32.mrb[0].mxu0
        %v2204 = vadd.f32 0.0, %v2203
        %v2205 = vpop.f32.mrb[0].mxu0
        %2206 = vmatprep.mubr.bf16.mxu0 %v2052
        %2207 = vmatmul.mubr.bf16.gmra.mrb[0].mxu0 %v1907
        %v2208 = vpop.f32.mrb[0].mxu0
        %v2209 = vadd.f32 0.0, %v2208
        %v2210 = vpop.f32.mrb[0].mxu0
        %v2211 = vpop.f32.mrb[0].mxu0
        %v2212 = vadd.f32 0.0, %v2211
        %v2213 = vpop.f32.mrb[0].mxu0
        %2214 = vdwg.mxu0
        %v2239 = vunpack.c.l.b16 %v1389
        %v2240 = vunpack.c.l.b16 %v1390
        %v2241 = vunpack.c.l.b16 %v1391
        %v2242 = vunpack.c.l.b16 %v1392
        %v2243 = vunpack.c.l.b16 %v1393
        %v2244 = vunpack.c.l.b16 %v1394
        %v2245 = vunpack.c.l.b16 %v1395
        %v2246 = vunpack.c.l.b16 %v1396
        %v2247 = vunpack.c.l.b16 %v1397
        %v2248 = vunpack.c.l.b16 %v1398
        %v2249 = vunpack.c.l.b16 %v1399
        %v2250 = vunpack.c.l.b16 %v1400
        %v2251 = vunpack.c.l.b16 %v1401
        %v2252 = vunpack.c.l.b16 %v1402
        %v2253 = vunpack.c.l.b16 %v1403
        %v2254 = vunpack.c.l.b16 %v1404
        %v2255 = vunpack.c.l.b16 %v1405
        %v2256 = vunpack.c.l.b16 %v1406
        %v2257 = vunpack.c.l.b16 %v1407
        %v2258 = vunpack.c.l.b16 %v1408
        %v2259 = vunpack.c.l.b16 %v1409
        %v2260 = vunpack.c.l.b16 %v1410
        %v2261 = vunpack.c.l.b16 %v1411
        %v2262 = vunpack.c.l.b16 %v1412
        %v2263 = vpack.c.b16 %v2240, %v2239
        %v2264 = vpack.c.b16 %v2242, %v2241
        %v2265 = vpack.c.b16 %v2244, %v2243
        %v2266 = vpack.c.b16 %v2246, %v2245
        %v2267 = vpack.c.b16 %v2248, %v2247
        %v2268 = vpack.c.b16 %v2250, %v2249
        %v2269 = vpack.c.b16 %v2252, %v2251
        %v2270 = vpack.c.b16 %v2254, %v2253
        %v2271 = vpack.c.b16 %v2256, %v2255
        %v2272 = vpack.c.b16 %v2258, %v2257
        %v2273 = vpack.c.b16 %v2260, %v2259
        %v2274 = vpack.c.b16 %v2262, %v2261
        %v2288 = vsel %vm1340, %v1294, 0
        %v2291 = vsel %vm1340, %v1297, 0
        %v2294 = vsel %vm1340, %v1300, 0
        %v2297 = vsel %vm1340, %v1303, 0
        %v2300 = vsel %vm1340, %v1306, 0
        %v2303 = vsel %vm1340, %v1309, 0
        %v2306 = vsel %vm1340, %v1312, 0
        %v2309 = vsel %vm1340, %v1315, 0
        %v2312 = vsel %vm1340, %v1318, 0
        %v2315 = vsel %vm1340, %v1321, 0
        %v2318 = vsel %vm1340, %v1324, 0
        %v2321 = vsel %vm1340, %v1327, 0
        %v2324 = vsel %vm1340, %v1330, 0
        %v2327 = vsel %vm1340, %v1333, 0
        %v2330 = vsel %vm1340, %v1336, 0
        %v2333 = vsel %vm1340, %v1339, 0
        %2335 = vmatprep.subr.bf16.mxu0 0
        %2336 = vmatpush1.bf16.msra.mxu0 %v2263
        %2337 = vmatprep.subr.bf16.mxu0 0
        %2338 = vmatpush1.bf16.msra.mxu0 %v2264
        %2339 = vmatprep.subr.bf16.mxu0 0
        %2340 = vmatpush1.bf16.msra.mxu0 %v2265
        %2341 = vmatprep.subr.bf16.mxu0 0
        %2342 = vmatpush1.bf16.msra.mxu0 %v2266
        %2343 = vmatprep.subr.bf16.mxu0 0
        %2344 = vmatpush1.bf16.msra.mxu0 %v2267
        %2345 = vmatprep.subr.bf16.mxu0 0
        %2346 = vmatpush1.bf16.msra.mxu0 %v2268
        %2347 = vmatprep.subr.bf16.mxu0 0
        %2348 = vmatpush1.bf16.msra.mxu0 %v2269
        %2349 = vmatprep.subr.bf16.mxu0 0
        %2350 = vmatpush1.bf16.msra.mxu0 %v2270
        %2351 = vmatprep.subr.bf16.mxu0 0
        %2352 = vmatpush1.bf16.msra.mxu0 %v2271
        %2353 = vmatprep.subr.bf16.mxu0 0
        %2354 = vmatpush1.bf16.msra.mxu0 %v2272
        %2355 = vmatprep.subr.bf16.mxu0 0
        %2356 = vmatpush1.bf16.msra.mxu0 %v2273
        %2357 = vmatprep.subr.bf16.mxu0 0
        %2358 = vmatpush1.bf16.msra.mxu0 %v2274
        %2359 = vmatprep.subr.bf16.mxu0 0
        %2360 = vmatpush1.bf16.msra.mxu0 0
        %2361 = vmatprep.subr.bf16.mxu0 0
        %2362 = vmatpush1.bf16.msra.mxu0 0
        %2363 = vmatprep.subr.bf16.mxu0 0
        %2364 = vmatpush1.bf16.msra.mxu0 0
        %2365 = vmatprep.subr.bf16.mxu0 0
        %2366 = vmatpush1.bf16.msra.mxu0 0
        %2367 = vmatprep.mubr.bf16.mxu0 %v2288
        %2368 = vmatmul.mubr.bf16.gmra.mrb[0].mxu0 %v1342
        %v2369 = vpop.f32.mrb[0].mxu0
        %v2370 = vadd.f32 %v2089, %v2369
        %v2371 = vpop.f32.mrb[0].mxu0
        %v2372 = vpop.f32.mrb[0].mxu0
        %v2373 = vadd.f32 %v2092, %v2372
        %v2374 = vpop.f32.mrb[0].mxu0
        %2375 = vmatprep.mubr.bf16.mxu0 %v2291
        %2376 = vmatmul.mubr.bf16.gmra.mrb[0].mxu0 %v1345
        %v2377 = vpop.f32.mrb[0].mxu0
        %v2378 = vadd.f32 %v2097, %v2377
        %v2379 = vpop.f32.mrb[0].mxu0
        %v2380 = vpop.f32.mrb[0].mxu0
        %v2381 = vadd.f32 %v2100, %v2380
        %v2382 = vpop.f32.mrb[0].mxu0
        %2383 = vmatprep.mubr.bf16.mxu0 %v2294
        %2384 = vmatmul.mubr.bf16.gmra.mrb[0].mxu0 %v1348
        %v2385 = vpop.f32.mrb[0].mxu0
        %v2386 = vadd.f32 %v2105, %v2385
        %v2387 = vpop.f32.mrb[0].mxu0
        %v2388 = vpop.f32.mrb[0].mxu0
        %v2389 = vadd.f32 %v2108, %v2388
        %v2390 = vpop.f32.mrb[0].mxu0
        %2391 = vmatprep.mubr.bf16.mxu0 %v2297
        %2392 = vmatmul.mubr.bf16.gmra.mrb[0].mxu0 %v1351
        %v2393 = vpop.f32.mrb[0].mxu0
        %v2394 = vadd.f32 %v2113, %v2393
        %v2395 = vpop.f32.mrb[0].mxu0
        %v2396 = vpop.f32.mrb[0].mxu0
        %v2397 = vadd.f32 %v2116, %v2396
        %v2398 = vpop.f32.mrb[0].mxu0
        %2399 = vmatprep.mubr.bf16.mxu0 %v2300
        %2400 = vmatmul.mubr.bf16.gmra.mrb[0].mxu0 %v1354
        %v2401 = vpop.f32.mrb[0].mxu0
        %v2402 = vadd.f32 %v2121, %v2401
        %v2403 = vpop.f32.mrb[0].mxu0
        %v2404 = vpop.f32.mrb[0].mxu0
        %v2405 = vadd.f32 %v2124, %v2404
        %v2406 = vpop.f32.mrb[0].mxu0
        %2407 = vmatprep.mubr.bf16.mxu0 %v2303
        %2408 = vmatmul.mubr.bf16.gmra.mrb[0].mxu0 %v1357
        %v2409 = vpop.f32.mrb[0].mxu0
        %v2410 = vadd.f32 %v2129, %v2409
        %v2411 = vpop.f32.mrb[0].mxu0
        %v2412 = vpop.f32.mrb[0].mxu0
        %v2413 = vadd.f32 %v2132, %v2412
        %v2414 = vpop.f32.mrb[0].mxu0
        %2415 = vmatprep.mubr.bf16.mxu0 %v2306
        %2416 = vmatmul.mubr.bf16.gmra.mrb[0].mxu0 %v1360
        %v2417 = vpop.f32.mrb[0].mxu0
        %v2418 = vadd.f32 %v2137, %v2417
        %v2419 = vpop.f32.mrb[0].mxu0
        %v2420 = vpop.f32.mrb[0].mxu0
        %v2421 = vadd.f32 %v2140, %v2420
        %v2422 = vpop.f32.mrb[0].mxu0
        %2423 = vmatprep.mubr.bf16.mxu0 %v2309
        %2424 = vmatmul.mubr.bf16.gmra.mrb[0].mxu0 %v1363
        %v2425 = vpop.f32.mrb[0].mxu0
        %v2426 = vadd.f32 %v2145, %v2425
        %v2427 = vpop.f32.mrb[0].mxu0
        %v2428 = vpop.f32.mrb[0].mxu0
        %v2429 = vadd.f32 %v2148, %v2428
        %v2430 = vpop.f32.mrb[0].mxu0
        %2431 = vmatprep.mubr.bf16.mxu0 %v2312
        %2432 = vmatmul.mubr.bf16.gmra.mrb[0].mxu0 %v1366
        %v2433 = vpop.f32.mrb[0].mxu0
        %v2434 = vadd.f32 %v2153, %v2433
        %v2435 = vpop.f32.mrb[0].mxu0
        %v2436 = vpop.f32.mrb[0].mxu0
        %v2437 = vadd.f32 %v2156, %v2436
        %v2438 = vpop.f32.mrb[0].mxu0
        %2439 = vmatprep.mubr.bf16.mxu0 %v2315
        %2440 = vmatmul.mubr.bf16.gmra.mrb[0].mxu0 %v1369
        %v2441 = vpop.f32.mrb[0].mxu0
        %v2442 = vadd.f32 %v2161, %v2441
        %v2443 = vpop.f32.mrb[0].mxu0
        %v2444 = vpop.f32.mrb[0].mxu0
        %v2445 = vadd.f32 %v2164, %v2444
        %v2446 = vpop.f32.mrb[0].mxu0
        %2447 = vmatprep.mubr.bf16.mxu0 %v2318
        %2448 = vmatmul.mubr.bf16.gmra.mrb[0].mxu0 %v1372
        %v2449 = vpop.f32.mrb[0].mxu0
        %v2450 = vadd.f32 %v2169, %v2449
        %v2451 = vpop.f32.mrb[0].mxu0
        %v2452 = vpop.f32.mrb[0].mxu0
        %v2453 = vadd.f32 %v2172, %v2452
        %v2454 = vpop.f32.mrb[0].mxu0
        %2455 = vmatprep.mubr.bf16.mxu0 %v2321
        %2456 = vmatmul.mubr.bf16.gmra.mrb[0].mxu0 %v1375
        %v2457 = vpop.f32.mrb[0].mxu0
        %v2458 = vadd.f32 %v2177, %v2457
        %v2459 = vpop.f32.mrb[0].mxu0
        %v2460 = vpop.f32.mrb[0].mxu0
        %v2461 = vadd.f32 %v2180, %v2460
        %v2462 = vpop.f32.mrb[0].mxu0
        %2463 = vmatprep.mubr.bf16.mxu0 %v2324
        %2464 = vmatmul.mubr.bf16.gmra.mrb[0].mxu0 %v1378
        %v2465 = vpop.f32.mrb[0].mxu0
        %v2466 = vadd.f32 %v2185, %v2465
        %v2467 = vpop.f32.mrb[0].mxu0
        %v2468 = vpop.f32.mrb[0].mxu0
        %v2469 = vadd.f32 %v2188, %v2468
        %v2470 = vpop.f32.mrb[0].mxu0
        %2471 = vmatprep.mubr.bf16.mxu0 %v2327
        %2472 = vmatmul.mubr.bf16.gmra.mrb[0].mxu0 %v1381
        %v2473 = vpop.f32.mrb[0].mxu0
        %v2474 = vadd.f32 %v2193, %v2473
        %v2475 = vpop.f32.mrb[0].mxu0
        %v2476 = vpop.f32.mrb[0].mxu0
        %v2477 = vadd.f32 %v2196, %v2476
        %v2478 = vpop.f32.mrb[0].mxu0
        %2479 = vmatprep.mubr.bf16.mxu0 %v2330
        %2480 = vmatmul.mubr.bf16.gmra.mrb[0].mxu0 %v1384
        %v2481 = vpop.f32.mrb[0].mxu0
        %v2482 = vadd.f32 %v2201, %v2481
        %v2483 = vpop.f32.mrb[0].mxu0
        %v2484 = vpop.f32.mrb[0].mxu0
        %v2485 = vadd.f32 %v2204, %v2484
        %v2486 = vpop.f32.mrb[0].mxu0
        %2487 = vmatprep.mubr.bf16.mxu0 %v2333
        %2488 = vmatmul.mubr.bf16.gmra.mrb[0].mxu0 %v1387
        %v2489 = vpop.f32.mrb[0].mxu0
        %v2490 = vadd.f32 %v2209, %v2489
        %v2491 = vpop.f32.mrb[0].mxu0
        %v2492 = vpop.f32.mrb[0].mxu0
        %v2493 = vadd.f32 %v2212, %v2492
        %v2494 = vpop.f32.mrb[0].mxu0
        %2495 = vdwg.mxu0
        %s2496 = scalar_lea.vmem [#allocation2], 24
        %v2497 = vld [vmem:[%s2496] sm:$0xf]
        %v2498 = vld [vmem:[%s2496 + $0x4] sm:$0xf]
        %v2499 = vld [vmem:[%s2496 + $0x8] sm:$0x1]
        %v2500 = vld [vmem:[%s2496 + $0xc] sm:$0xf]
        %v2501 = vld [vmem:[%s2496 + $0x10] sm:$0xf]
        %v2502 = vld [vmem:[%s2496 + $0x14] sm:$0x1]
        %v2503 = vld [vmem:[%s2496 + $0x18] sm:$0xf]
        %v2504 = vld [vmem:[%s2496 + $0x1c] sm:$0xf]
        %v2505 = vld [vmem:[%s2496 + $0x20] sm:$0x1]
        %v2506 = vld [vmem:[%s2496 + $0x24] sm:$0xf]
        %v2507 = vld [vmem:[%s2496 + $0x28] sm:$0xf]
        %v2508 = vld [vmem:[%s2496 + $0x2c] sm:$0x1]
        %v2509 = vld [vmem:[%s2496 + $0x30] sm:$0xf]
        %v2510 = vld [vmem:[%s2496 + $0x34] sm:$0xf]
        %v2511 = vld [vmem:[%s2496 + $0x38] sm:$0x1]
        %v2512 = vld [vmem:[%s2496 + $0x3c] sm:$0xf]
        %v2513 = vld [vmem:[%s2496 + $0x40] sm:$0xf]
        %v2514 = vld [vmem:[%s2496 + $0x44] sm:$0x1]
        %v2515 = vld [vmem:[%s2496 + $0x48] sm:$0xf]
        %v2516 = vld [vmem:[%s2496 + $0x4c] sm:$0xf]
        %v2517 = vld [vmem:[%s2496 + $0x50] sm:$0x1]
        %v2518 = vld [vmem:[%s2496 + $0x54] sm:$0xf]
        %v2519 = vld [vmem:[%s2496 + $0x58] sm:$0xf]
        %v2520 = vld [vmem:[%s2496 + $0x5c] sm:$0x1]
        %v2521 = vld [vmem:[%s2496 + $0x60] sm:$0xf]
        %v2522 = vld [vmem:[%s2496 + $0x64] sm:$0xf]
        %v2523 = vld [vmem:[%s2496 + $0x68] sm:$0x1]
        %v2524 = vld [vmem:[%s2496 + $0x6c] sm:$0xf]
        %v2525 = vld [vmem:[%s2496 + $0x70] sm:$0xf]
        %v2526 = vld [vmem:[%s2496 + $0x74] sm:$0x1]
        %v2527 = vld [vmem:[%s2496 + $0x78] sm:$0xf]
        %v2528 = vld [vmem:[%s2496 + $0x7c] sm:$0xf]
        %v2529 = vld [vmem:[%s2496 + $0x80] sm:$0x1]
        %v2530 = vld [vmem:[%s2496 + $0x84] sm:$0xf]
        %v2531 = vld [vmem:[%s2496 + $0x88] sm:$0xf]
        %v2532 = vld [vmem:[%s2496 + $0x8c] sm:$0x1]
        %v2533 = vld [vmem:[%s2496 + $0x90] sm:$0xf]
        %v2534 = vld [vmem:[%s2496 + $0x94] sm:$0xf]
        %v2535 = vld [vmem:[%s2496 + $0x98] sm:$0x1]
        %v2536 = vld [vmem:[%s2496 + $0x9c] sm:$0xf]
        %v2537 = vld [vmem:[%s2496 + $0xa0] sm:$0xf]
        %v2538 = vld [vmem:[%s2496 + $0xa4] sm:$0x1]
        %v2539 = vld [vmem:[%s2496 + $0xa8] sm:$0xf]
        %v2540 = vld [vmem:[%s2496 + $0xac] sm:$0xf]
        %v2541 = vld [vmem:[%s2496 + $0xb0] sm:$0x1]
        %v2542 = vld [vmem:[%s2496 + $0xb4] sm:$0xf]
        %v2543 = vld [vmem:[%s2496 + $0xb8] sm:$0xf]
        %v2544 = vld [vmem:[%s2496 + $0xbc] sm:$0x1]
        %v2577 = vunpack.c.l.b16 %v2497
        %v2578 = vunpack.c.l.b16 %v2498
        %v2579 = vunpack.c.l.b16 %v2500
        %v2580 = vunpack.c.l.b16 %v2501
        %v2581 = vunpack.c.l.b16 %v2503
        %v2582 = vunpack.c.l.b16 %v2504
        %v2583 = vunpack.c.l.b16 %v2506
        %v2584 = vunpack.c.l.b16 %v2507
        %v2585 = vunpack.c.l.b16 %v2509
        %v2586 = vunpack.c.l.b16 %v2510
        %v2587 = vunpack.c.l.b16 %v2512
        %v2588 = vunpack.c.l.b16 %v2513
        %v2589 = vunpack.c.l.b16 %v2515
        %v2590 = vunpack.c.l.b16 %v2516
        %v2591 = vunpack.c.l.b16 %v2518
        %v2592 = vunpack.c.l.b16 %v2519
        %v2593 = vunpack.c.l.b16 %v2521
        %v2594 = vunpack.c.l.b16 %v2522
        %v2595 = vunpack.c.l.b16 %v2524
        %v2596 = vunpack.c.l.b16 %v2525
        %v2597 = vunpack.c.l.b16 %v2527
        %v2598 = vunpack.c.l.b16 %v2528
        %v2599 = vunpack.c.l.b16 %v2530
        %v2600 = vunpack.c.l.b16 %v2531
        %v2601 = vunpack.c.l.b16 %v2533
        %v2602 = vunpack.c.l.b16 %v2534
        %v2603 = vunpack.c.l.b16 %v2536
        %v2604 = vunpack.c.l.b16 %v2537
        %v2605 = vunpack.c.l.b16 %v2539
        %v2606 = vunpack.c.l.b16 %v2540
        %v2607 = vunpack.c.l.b16 %v2542
        %v2608 = vunpack.c.l.b16 %v2543
        %v2609 = vpack.c.b16 %v2578, %v2577
        %v2610 = vpack.c.b16 %v2580, %v2579
        %v2611 = vpack.c.b16 %v2582, %v2581
        %v2612 = vpack.c.b16 %v2584, %v2583
        %v2613 = vpack.c.b16 %v2586, %v2585
        %v2614 = vpack.c.b16 %v2588, %v2587
        %v2615 = vpack.c.b16 %v2590, %v2589
        %v2616 = vpack.c.b16 %v2592, %v2591
        %v2617 = vpack.c.b16 %v2594, %v2593
        %v2618 = vpack.c.b16 %v2596, %v2595
        %v2619 = vpack.c.b16 %v2598, %v2597
        %v2620 = vpack.c.b16 %v2600, %v2599
        %v2621 = vpack.c.b16 %v2602, %v2601
        %v2622 = vpack.c.b16 %v2604, %v2603
        %v2623 = vpack.c.b16 %v2606, %v2605
        %v2624 = vpack.c.b16 %v2608, %v2607
        %v2641 = vunpack.c.l.b16 %v2499
        %v2642 = vunpack.c.l.b16 %v2502
        %v2643 = vunpack.c.l.b16 %v2505
        %v2644 = vunpack.c.l.b16 %v2508
        %v2645 = vunpack.c.l.b16 %v2511
        %v2646 = vunpack.c.l.b16 %v2514
        %v2647 = vunpack.c.l.b16 %v2517
        %v2648 = vunpack.c.l.b16 %v2520
        %v2649 = vunpack.c.l.b16 %v2523
        %v2650 = vunpack.c.l.b16 %v2526
        %v2651 = vunpack.c.l.b16 %v2529
        %v2652 = vunpack.c.l.b16 %v2532
        %v2653 = vunpack.c.l.b16 %v2535
        %v2654 = vunpack.c.l.b16 %v2538
        %v2655 = vunpack.c.l.b16 %v2541
        %v2656 = vunpack.c.l.b16 %v2544
        %v2657 = vpack.c.b16 %v2641, %v2641
        %v2658 = vpack.c.b16 %v2642, %v2642
        %v2659 = vpack.c.b16 %v2643, %v2643
        %v2660 = vpack.c.b16 %v2644, %v2644
        %v2661 = vpack.c.b16 %v2645, %v2645
        %v2662 = vpack.c.b16 %v2646, %v2646
        %v2663 = vpack.c.b16 %v2647, %v2647
        %v2664 = vpack.c.b16 %v2648, %v2648
        %v2665 = vpack.c.b16 %v2649, %v2649
        %v2666 = vpack.c.b16 %v2650, %v2650
        %v2667 = vpack.c.b16 %v2651, %v2651
        %v2668 = vpack.c.b16 %v2652, %v2652
        %v2669 = vpack.c.b16 %v2653, %v2653
        %v2670 = vpack.c.b16 %v2654, %v2654
        %v2671 = vpack.c.b16 %v2655, %v2655
        %v2672 = vpack.c.b16 %v2656, %v2656
        %v2674 = vshrl.u32 %v2609, 16
        %v2676 = vshll.u32 %v2609, 16
        %v2678 = vrot.slane %v2676, 1
        %v2679 = vor.u32 %v2674, %v2678
        %v2681 = vshll.u32 %v2657, 16
        %v2683 = vrot.slane %v2681, 1
        %v2684 = vsel %vm1066, %v2679, %v2683
        %v2686 = vshrl.u32 %v2610, 16
        %v2688 = vshll.u32 %v2610, 16
        %v2690 = vrot.slane %v2688, 1
        %v2691 = vor.u32 %v2686, %v2690
        %v2693 = vshll.u32 %v2658, 16
        %v2695 = vrot.slane %v2693, 1
        %v2696 = vsel %vm1066, %v2691, %v2695
        %v2698 = vshrl.u32 %v2611, 16
        %v2700 = vshll.u32 %v2611, 16
        %v2702 = vrot.slane %v2700, 1
        %v2703 = vor.u32 %v2698, %v2702
        %v2705 = vshll.u32 %v2659, 16
        %v2707 = vrot.slane %v2705, 1
        %v2708 = vsel %vm1066, %v2703, %v2707
        %v2710 = vshrl.u32 %v2612, 16
        %v2712 = vshll.u32 %v2612, 16
        %v2714 = vrot.slane %v2712, 1
        %v2715 = vor.u32 %v2710, %v2714
        %v2717 = vshll.u32 %v2660, 16
        %v2719 = vrot.slane %v2717, 1
        %v2720 = vsel %vm1066, %v2715, %v2719
        %v2722 = vshrl.u32 %v2613, 16
        %v2724 = vshll.u32 %v2613, 16
        %v2726 = vrot.slane %v2724, 1
        %v2727 = vor.u32 %v2722, %v2726
        %v2729 = vshll.u32 %v2661, 16
        %v2731 = vrot.slane %v2729, 1
        %v2732 = vsel %vm1066, %v2727, %v2731
        %v2734 = vshrl.u32 %v2614, 16
        %v2736 = vshll.u32 %v2614, 16
        %v2738 = vrot.slane %v2736, 1
        %v2739 = vor.u32 %v2734, %v2738
        %v2741 = vshll.u32 %v2662, 16
        %v2743 = vrot.slane %v2741, 1
        %v2744 = vsel %vm1066, %v2739, %v2743
        %v2746 = vshrl.u32 %v2615, 16
        %v2748 = vshll.u32 %v2615, 16
        %v2750 = vrot.slane %v2748, 1
        %v2751 = vor.u32 %v2746, %v2750
        %v2753 = vshll.u32 %v2663, 16
        %v2755 = vrot.slane %v2753, 1
        %v2756 = vsel %vm1066, %v2751, %v2755
        %v2758 = vshrl.u32 %v2616, 16
        %v2760 = vshll.u32 %v2616, 16
        %v2762 = vrot.slane %v2760, 1
        %v2763 = vor.u32 %v2758, %v2762
        %v2765 = vshll.u32 %v2664, 16
        %v2767 = vrot.slane %v2765, 1
        %v2768 = vsel %vm1066, %v2763, %v2767
        %v2770 = vshrl.u32 %v2617, 16
        %v2772 = vshll.u32 %v2617, 16
        %v2774 = vrot.slane %v2772, 1
        %v2775 = vor.u32 %v2770, %v2774
        %v2777 = vshll.u32 %v2665, 16
        %v2779 = vrot.slane %v2777, 1
        %v2780 = vsel %vm1066, %v2775, %v2779
        %v2782 = vshrl.u32 %v2618, 16
        %v2784 = vshll.u32 %v2618, 16
        %v2786 = vrot.slane %v2784, 1
        %v2787 = vor.u32 %v2782, %v2786
        %v2789 = vshll.u32 %v2666, 16
        %v2791 = vrot.slane %v2789, 1
        %v2792 = vsel %vm1066, %v2787, %v2791
        %v2794 = vshrl.u32 %v2619, 16
        %v2796 = vshll.u32 %v2619, 16
        %v2798 = vrot.slane %v2796, 1
        %v2799 = vor.u32 %v2794, %v2798
        %v2801 = vshll.u32 %v2667, 16
        %v2803 = vrot.slane %v2801, 1
        %v2804 = vsel %vm1066, %v2799, %v2803
        %v2806 = vshrl.u32 %v2620, 16
        %v2808 = vshll.u32 %v2620, 16
        %v2810 = vrot.slane %v2808, 1
        %v2811 = vor.u32 %v2806, %v2810
        %v2813 = vshll.u32 %v2668, 16
        %v2815 = vrot.slane %v2813, 1
        %v2816 = vsel %vm1066, %v2811, %v2815
        %v2818 = vshrl.u32 %v2621, 16
        %v2820 = vshll.u32 %v2621, 16
        %v2822 = vrot.slane %v2820, 1
        %v2823 = vor.u32 %v2818, %v2822
        %v2825 = vshll.u32 %v2669, 16
        %v2827 = vrot.slane %v2825, 1
        %v2828 = vsel %vm1066, %v2823, %v2827
        %v2830 = vshrl.u32 %v2622, 16
        %v2832 = vshll.u32 %v2622, 16
        %v2834 = vrot.slane %v2832, 1
        %v2835 = vor.u32 %v2830, %v2834
        %v2837 = vshll.u32 %v2670, 16
        %v2839 = vrot.slane %v2837, 1
        %v2840 = vsel %vm1066, %v2835, %v2839
        %v2842 = vshrl.u32 %v2623, 16
        %v2844 = vshll.u32 %v2623, 16
        %v2846 = vrot.slane %v2844, 1
        %v2847 = vor.u32 %v2842, %v2846
        %v2849 = vshll.u32 %v2671, 16
        %v2851 = vrot.slane %v2849, 1
        %v2852 = vsel %vm1066, %v2847, %v2851
        %v2854 = vshrl.u32 %v2624, 16
        %v2856 = vshll.u32 %v2624, 16
        %v2858 = vrot.slane %v2856, 1
        %v2859 = vor.u32 %v2854, %v2858
        %v2861 = vshll.u32 %v2672, 16
        %v2863 = vrot.slane %v2861, 1
        %v2864 = vsel %vm1066, %v2859, %v2863
        %2865 = vrot.lane.b32.xlu0 %v2684, 64
        %v2866 = vpop.permute.xlu0 %2865
        %2867 = vrot.lane.b32.xlu0 %v2696, 64
        %v2868 = vpop.permute.xlu0 %2867
        %2869 = vrot.lane.b32.xlu0 %v2708, 64
        %v2870 = vpop.permute.xlu0 %2869
        %2871 = vrot.lane.b32.xlu0 %v2720, 64
        %v2872 = vpop.permute.xlu0 %2871
        %2873 = vrot.lane.b32.xlu0 %v2732, 64
        %v2874 = vpop.permute.xlu0 %2873
        %2875 = vrot.lane.b32.xlu0 %v2744, 64
        %v2876 = vpop.permute.xlu0 %2875
        %2877 = vrot.lane.b32.xlu0 %v2756, 64
        %v2878 = vpop.permute.xlu0 %2877
        %2879 = vrot.lane.b32.xlu0 %v2768, 64
        %v2880 = vpop.permute.xlu0 %2879
        %2881 = vrot.lane.b32.xlu0 %v2780, 64
        %v2882 = vpop.permute.xlu0 %2881
        %2883 = vrot.lane.b32.xlu0 %v2792, 64
        %v2884 = vpop.permute.xlu0 %2883
        %2885 = vrot.lane.b32.xlu0 %v2804, 64
        %v2886 = vpop.permute.xlu0 %2885
        %2887 = vrot.lane.b32.xlu0 %v2816, 64
        %v2888 = vpop.permute.xlu0 %2887
        %2889 = vrot.lane.b32.xlu0 %v2828, 64
        %v2890 = vpop.permute.xlu0 %2889
        %2891 = vrot.lane.b32.xlu0 %v2840, 64
        %v2892 = vpop.permute.xlu0 %2891
        %2893 = vrot.lane.b32.xlu0 %v2852, 64
        %v2894 = vpop.permute.xlu0 %2893
        %2895 = vrot.lane.b32.xlu0 %v2864, 64
        %v2896 = vpop.permute.xlu0 %2895
        %v2897 = vrot.slane %v2609, 1
        %v2898 = vrot.slane %v2657, 1
        %v2899 = vsel %vm1291, %v2897, %v2898
        %v2900 = vrot.slane %v2610, 1
        %v2901 = vrot.slane %v2658, 1
        %v2902 = vsel %vm1291, %v2900, %v2901
        %v2903 = vrot.slane %v2611, 1
        %v2904 = vrot.slane %v2659, 1
        %v2905 = vsel %vm1291, %v2903, %v2904
        %v2906 = vrot.slane %v2612, 1
        %v2907 = vrot.slane %v2660, 1
        %v2908 = vsel %vm1291, %v2906, %v2907
        %v2909 = vrot.slane %v2613, 1
        %v2910 = vrot.slane %v2661, 1
        %v2911 = vsel %vm1291, %v2909, %v2910
        %v2912 = vrot.slane %v2614, 1
        %v2913 = vrot.slane %v2662, 1
        %v2914 = vsel %vm1291, %v2912, %v2913
        %v2915 = vrot.slane %v2615, 1
        %v2916 = vrot.slane %v2663, 1
        %v2917 = vsel %vm1291, %v2915, %v2916
        %v2918 = vrot.slane %v2616, 1
        %v2919 = vrot.slane %v2664, 1
        %v2920 = vsel %vm1291, %v2918, %v2919
        %v2921 = vrot.slane %v2617, 1
        %v2922 = vrot.slane %v2665, 1
        %v2923 = vsel %vm1291, %v2921, %v2922
        %v2924 = vrot.slane %v2618, 1
        %v2925 = vrot.slane %v2666, 1
        %v2926 = vsel %vm1291, %v2924, %v2925
        %v2927 = vrot.slane %v2619, 1
        %v2928 = vrot.slane %v2667, 1
        %v2929 = vsel %vm1291, %v2927, %v2928
        %v2930 = vrot.slane %v2620, 1
        %v2931 = vrot.slane %v2668, 1
        %v2932 = vsel %vm1291, %v2930, %v2931
        %v2933 = vrot.slane %v2621, 1
        %v2934 = vrot.slane %v2669, 1
        %v2935 = vsel %vm1291, %v2933, %v2934
        %v2936 = vrot.slane %v2622, 1
        %v2937 = vrot.slane %v2670, 1
        %v2938 = vsel %vm1291, %v2936, %v2937
        %v2939 = vrot.slane %v2623, 1
        %v2940 = vrot.slane %v2671, 1
        %v2941 = vsel %vm1291, %v2939, %v2940
        %v2942 = vrot.slane %v2624, 1
        %v2943 = vrot.slane %v2672, 1
        %v2944 = vsel %vm1291, %v2942, %v2943
        %v2946 = vsel %vm1340, %v2609, %v2866
        %v2949 = vsel %vm1340, %v2610, %v2868
        %v2952 = vsel %vm1340, %v2611, %v2870
        %v2955 = vsel %vm1340, %v2612, %v2872
        %v2958 = vsel %vm1340, %v2613, %v2874
        %v2961 = vsel %vm1340, %v2614, %v2876
        %v2964 = vsel %vm1340, %v2615, %v2878
        %v2967 = vsel %vm1340, %v2616, %v2880
        %v2970 = vsel %vm1340, %v2617, %v2882
        %v2973 = vsel %vm1340, %v2618, %v2884
        %v2976 = vsel %vm1340, %v2619, %v2886
        %v2979 = vsel %vm1340, %v2620, %v2888
        %v2982 = vsel %vm1340, %v2621, %v2890
        %v2985 = vsel %vm1340, %v2622, %v2892
        %v2988 = vsel %vm1340, %v2623, %v2894
        %v2991 = vsel %vm1340, %v2624, %v2896
        %s2993 = scalar_lea.vmem %s1, 192
        %v2994 = vld [vmem:[%s2993] sm:$0xf]
        %v2995 = vld [vmem:[%s2993 + $0x4] sm:$0xf]
        %v2996 = vld [vmem:[%s2993 + $0x8] sm:$0xf]
        %v2997 = vld [vmem:[%s2993 + $0xc] sm:$0xf]
        %v2998 = vld [vmem:[%s2993 + $0x10] sm:$0xf]
        %v2999 = vld [vmem:[%s2993 + $0x14] sm:$0xf]
        %v3000 = vld [vmem:[%s2993 + $0x18] sm:$0xf]
        %v3001 = vld [vmem:[%s2993 + $0x1c] sm:$0xf]
        %v3002 = vld [vmem:[%s2993 + $0x20] sm:$0xf]
        %v3003 = vld [vmem:[%s2993 + $0x24] sm:$0xf]
        %v3004 = vld [vmem:[%s2993 + $0x28] sm:$0xf]
        %v3005 = vld [vmem:[%s2993 + $0x2c] sm:$0xf]
        %v3006 = vld [vmem:[%s2993 + $0x30] sm:$0xf]
        %v3007 = vld [vmem:[%s2993 + $0x34] sm:$0xf]
        %v3008 = vld [vmem:[%s2993 + $0x38] sm:$0xf]
        %v3009 = vld [vmem:[%s2993 + $0x3c] sm:$0xf]
        %v3010 = vld [vmem:[%s2993 + $0x40] sm:$0xf]
        %v3011 = vld [vmem:[%s2993 + $0x44] sm:$0xf]
        %v3012 = vld [vmem:[%s2993 + $0x48] sm:$0xf]
        %v3013 = vld [vmem:[%s2993 + $0x4c] sm:$0xf]
        %v3014 = vld [vmem:[%s2993 + $0x50] sm:$0xf]
        %v3015 = vld [vmem:[%s2993 + $0x54] sm:$0xf]
        %v3016 = vld [vmem:[%s2993 + $0x58] sm:$0xf]
        %v3017 = vld [vmem:[%s2993 + $0x5c] sm:$0xf]
        %v3042 = vunpack.c.l.b16 %v2994
        %v3043 = vunpack.c.l.b16 %v2995
        %v3044 = vunpack.c.l.b16 %v2996
        %v3045 = vunpack.c.l.b16 %v2997
        %v3046 = vunpack.c.l.b16 %v2998
        %v3047 = vunpack.c.l.b16 %v2999
        %v3048 = vunpack.c.l.b16 %v3000
        %v3049 = vunpack.c.l.b16 %v3001
        %v3050 = vunpack.c.l.b16 %v3002
        %v3051 = vunpack.c.l.b16 %v3003
        %v3052 = vunpack.c.l.b16 %v3004
        %v3053 = vunpack.c.l.b16 %v3005
        %v3054 = vunpack.c.l.b16 %v3006
        %v3055 = vunpack.c.l.b16 %v3007
        %v3056 = vunpack.c.l.b16 %v3008
        %v3057 = vunpack.c.l.b16 %v3009
        %v3058 = vunpack.c.l.b16 %v3010
        %v3059 = vunpack.c.l.b16 %v3011
        %v3060 = vunpack.c.l.b16 %v3012
        %v3061 = vunpack.c.l.b16 %v3013
        %v3062 = vunpack.c.l.b16 %v3014
        %v3063 = vunpack.c.l.b16 %v3015
        %v3064 = vunpack.c.l.b16 %v3016
        %v3065 = vunpack.c.l.b16 %v3017
        %v3066 = vpack.c.b16 %v3043, %v3042
        %v3067 = vpack.c.b16 %v3045, %v3044
        %v3068 = vpack.c.b16 %v3047, %v3046
        %v3069 = vpack.c.b16 %v3049, %v3048
        %v3070 = vpack.c.b16 %v3051, %v3050
        %v3071 = vpack.c.b16 %v3053, %v3052
        %v3072 = vpack.c.b16 %v3055, %v3054
        %v3073 = vpack.c.b16 %v3057, %v3056
        %v3074 = vpack.c.b16 %v3059, %v3058
        %v3075 = vpack.c.b16 %v3061, %v3060
        %v3076 = vpack.c.b16 %v3063, %v3062
        %v3077 = vpack.c.b16 %v3065, %v3064
        %v3091 = vsel %vm1340, %v2899, 0
        %v3094 = vsel %vm1340, %v2902, 0
        %v3097 = vsel %vm1340, %v2905, 0
        %v3100 = vsel %vm1340, %v2908, 0
        %v3103 = vsel %vm1340, %v2911, 0
        %v3106 = vsel %vm1340, %v2914, 0
        %v3109 = vsel %vm1340, %v2917, 0
        %v3112 = vsel %vm1340, %v2920, 0
        %v3115 = vsel %vm1340, %v2923, 0
        %v3118 = vsel %vm1340, %v2926, 0
        %v3121 = vsel %vm1340, %v2929, 0
        %v3124 = vsel %vm1340, %v2932, 0
        %v3127 = vsel %vm1340, %v2935, 0
        %v3130 = vsel %vm1340, %v2938, 0
        %v3133 = vsel %vm1340, %v2941, 0
        %v3136 = vsel %vm1340, %v2944, 0
        %3138 = vmatprep.subr.bf16.mxu0 0
        %3139 = vmatpush1.bf16.msra.mxu0 %v3066
        %3140 = vmatprep.subr.bf16.mxu0 0
        %3141 = vmatpush1.bf16.msra.mxu0 %v3067
        %3142 = vmatprep.subr.bf16.mxu0 0
        %3143 = vmatpush1.bf16.msra.mxu0 %v3068
        %3144 = vmatprep.subr.bf16.mxu0 0
        %3145 = vmatpush1.bf16.msra.mxu0 %v3069
        %3146 = vmatprep.subr.bf16.mxu0 0
        %3147 = vmatpush1.bf16.msra.mxu0 %v3070
        %3148 = vmatprep.subr.bf16.mxu0 0
        %3149 = vmatpush1.bf16.msra.mxu0 %v3071
        %3150 = vmatprep.subr.bf16.mxu0 0
        %3151 = vmatpush1.bf16.msra.mxu0 %v3072
        %3152 = vmatprep.subr.bf16.mxu0 0
        %3153 = vmatpush1.bf16.msra.mxu0 %v3073
        %3154 = vmatprep.subr.bf16.mxu0 0
        %3155 = vmatpush1.bf16.msra.mxu0 %v3074
        %3156 = vmatprep.subr.bf16.mxu0 0
        %3157 = vmatpush1.bf16.msra.mxu0 %v3075
        %3158 = vmatprep.subr.bf16.mxu0 0
        %3159 = vmatpush1.bf16.msra.mxu0 %v3076
        %3160 = vmatprep.subr.bf16.mxu0 0
        %3161 = vmatpush1.bf16.msra.mxu0 %v3077
        %3162 = vmatprep.subr.bf16.mxu0 0
        %3163 = vmatpush1.bf16.msra.mxu0 0
        %3164 = vmatprep.subr.bf16.mxu0 0
        %3165 = vmatpush1.bf16.msra.mxu0 0
        %3166 = vmatprep.subr.bf16.mxu0 0
        %3167 = vmatpush1.bf16.msra.mxu0 0
        %3168 = vmatprep.subr.bf16.mxu0 0
        %3169 = vmatpush1.bf16.msra.mxu0 0
        %3170 = vmatprep.mubr.bf16.mxu0 %v3091
        %3171 = vmatmul.mubr.bf16.gmra.mrb[0].mxu0 %v2946
        %v3172 = vpop.f32.mrb[0].mxu0
        %v3173 = vadd.f32 0.0, %v3172
        %v3174 = vpop.f32.mrb[0].mxu0
        %v3175 = vpop.f32.mrb[0].mxu0
        %v3176 = vadd.f32 0.0, %v3175
        %v3177 = vpop.f32.mrb[0].mxu0
        %3178 = vmatprep.mubr.bf16.mxu0 %v3094
        %3179 = vmatmul.mubr.bf16.gmra.mrb[0].mxu0 %v2949
        %v3180 = vpop.f32.mrb[0].mxu0
        %v3181 = vadd.f32 0.0, %v3180
        %v3182 = vpop.f32.mrb[0].mxu0
        %v3183 = vpop.f32.mrb[0].mxu0
        %v3184 = vadd.f32 0.0, %v3183
        %v3185 = vpop.f32.mrb[0].mxu0
        %3186 = vmatprep.mubr.bf16.mxu0 %v3097
        %3187 = vmatmul.mubr.bf16.gmra.mrb[0].mxu0 %v2952
        %v3188 = vpop.f32.mrb[0].mxu0
        %v3189 = vadd.f32 0.0, %v3188
        %v3190 = vpop.f32.mrb[0].mxu0
        %v3191 = vpop.f32.mrb[0].mxu0
        %v3192 = vadd.f32 0.0, %v3191
        %v3193 = vpop.f32.mrb[0].mxu0
        %3194 = vmatprep.mubr.bf16.mxu0 %v3100
        %3195 = vmatmul.mubr.bf16.gmra.mrb[0].mxu0 %v2955
        %v3196 = vpop.f32.mrb[0].mxu0
        %v3197 = vadd.f32 0.0, %v3196
        %v3198 = vpop.f32.mrb[0].mxu0
        %v3199 = vpop.f32.mrb[0].mxu0
        %v3200 = vadd.f32 0.0, %v3199
        %v3201 = vpop.f32.mrb[0].mxu0
        %3202 = vmatprep.mubr.bf16.mxu0 %v3103
        %3203 = vmatmul.mubr.bf16.gmra.mrb[0].mxu0 %v2958
        %v3204 = vpop.f32.mrb[0].mxu0
        %v3205 = vadd.f32 0.0, %v3204
        %v3206 = vpop.f32.mrb[0].mxu0
        %v3207 = vpop.f32.mrb[0].mxu0
        %v3208 = vadd.f32 0.0, %v3207
        %v3209 = vpop.f32.mrb[0].mxu0
        %3210 = vmatprep.mubr.bf16.mxu0 %v3106
        %3211 = vmatmul.mubr.bf16.gmra.mrb[0].mxu0 %v2961
        %v3212 = vpop.f32.mrb[0].mxu0
        %v3213 = vadd.f32 0.0, %v3212
        %v3214 = vpop.f32.mrb[0].mxu0
        %v3215 = vpop.f32.mrb[0].mxu0
        %v3216 = vadd.f32 0.0, %v3215
        %v3217 = vpop.f32.mrb[0].mxu0
        %3218 = vmatprep.mubr.bf16.mxu0 %v3109
        %3219 = vmatmul.mubr.bf16.gmra.mrb[0].mxu0 %v2964
        %v3220 = vpop.f32.mrb[0].mxu0
        %v3221 = vadd.f32 0.0, %v3220
        %v3222 = vpop.f32.mrb[0].mxu0
        %v3223 = vpop.f32.mrb[0].mxu0
        %v3224 = vadd.f32 0.0, %v3223
        %v3225 = vpop.f32.mrb[0].mxu0
        %3226 = vmatprep.mubr.bf16.mxu0 %v3112
        %3227 = vmatmul.mubr.bf16.gmra.mrb[0].mxu0 %v2967
        %v3228 = vpop.f32.mrb[0].mxu0
        %v3229 = vadd.f32 0.0, %v3228
        %v3230 = vpop.f32.mrb[0].mxu0
        %v3231 = vpop.f32.mrb[0].mxu0
        %v3232 = vadd.f32 0.0, %v3231
        %v3233 = vpop.f32.mrb[0].mxu0
        %3234 = vmatprep.mubr.bf16.mxu0 %v3115
        %3235 = vmatmul.mubr.bf16.gmra.mrb[0].mxu0 %v2970
        %v3236 = vpop.f32.mrb[0].mxu0
        %v3237 = vadd.f32 0.0, %v3236
        %v3238 = vpop.f32.mrb[0].mxu0
        %v3239 = vpop.f32.mrb[0].mxu0
        %v3240 = vadd.f32 0.0, %v3239
        %v3241 = vpop.f32.mrb[0].mxu0
        %3242 = vmatprep.mubr.bf16.mxu0 %v3118
        %3243 = vmatmul.mubr.bf16.gmra.mrb[0].mxu0 %v2973
        %v3244 = vpop.f32.mrb[0].mxu0
        %v3245 = vadd.f32 0.0, %v3244
        %v3246 = vpop.f32.mrb[0].mxu0
        %v3247 = vpop.f32.mrb[0].mxu0
        %v3248 = vadd.f32 0.0, %v3247
        %v3249 = vpop.f32.mrb[0].mxu0
        %3250 = vmatprep.mubr.bf16.mxu0 %v3121
        %3251 = vmatmul.mubr.bf16.gmra.mrb[0].mxu0 %v2976
        %v3252 = vpop.f32.mrb[0].mxu0
        %v3253 = vadd.f32 0.0, %v3252
        %v3254 = vpop.f32.mrb[0].mxu0
        %v3255 = vpop.f32.mrb[0].mxu0
        %v3256 = vadd.f32 0.0, %v3255
        %v3257 = vpop.f32.mrb[0].mxu0
        %3258 = vmatprep.mubr.bf16.mxu0 %v3124
        %3259 = vmatmul.mubr.bf16.gmra.mrb[0].mxu0 %v2979
        %v3260 = vpop.f32.mrb[0].mxu0
        %v3261 = vadd.f32 0.0, %v3260
        %v3262 = vpop.f32.mrb[0].mxu0
        %v3263 = vpop.f32.mrb[0].mxu0
        %v3264 = vadd.f32 0.0, %v3263
        %v3265 = vpop.f32.mrb[0].mxu0
        %3266 = vmatprep.mubr.bf16.mxu0 %v3127
        %3267 = vmatmul.mubr.bf16.gmra.mrb[0].mxu0 %v2982
        %v3268 = vpop.f32.mrb[0].mxu0
        %v3269 = vadd.f32 0.0, %v3268
        %v3270 = vpop.f32.mrb[0].mxu0
        %v3271 = vpop.f32.mrb[0].mxu0
        %v3272 = vadd.f32 0.0, %v3271
        %v3273 = vpop.f32.mrb[0].mxu0
        %3274 = vmatprep.mubr.bf16.mxu0 %v3130
        %3275 = vmatmul.mubr.bf16.gmra.mrb[0].mxu0 %v2985
        %v3276 = vpop.f32.mrb[0].mxu0
        %v3277 = vadd.f32 0.0, %v3276
        %v3278 = vpop.f32.mrb[0].mxu0
        %v3279 = vpop.f32.mrb[0].mxu0
        %v3280 = vadd.f32 0.0, %v3279
        %v3281 = vpop.f32.mrb[0].mxu0
        %3282 = vmatprep.mubr.bf16.mxu0 %v3133
        %3283 = vmatmul.mubr.bf16.gmra.mrb[0].mxu0 %v2988
        %v3284 = vpop.f32.mrb[0].mxu0
        %v3285 = vadd.f32 0.0, %v3284
        %v3286 = vpop.f32.mrb[0].mxu0
        %v3287 = vpop.f32.mrb[0].mxu0
        %v3288 = vadd.f32 0.0, %v3287
        %v3289 = vpop.f32.mrb[0].mxu0
        %3290 = vmatprep.mubr.bf16.mxu0 %v3136
        %3291 = vmatmul.mubr.bf16.gmra.mrb[0].mxu0 %v2991
        %v3292 = vpop.f32.mrb[0].mxu0
        %v3293 = vadd.f32 0.0, %v3292
        %v3294 = vpop.f32.mrb[0].mxu0
        %v3295 = vpop.f32.mrb[0].mxu0
        %v3296 = vadd.f32 0.0, %v3295
        %v3297 = vpop.f32.mrb[0].mxu0
        %3298 = vdwg.mxu0
        %v3299 = vadd.f32 %v2370, %v3173
        %v3300 = vadd.f32 %v2373, %v3176
        %v3301 = vadd.f32 %v2378, %v3181
        %v3302 = vadd.f32 %v2381, %v3184
        %v3303 = vadd.f32 %v2386, %v3189
        %v3304 = vadd.f32 %v2389, %v3192
        %v3305 = vadd.f32 %v2394, %v3197
        %v3306 = vadd.f32 %v2397, %v3200
        %v3307 = vadd.f32 %v2402, %v3205
        %v3308 = vadd.f32 %v2405, %v3208
        %v3309 = vadd.f32 %v2410, %v3213
        %v3310 = vadd.f32 %v2413, %v3216
        %v3311 = vadd.f32 %v2418, %v3221
        %v3312 = vadd.f32 %v2421, %v3224
        %v3313 = vadd.f32 %v2426, %v3229
        %v3314 = vadd.f32 %v2429, %v3232
        %v3315 = vadd.f32 %v2434, %v3237
        %v3316 = vadd.f32 %v2437, %v3240
        %v3317 = vadd.f32 %v2442, %v3245
        %v3318 = vadd.f32 %v2445, %v3248
        %v3319 = vadd.f32 %v2450, %v3253
        %v3320 = vadd.f32 %v2453, %v3256
        %v3321 = vadd.f32 %v2458, %v3261
        %v3322 = vadd.f32 %v2461, %v3264
        %v3323 = vadd.f32 %v2466, %v3269
        %v3324 = vadd.f32 %v2469, %v3272
        %v3325 = vadd.f32 %v2474, %v3277
        %v3326 = vadd.f32 %v2477, %v3280
        %v3327 = vadd.f32 %v2482, %v3285
        %v3328 = vadd.f32 %v2485, %v3288
        %v3329 = vadd.f32 %v2490, %v3293
        %v3330 = vadd.f32 %v2493, %v3296
        %v3331 = vld [vmem:[%s2] sm:$0x1]
        %v3333 = vlaneseq
        %v3334 = vshrl.u32 %v3333, 7
        %v3335 = vsub.s32 0, %v3334
        %v3336 = vrot.slane %v3331, %v3335
        %v3338 = vadd.f32 %v3299, %v3336
        %v3339 = vadd.f32 %v3300, %v3336
        %v3340 = vadd.f32 %v3301, %v3336
        %v3341 = vadd.f32 %v3302, %v3336
        %v3342 = vadd.f32 %v3303, %v3336
        %v3343 = vadd.f32 %v3304, %v3336
        %v3344 = vadd.f32 %v3305, %v3336
        %v3345 = vadd.f32 %v3306, %v3336
        %v3346 = vadd.f32 %v3307, %v3336
        %v3347 = vadd.f32 %v3308, %v3336
        %v3348 = vadd.f32 %v3309, %v3336
        %v3349 = vadd.f32 %v3310, %v3336
        %v3350 = vadd.f32 %v3311, %v3336
        %v3351 = vadd.f32 %v3312, %v3336
        %v3352 = vadd.f32 %v3313, %v3336
        %v3353 = vadd.f32 %v3314, %v3336
        %v3354 = vadd.f32 %v3315, %v3336
        %v3355 = vadd.f32 %v3316, %v3336
        %v3356 = vadd.f32 %v3317, %v3336
        %v3357 = vadd.f32 %v3318, %v3336
        %v3358 = vadd.f32 %v3319, %v3336
        %v3359 = vadd.f32 %v3320, %v3336
        %v3360 = vadd.f32 %v3321, %v3336
        %v3361 = vadd.f32 %v3322, %v3336
        %v3362 = vadd.f32 %v3323, %v3336
        %v3363 = vadd.f32 %v3324, %v3336
        %v3364 = vadd.f32 %v3325, %v3336
        %v3365 = vadd.f32 %v3326, %v3336
        %v3366 = vadd.f32 %v3327, %v3336
        %v3367 = vadd.f32 %v3328, %v3336
        %v3368 = vadd.f32 %v3329, %v3336
        %v3369 = vadd.f32 %v3330, %v3336
        %vm3370 = vcmp.ge.f32.partialorder %v3338, 0.0
        %vm3371 = vcmp.ge.f32.partialorder %v3339, 0.0
        %vm3372 = vcmp.ge.f32.partialorder %v3340, 0.0
        %vm3373 = vcmp.ge.f32.partialorder %v3341, 0.0
        %vm3374 = vcmp.ge.f32.partialorder %v3342, 0.0
        %vm3375 = vcmp.ge.f32.partialorder %v3343, 0.0
        %vm3376 = vcmp.ge.f32.partialorder %v3344, 0.0
        %vm3377 = vcmp.ge.f32.partialorder %v3345, 0.0
        %vm3378 = vcmp.ge.f32.partialorder %v3346, 0.0
        %vm3379 = vcmp.ge.f32.partialorder %v3347, 0.0
        %vm3380 = vcmp.ge.f32.partialorder %v3348, 0.0
        %vm3381 = vcmp.ge.f32.partialorder %v3349, 0.0
        %vm3382 = vcmp.ge.f32.partialorder %v3350, 0.0
        %vm3383 = vcmp.ge.f32.partialorder %v3351, 0.0
        %vm3384 = vcmp.ge.f32.partialorder %v3352, 0.0
        %vm3385 = vcmp.ge.f32.partialorder %v3353, 0.0
        %vm3386 = vcmp.ge.f32.partialorder %v3354, 0.0
        %vm3387 = vcmp.ge.f32.partialorder %v3355, 0.0
        %vm3388 = vcmp.ge.f32.partialorder %v3356, 0.0
        %vm3389 = vcmp.ge.f32.partialorder %v3357, 0.0
        %vm3390 = vcmp.ge.f32.partialorder %v3358, 0.0
        %vm3391 = vcmp.ge.f32.partialorder %v3359, 0.0
        %vm3392 = vcmp.ge.f32.partialorder %v3360, 0.0
        %vm3393 = vcmp.ge.f32.partialorder %v3361, 0.0
        %vm3394 = vcmp.ge.f32.partialorder %v3362, 0.0
        %vm3395 = vcmp.ge.f32.partialorder %v3363, 0.0
        %vm3396 = vcmp.ge.f32.partialorder %v3364, 0.0
        %vm3397 = vcmp.ge.f32.partialorder %v3365, 0.0
        %vm3398 = vcmp.ge.f32.partialorder %v3366, 0.0
        %vm3399 = vcmp.ge.f32.partialorder %v3367, 0.0
        %vm3400 = vcmp.ge.f32.partialorder %v3368, 0.0
        %vm3401 = vcmp.ge.f32.partialorder %v3369, 0.0
        %v3402 = vmul.f32 %v3338, 0.1
        %v3403 = vmul.f32 %v3339, 0.1
        %v3404 = vmul.f32 %v3340, 0.1
        %v3405 = vmul.f32 %v3341, 0.1
        %v3406 = vmul.f32 %v3342, 0.1
        %v3407 = vmul.f32 %v3343, 0.1
        %v3408 = vmul.f32 %v3344, 0.1
        %v3409 = vmul.f32 %v3345, 0.1
        %v3410 = vmul.f32 %v3346, 0.1
        %v3411 = vmul.f32 %v3347, 0.1
        %v3412 = vmul.f32 %v3348, 0.1
        %v3413 = vmul.f32 %v3349, 0.1
        %v3414 = vmul.f32 %v3350, 0.1
        %v3415 = vmul.f32 %v3351, 0.1
        %v3416 = vmul.f32 %v3352, 0.1
        %v3417 = vmul.f32 %v3353, 0.1
        %v3418 = vmul.f32 %v3354, 0.1
        %v3419 = vmul.f32 %v3355, 0.1
        %v3420 = vmul.f32 %v3356, 0.1
        %v3421 = vmul.f32 %v3357, 0.1
        %v3422 = vmul.f32 %v3358, 0.1
        %v3423 = vmul.f32 %v3359, 0.1
        %v3424 = vmul.f32 %v3360, 0.1
        %v3425 = vmul.f32 %v3361, 0.1
        %v3426 = vmul.f32 %v3362, 0.1
        %v3427 = vmul.f32 %v3363, 0.1
        %v3428 = vmul.f32 %v3364, 0.1
        %v3429 = vmul.f32 %v3365, 0.1
        %v3430 = vmul.f32 %v3366, 0.1
        %v3431 = vmul.f32 %v3367, 0.1
        %v3432 = vmul.f32 %v3368, 0.1
        %v3433 = vmul.f32 %v3369, 0.1
        %v3434 = vsel %vm3370, %v3338, %v3402
        %v3435 = vsel %vm3371, %v3339, %v3403
        %v3436 = vsel %vm3372, %v3340, %v3404
        %v3437 = vsel %vm3373, %v3341, %v3405
        %v3438 = vsel %vm3374, %v3342, %v3406
        %v3439 = vsel %vm3375, %v3343, %v3407
        %v3440 = vsel %vm3376, %v3344, %v3408
        %v3441 = vsel %vm3377, %v3345, %v3409
        %v3442 = vsel %vm3378, %v3346, %v3410
        %v3443 = vsel %vm3379, %v3347, %v3411
        %v3444 = vsel %vm3380, %v3348, %v3412
        %v3445 = vsel %vm3381, %v3349, %v3413
        %v3446 = vsel %vm3382, %v3350, %v3414
        %v3447 = vsel %vm3383, %v3351, %v3415
        %v3448 = vsel %vm3384, %v3352, %v3416
        %v3449 = vsel %vm3385, %v3353, %v3417
        %v3450 = vsel %vm3386, %v3354, %v3418
        %v3451 = vsel %vm3387, %v3355, %v3419
        %v3452 = vsel %vm3388, %v3356, %v3420
        %v3453 = vsel %vm3389, %v3357, %v3421
        %v3454 = vsel %vm3390, %v3358, %v3422
        %v3455 = vsel %vm3391, %v3359, %v3423
        %v3456 = vsel %vm3392, %v3360, %v3424
        %v3457 = vsel %vm3393, %v3361, %v3425
        %v3458 = vsel %vm3394, %v3362, %v3426
        %v3459 = vsel %vm3395, %v3363, %v3427
        %v3460 = vsel %vm3396, %v3364, %v3428
        %v3461 = vsel %vm3397, %v3365, %v3429
        %v3462 = vsel %vm3398, %v3366, %v3430
        %v3463 = vsel %vm3399, %v3367, %v3431
        %v3464 = vsel %vm3400, %v3368, %v3432
        %v3465 = vsel %vm3401, %v3369, %v3433
        %3466 = vst.msk [vmem:[#allocation3] sm:$0xf] %vm265, 0
        %3467 = vst.msk [vmem:[#allocation3 + $0x4] sm:$0xf] %vm265, 0
        %3468 = vst.msk [vmem:[#allocation3 + $0x8] sm:$0x1] %vm268, 0
        %3469 = vst.msk [vmem:[#allocation3 + $0xc] sm:$0xf] %vm265, 0
        %3470 = vst.msk [vmem:[#allocation3 + $0x10] sm:$0xf] %vm265, 0
        %3471 = vst.msk [vmem:[#allocation3 + $0x14] sm:$0x1] %vm268, 0
        %3472 = vst.msk [vmem:[#allocation3 + $0x18] sm:$0xf] %vm265, 0
        %3473 = vst.msk [vmem:[#allocation3 + $0x1c] sm:$0xf] %vm265, 0
        %3474 = vst.msk [vmem:[#allocation3 + $0x20] sm:$0x1] %vm268, 0
        %3475 = vst.msk [vmem:[#allocation3 + $0x24] sm:$0xf] %vm265, 0
        %3476 = vst.msk [vmem:[#allocation3 + $0x28] sm:$0xf] %vm265, 0
        %3477 = vst.msk [vmem:[#allocation3 + $0x2c] sm:$0x1] %vm268, 0
        %3478 = vst.msk [vmem:[#allocation3 + $0x30] sm:$0xf] %vm265, 0
        %3479 = vst.msk [vmem:[#allocation3 + $0x34] sm:$0xf] %vm265, 0
        %3480 = vst.msk [vmem:[#allocation3 + $0x38] sm:$0x1] %vm268, 0
        %3481 = vst.msk [vmem:[#allocation3 + $0x3c] sm:$0xf] %vm265, 0
        %3482 = vst.msk [vmem:[#allocation3 + $0x40] sm:$0xf] %vm265, 0
        %3483 = vst.msk [vmem:[#allocation3 + $0x44] sm:$0x1] %vm268, 0
        %3484 = vst.msk [vmem:[#allocation3 + $0x48] sm:$0xf] %vm265, 0
        %3485 = vst.msk [vmem:[#allocation3 + $0x4c] sm:$0xf] %vm265, 0
        %3486 = vst.msk [vmem:[#allocation3 + $0x50] sm:$0x1] %vm268, 0
        %3487 = vst.msk [vmem:[#allocation3 + $0x54] sm:$0xf] %vm265, 0
        %3488 = vst.msk [vmem:[#allocation3 + $0x58] sm:$0xf] %vm265, 0
        %3489 = vst.msk [vmem:[#allocation3 + $0x5c] sm:$0x1] %vm268, 0
        %3490 = vst.msk [vmem:[#allocation3 + $0x60] sm:$0xf] %vm265, 0
        %3491 = vst.msk [vmem:[#allocation3 + $0x64] sm:$0xf] %vm265, 0
        %3492 = vst.msk [vmem:[#allocation3 + $0x68] sm:$0x1] %vm268, 0
        %3493 = vst.msk [vmem:[#allocation3 + $0x6c] sm:$0xf] %vm265, 0
        %3494 = vst.msk [vmem:[#allocation3 + $0x70] sm:$0xf] %vm265, 0
        %3495 = vst.msk [vmem:[#allocation3 + $0x74] sm:$0x1] %vm268, 0
        %3496 = vst.msk [vmem:[#allocation3 + $0x78] sm:$0xf] %vm265, 0
        %3497 = vst.msk [vmem:[#allocation3 + $0x7c] sm:$0xf] %vm265, 0
        %3498 = vst.msk [vmem:[#allocation3 + $0x80] sm:$0x1] %vm268, 0
        %3499 = vst.msk [vmem:[#allocation3 + $0x84] sm:$0xf] %vm265, 0
        %3500 = vst.msk [vmem:[#allocation3 + $0x88] sm:$0xf] %vm265, 0
        %3501 = vst.msk [vmem:[#allocation3 + $0x8c] sm:$0x1] %vm268, 0
        %3502 = vst.msk [vmem:[#allocation3 + $0x90] sm:$0xf] %vm265, 0
        %3503 = vst.msk [vmem:[#allocation3 + $0x94] sm:$0xf] %vm265, 0
        %3504 = vst.msk [vmem:[#allocation3 + $0x98] sm:$0x1] %vm268, 0
        %3505 = vst.msk [vmem:[#allocation3 + $0x9c] sm:$0xf] %vm265, 0
        %3506 = vst.msk [vmem:[#allocation3 + $0xa0] sm:$0xf] %vm265, 0
        %3507 = vst.msk [vmem:[#allocation3 + $0xa4] sm:$0x1] %vm268, 0
        %3508 = vst.msk [vmem:[#allocation3 + $0xa8] sm:$0xf] %vm265, 0
        %3509 = vst.msk [vmem:[#allocation3 + $0xac] sm:$0xf] %vm265, 0
        %3510 = vst.msk [vmem:[#allocation3 + $0xb0] sm:$0x1] %vm268, 0
        %3511 = vst.msk [vmem:[#allocation3 + $0xb4] sm:$0xf] %vm265, 0
        %3512 = vst.msk [vmem:[#allocation3 + $0xb8] sm:$0xf] %vm265, 0
        %3513 = vst.msk [vmem:[#allocation3 + $0xbc] sm:$0x1] %vm268, 0
        %3514 = vst.msk [vmem:[#allocation3 + $0xc0] sm:$0xf] %vm265, 0
        %3515 = vst.msk [vmem:[#allocation3 + $0xc4] sm:$0xf] %vm265, 0
        %3516 = vst.msk [vmem:[#allocation3 + $0xc8] sm:$0x1] %vm268, 0
        %3517 = vst.msk [vmem:[#allocation3 + $0xcc] sm:$0xf] %vm265, 0
        %3518 = vst.msk [vmem:[#allocation3 + $0xd0] sm:$0xf] %vm265, 0
        %3519 = vst.msk [vmem:[#allocation3 + $0xd4] sm:$0x1] %vm268, 0
        %v3520 = vpack.c.bf16 %v3435, %v3434
        %v3521 = vpack.c.bf16 %v3437, %v3436
        %v3522 = vpack.c.bf16 %v3439, %v3438
        %v3523 = vpack.c.bf16 %v3441, %v3440
        %v3524 = vpack.c.bf16 %v3443, %v3442
        %v3525 = vpack.c.bf16 %v3445, %v3444
        %v3526 = vpack.c.bf16 %v3447, %v3446
        %v3527 = vpack.c.bf16 %v3449, %v3448
        %v3528 = vpack.c.bf16 %v3451, %v3450
        %v3529 = vpack.c.bf16 %v3453, %v3452
        %v3530 = vpack.c.bf16 %v3455, %v3454
        %v3531 = vpack.c.bf16 %v3457, %v3456
        %v3532 = vpack.c.bf16 %v3459, %v3458
        %v3533 = vpack.c.bf16 %v3461, %v3460
        %v3534 = vpack.c.bf16 %v3463, %v3462
        %v3535 = vpack.c.bf16 %v3465, %v3464
        %v3552 = vunpack.c.l.b16 %v3520
        %v3553 = vunpack.c.h.b16 %v3520
        %v3554 = vunpack.c.l.b16 %v3521
        %v3555 = vunpack.c.h.b16 %v3521
        %v3556 = vunpack.c.l.b16 %v3522
        %v3557 = vunpack.c.h.b16 %v3522
        %v3558 = vunpack.c.l.b16 %v3523
        %v3559 = vunpack.c.h.b16 %v3523
        %v3560 = vunpack.c.l.b16 %v3524
        %v3561 = vunpack.c.h.b16 %v3524
        %v3562 = vunpack.c.l.b16 %v3525
        %v3563 = vunpack.c.h.b16 %v3525
        %v3564 = vunpack.c.l.b16 %v3526
        %v3565 = vunpack.c.h.b16 %v3526
        %v3566 = vunpack.c.l.b16 %v3527
        %v3567 = vunpack.c.h.b16 %v3527
        %v3568 = vunpack.c.l.b16 %v3528
        %v3569 = vunpack.c.h.b16 %v3528
        %v3570 = vunpack.c.l.b16 %v3529
        %v3571 = vunpack.c.h.b16 %v3529
        %v3572 = vunpack.c.l.b16 %v3530
        %v3573 = vunpack.c.h.b16 %v3530
        %v3574 = vunpack.c.l.b16 %v3531
        %v3575 = vunpack.c.h.b16 %v3531
        %v3576 = vunpack.c.l.b16 %v3532
        %v3577 = vunpack.c.h.b16 %v3532
        %v3578 = vunpack.c.l.b16 %v3533
        %v3579 = vunpack.c.h.b16 %v3533
        %v3580 = vunpack.c.l.b16 %v3534
        %v3581 = vunpack.c.h.b16 %v3534
        %v3582 = vunpack.c.l.b16 %v3535
        %v3583 = vunpack.c.h.b16 %v3535
        %v3584 = vpack.c.b16 %v3552, %v3552
        %v3585 = vpack.c.b16 %v3553, %v3553
        %v3586 = vpack.c.b16 %v3554, %v3554
        %v3587 = vpack.c.b16 %v3555, %v3555
        %v3588 = vpack.c.b16 %v3556, %v3556
        %v3589 = vpack.c.b16 %v3557, %v3557
        %v3590 = vpack.c.b16 %v3558, %v3558
        %v3591 = vpack.c.b16 %v3559, %v3559
        %v3592 = vpack.c.b16 %v3560, %v3560
        %v3593 = vpack.c.b16 %v3561, %v3561
        %v3594 = vpack.c.b16 %v3562, %v3562
        %v3595 = vpack.c.b16 %v3563, %v3563
        %v3596 = vpack.c.b16 %v3564, %v3564
        %v3597 = vpack.c.b16 %v3565, %v3565
        %v3598 = vpack.c.b16 %v3566, %v3566
        %v3599 = vpack.c.b16 %v3567, %v3567
        %v3600 = vpack.c.b16 %v3568, %v3568
        %v3601 = vpack.c.b16 %v3569, %v3569
        %v3602 = vpack.c.b16 %v3570, %v3570
        %v3603 = vpack.c.b16 %v3571, %v3571
        %v3604 = vpack.c.b16 %v3572, %v3572
        %v3605 = vpack.c.b16 %v3573, %v3573
        %v3606 = vpack.c.b16 %v3574, %v3574
        %v3607 = vpack.c.b16 %v3575, %v3575
        %v3608 = vpack.c.b16 %v3576, %v3576
        %v3609 = vpack.c.b16 %v3577, %v3577
        %v3610 = vpack.c.b16 %v3578, %v3578
        %v3611 = vpack.c.b16 %v3579, %v3579
        %v3612 = vpack.c.b16 %v3580, %v3580
        %v3613 = vpack.c.b16 %v3581, %v3581
        %v3614 = vpack.c.b16 %v3582, %v3582
        %v3615 = vpack.c.b16 %v3583, %v3583
        %v3617 = vshrl.u32 %v3584, 16
        %v3619 = vrot.slane %v3617, 7
        %v3620 = vshll.u32 %v3584, 16
        %v3622 = vor.u32 %v3619, %v3620
        %v3623 = vrot.slane %v3619, 4
        %v3625 = vshrl.u32 %v3585, 16
        %v3627 = vrot.slane %v3625, 7
        %v3628 = vshll.u32 %v3585, 16
        %v3630 = vor.u32 %v3627, %v3628
        %v3631 = vsel %vm451, %v3623, %v3630
        %v3632 = vrot.slane %v3627, 4
        %v3634 = vshrl.u32 %v3586, 16
        %v3636 = vrot.slane %v3634, 7
        %v3637 = vshll.u32 %v3586, 16
        %v3639 = vor.u32 %v3636, %v3637
        %v3640 = vrot.slane %v3636, 4
        %v3642 = vshrl.u32 %v3587, 16
        %v3644 = vrot.slane %v3642, 7
        %v3645 = vshll.u32 %v3587, 16
        %v3647 = vor.u32 %v3644, %v3645
        %v3648 = vsel %vm451, %v3640, %v3647
        %v3649 = vrot.slane %v3644, 4
        %v3651 = vshrl.u32 %v3588, 16
        %v3653 = vrot.slane %v3651, 7
        %v3654 = vshll.u32 %v3588, 16
        %v3656 = vor.u32 %v3653, %v3654
        %v3657 = vrot.slane %v3653, 4
        %v3659 = vshrl.u32 %v3589, 16
        %v3661 = vrot.slane %v3659, 7
        %v3662 = vshll.u32 %v3589, 16
        %v3664 = vor.u32 %v3661, %v3662
        %v3665 = vsel %vm451, %v3657, %v3664
        %v3666 = vrot.slane %v3661, 4
        %v3668 = vshrl.u32 %v3590, 16
        %v3670 = vrot.slane %v3668, 7
        %v3671 = vshll.u32 %v3590, 16
        %v3673 = vor.u32 %v3670, %v3671
        %v3674 = vrot.slane %v3670, 4
        %v3676 = vshrl.u32 %v3591, 16
        %v3678 = vrot.slane %v3676, 7
        %v3679 = vshll.u32 %v3591, 16
        %v3681 = vor.u32 %v3678, %v3679
        %v3682 = vsel %vm451, %v3674, %v3681
        %v3683 = vrot.slane %v3678, 4
        %v3685 = vshrl.u32 %v3592, 16
        %v3687 = vrot.slane %v3685, 7
        %v3688 = vshll.u32 %v3592, 16
        %v3690 = vor.u32 %v3687, %v3688
        %v3691 = vrot.slane %v3687, 4
        %v3693 = vshrl.u32 %v3593, 16
        %v3695 = vrot.slane %v3693, 7
        %v3696 = vshll.u32 %v3593, 16
        %v3698 = vor.u32 %v3695, %v3696
        %v3699 = vsel %vm451, %v3691, %v3698
        %v3700 = vrot.slane %v3695, 4
        %v3702 = vshrl.u32 %v3594, 16
        %v3704 = vrot.slane %v3702, 7
        %v3705 = vshll.u32 %v3594, 16
        %v3707 = vor.u32 %v3704, %v3705
        %v3708 = vrot.slane %v3704, 4
        %v3710 = vshrl.u32 %v3595, 16
        %v3712 = vrot.slane %v3710, 7
        %v3713 = vshll.u32 %v3595, 16
        %v3715 = vor.u32 %v3712, %v3713
        %v3716 = vsel %vm451, %v3708, %v3715
        %v3717 = vrot.slane %v3712, 4
        %v3719 = vshrl.u32 %v3596, 16
        %v3721 = vrot.slane %v3719, 7
        %v3722 = vshll.u32 %v3596, 16
        %v3724 = vor.u32 %v3721, %v3722
        %v3725 = vrot.slane %v3721, 4
        %v3727 = vshrl.u32 %v3597, 16
        %v3729 = vrot.slane %v3727, 7
        %v3730 = vshll.u32 %v3597, 16
        %v3732 = vor.u32 %v3729, %v3730
        %v3733 = vsel %vm451, %v3725, %v3732
        %v3734 = vrot.slane %v3729, 4
        %v3736 = vshrl.u32 %v3598, 16
        %v3738 = vrot.slane %v3736, 7
        %v3739 = vshll.u32 %v3598, 16
        %v3741 = vor.u32 %v3738, %v3739
        %v3742 = vrot.slane %v3738, 4
        %v3744 = vshrl.u32 %v3599, 16
        %v3746 = vrot.slane %v3744, 7
        %v3747 = vshll.u32 %v3599, 16
        %v3749 = vor.u32 %v3746, %v3747
        %v3750 = vsel %vm451, %v3742, %v3749
        %v3751 = vrot.slane %v3746, 4
        %v3753 = vshrl.u32 %v3600, 16
        %v3755 = vrot.slane %v3753, 7
        %v3756 = vshll.u32 %v3600, 16
        %v3758 = vor.u32 %v3755, %v3756
        %v3759 = vrot.slane %v3755, 4
        %v3761 = vshrl.u32 %v3601, 16
        %v3763 = vrot.slane %v3761, 7
        %v3764 = vshll.u32 %v3601, 16
        %v3766 = vor.u32 %v3763, %v3764
        %v3767 = vsel %vm451, %v3759, %v3766
        %v3768 = vrot.slane %v3763, 4
        %v3770 = vshrl.u32 %v3602, 16
        %v3772 = vrot.slane %v3770, 7
        %v3773 = vshll.u32 %v3602, 16
        %v3775 = vor.u32 %v3772, %v3773
        %v3776 = vrot.slane %v3772, 4
        %v3778 = vshrl.u32 %v3603, 16
        %v3780 = vrot.slane %v3778, 7
        %v3781 = vshll.u32 %v3603, 16
        %v3783 = vor.u32 %v3780, %v3781
        %v3784 = vsel %vm451, %v3776, %v3783
        %v3785 = vrot.slane %v3780, 4
        %v3787 = vshrl.u32 %v3604, 16
        %v3789 = vrot.slane %v3787, 7
        %v3790 = vshll.u32 %v3604, 16
        %v3792 = vor.u32 %v3789, %v3790
        %v3793 = vrot.slane %v3789, 4
        %v3795 = vshrl.u32 %v3605, 16
        %v3797 = vrot.slane %v3795, 7
        %v3798 = vshll.u32 %v3605, 16
        %v3800 = vor.u32 %v3797, %v3798
        %v3801 = vsel %vm451, %v3793, %v3800
        %v3802 = vrot.slane %v3797, 4
        %v3804 = vshrl.u32 %v3606, 16
        %v3806 = vrot.slane %v3804, 7
        %v3807 = vshll.u32 %v3606, 16
        %v3809 = vor.u32 %v3806, %v3807
        %v3810 = vrot.slane %v3806, 4
        %v3812 = vshrl.u32 %v3607, 16
        %v3814 = vrot.slane %v3812, 7
        %v3815 = vshll.u32 %v3607, 16
        %v3817 = vor.u32 %v3814, %v3815
        %v3818 = vsel %vm451, %v3810, %v3817
        %v3819 = vrot.slane %v3814, 4
        %v3821 = vshrl.u32 %v3608, 16
        %v3823 = vrot.slane %v3821, 7
        %v3824 = vshll.u32 %v3608, 16
        %v3826 = vor.u32 %v3823, %v3824
        %v3827 = vrot.slane %v3823, 4
        %v3829 = vshrl.u32 %v3609, 16
        %v3831 = vrot.slane %v3829, 7
        %v3832 = vshll.u32 %v3609, 16
        %v3834 = vor.u32 %v3831, %v3832
        %v3835 = vsel %vm451, %v3827, %v3834
        %v3836 = vrot.slane %v3831, 4
        %v3838 = vshrl.u32 %v3610, 16
        %v3840 = vrot.slane %v3838, 7
        %v3841 = vshll.u32 %v3610, 16
        %v3843 = vor.u32 %v3840, %v3841
        %v3844 = vrot.slane %v3840, 4
        %v3846 = vshrl.u32 %v3611, 16
        %v3848 = vrot.slane %v3846, 7
        %v3849 = vshll.u32 %v3611, 16
        %v3851 = vor.u32 %v3848, %v3849
        %v3852 = vsel %vm451, %v3844, %v3851
        %v3853 = vrot.slane %v3848, 4
        %v3855 = vshrl.u32 %v3612, 16
        %v3857 = vrot.slane %v3855, 7
        %v3858 = vshll.u32 %v3612, 16
        %v3860 = vor.u32 %v3857, %v3858
        %v3861 = vrot.slane %v3857, 4
        %v3863 = vshrl.u32 %v3613, 16
        %v3865 = vrot.slane %v3863, 7
        %v3866 = vshll.u32 %v3613, 16
        %v3868 = vor.u32 %v3865, %v3866
        %v3869 = vsel %vm451, %v3861, %v3868
        %v3870 = vrot.slane %v3865, 4
        %v3872 = vshrl.u32 %v3614, 16
        %v3874 = vrot.slane %v3872, 7
        %v3875 = vshll.u32 %v3614, 16
        %v3877 = vor.u32 %v3874, %v3875
        %v3878 = vrot.slane %v3874, 4
        %v3880 = vshrl.u32 %v3615, 16
        %v3882 = vrot.slane %v3880, 7
        %v3883 = vshll.u32 %v3615, 16
        %v3885 = vor.u32 %v3882, %v3883
        %v3886 = vsel %vm451, %v3878, %v3885
        %v3887 = vrot.slane %v3882, 4
        %s3936 = scalar_lea.vmem [#allocation3], 12
        %v3937 = vld [vmem:[%s3936] sm:$0xf]
        %v3938 = vsel %vm775, %v3622, %v3937
        %3939 = vst [vmem:[%s3936] sm:$0xf] %v3938
        %3940 = vst.msk [vmem:[%s3936 + $0x4] sm:$0xf] %vm265, %v3631
        %v3941 = vld [vmem:[%s3936 + $0x8] sm:$0x1]
        %v3942 = vsel %vm781, %v3632, %v3941
        %3943 = vst [vmem:[%s3936 + $0x8] sm:$0x1] %v3942
        %v3944 = vld [vmem:[%s3936 + $0xc] sm:$0xf]
        %v3945 = vsel %vm775, %v3639, %v3944
        %3946 = vst [vmem:[%s3936 + $0xc] sm:$0xf] %v3945
        %3947 = vst.msk [vmem:[%s3936 + $0x10] sm:$0xf] %vm265, %v3648
        %v3948 = vld [vmem:[%s3936 + $0x14] sm:$0x1]
        %v3949 = vsel %vm781, %v3649, %v3948
        %3950 = vst [vmem:[%s3936 + $0x14] sm:$0x1] %v3949
        %v3951 = vld [vmem:[%s3936 + $0x18] sm:$0xf]
        %v3952 = vsel %vm775, %v3656, %v3951
        %3953 = vst [vmem:[%s3936 + $0x18] sm:$0xf] %v3952
        %3954 = vst.msk [vmem:[%s3936 + $0x1c] sm:$0xf] %vm265, %v3665
        %v3955 = vld [vmem:[%s3936 + $0x20] sm:$0x1]
        %v3956 = vsel %vm781, %v3666, %v3955
        %3957 = vst [vmem:[%s3936 + $0x20] sm:$0x1] %v3956
        %v3958 = vld [vmem:[%s3936 + $0x24] sm:$0xf]
        %v3959 = vsel %vm775, %v3673, %v3958
        %3960 = vst [vmem:[%s3936 + $0x24] sm:$0xf] %v3959
        %3961 = vst.msk [vmem:[%s3936 + $0x28] sm:$0xf] %vm265, %v3682
        %v3962 = vld [vmem:[%s3936 + $0x2c] sm:$0x1]
        %v3963 = vsel %vm781, %v3683, %v3962
        %3964 = vst [vmem:[%s3936 + $0x2c] sm:$0x1] %v3963
        %v3965 = vld [vmem:[%s3936 + $0x30] sm:$0xf]
        %v3966 = vsel %vm775, %v3690, %v3965
        %3967 = vst [vmem:[%s3936 + $0x30] sm:$0xf] %v3966
        %3968 = vst.msk [vmem:[%s3936 + $0x34] sm:$0xf] %vm265, %v3699
        %v3969 = vld [vmem:[%s3936 + $0x38] sm:$0x1]
        %v3970 = vsel %vm781, %v3700, %v3969
        %3971 = vst [vmem:[%s3936 + $0x38] sm:$0x1] %v3970
        %v3972 = vld [vmem:[%s3936 + $0x3c] sm:$0xf]
        %v3973 = vsel %vm775, %v3707, %v3972
        %3974 = vst [vmem:[%s3936 + $0x3c] sm:$0xf] %v3973
        %3975 = vst.msk [vmem:[%s3936 + $0x40] sm:$0xf] %vm265, %v3716
        %v3976 = vld [vmem:[%s3936 + $0x44] sm:$0x1]
        %v3977 = vsel %vm781, %v3717, %v3976
        %3978 = vst [vmem:[%s3936 + $0x44] sm:$0x1] %v3977
        %v3979 = vld [vmem:[%s3936 + $0x48] sm:$0xf]
        %v3980 = vsel %vm775, %v3724, %v3979
        %3981 = vst [vmem:[%s3936 + $0x48] sm:$0xf] %v3980
        %3982 = vst.msk [vmem:[%s3936 + $0x4c] sm:$0xf] %vm265, %v3733
        %v3983 = vld [vmem:[%s3936 + $0x50] sm:$0x1]
        %v3984 = vsel %vm781, %v3734, %v3983
        %3985 = vst [vmem:[%s3936 + $0x50] sm:$0x1] %v3984
        %v3986 = vld [vmem:[%s3936 + $0x54] sm:$0xf]
        %v3987 = vsel %vm775, %v3741, %v3986
        %3988 = vst [vmem:[%s3936 + $0x54] sm:$0xf] %v3987
        %3989 = vst.msk [vmem:[%s3936 + $0x58] sm:$0xf] %vm265, %v3750
        %v3990 = vld [vmem:[%s3936 + $0x5c] sm:$0x1]
        %v3991 = vsel %vm781, %v3751, %v3990
        %3992 = vst [vmem:[%s3936 + $0x5c] sm:$0x1] %v3991
        %v3993 = vld [vmem:[%s3936 + $0x60] sm:$0xf]
        %v3994 = vsel %vm775, %v3758, %v3993
        %3995 = vst [vmem:[%s3936 + $0x60] sm:$0xf] %v3994
        %3996 = vst.msk [vmem:[%s3936 + $0x64] sm:$0xf] %vm265, %v3767
        %v3997 = vld [vmem:[%s3936 + $0x68] sm:$0x1]
        %v3998 = vsel %vm781, %v3768, %v3997
        %3999 = vst [vmem:[%s3936 + $0x68] sm:$0x1] %v3998
        %v4000 = vld [vmem:[%s3936 + $0x6c] sm:$0xf]
        %v4001 = vsel %vm775, %v3775, %v4000
        %4002 = vst [vmem:[%s3936 + $0x6c] sm:$0xf] %v4001
        %4003 = vst.msk [vmem:[%s3936 + $0x70] sm:$0xf] %vm265, %v3784
        %v4004 = vld [vmem:[%s3936 + $0x74] sm:$0x1]
        %v4005 = vsel %vm781, %v3785, %v4004
        %4006 = vst [vmem:[%s3936 + $0x74] sm:$0x1] %v4005
        %v4007 = vld [vmem:[%s3936 + $0x78] sm:$0xf]
        %v4008 = vsel %vm775, %v3792, %v4007
        %4009 = vst [vmem:[%s3936 + $0x78] sm:$0xf] %v4008
        %4010 = vst.msk [vmem:[%s3936 + $0x7c] sm:$0xf] %vm265, %v3801
        %v4011 = vld [vmem:[%s3936 + $0x80] sm:$0x1]
        %v4012 = vsel %vm781, %v3802, %v4011
        %4013 = vst [vmem:[%s3936 + $0x80] sm:$0x1] %v4012
        %v4014 = vld [vmem:[%s3936 + $0x84] sm:$0xf]
        %v4015 = vsel %vm775, %v3809, %v4014
        %4016 = vst [vmem:[%s3936 + $0x84] sm:$0xf] %v4015
        %4017 = vst.msk [vmem:[%s3936 + $0x88] sm:$0xf] %vm265, %v3818
        %v4018 = vld [vmem:[%s3936 + $0x8c] sm:$0x1]
        %v4019 = vsel %vm781, %v3819, %v4018
        %4020 = vst [vmem:[%s3936 + $0x8c] sm:$0x1] %v4019
        %v4021 = vld [vmem:[%s3936 + $0x90] sm:$0xf]
        %v4022 = vsel %vm775, %v3826, %v4021
        %4023 = vst [vmem:[%s3936 + $0x90] sm:$0xf] %v4022
        %4024 = vst.msk [vmem:[%s3936 + $0x94] sm:$0xf] %vm265, %v3835
        %v4025 = vld [vmem:[%s3936 + $0x98] sm:$0x1]
        %v4026 = vsel %vm781, %v3836, %v4025
        %4027 = vst [vmem:[%s3936 + $0x98] sm:$0x1] %v4026
        %v4028 = vld [vmem:[%s3936 + $0x9c] sm:$0xf]
        %v4029 = vsel %vm775, %v3843, %v4028
        %4030 = vst [vmem:[%s3936 + $0x9c] sm:$0xf] %v4029
        %4031 = vst.msk [vmem:[%s3936 + $0xa0] sm:$0xf] %vm265, %v3852
        %v4032 = vld [vmem:[%s3936 + $0xa4] sm:$0x1]
        %v4033 = vsel %vm781, %v3853, %v4032
        %4034 = vst [vmem:[%s3936 + $0xa4] sm:$0x1] %v4033
        %v4035 = vld [vmem:[%s3936 + $0xa8] sm:$0xf]
        %v4036 = vsel %vm775, %v3860, %v4035
        %4037 = vst [vmem:[%s3936 + $0xa8] sm:$0xf] %v4036
        %4038 = vst.msk [vmem:[%s3936 + $0xac] sm:$0xf] %vm265, %v3869
        %v4039 = vld [vmem:[%s3936 + $0xb0] sm:$0x1]
        %v4040 = vsel %vm781, %v3870, %v4039
        %4041 = vst [vmem:[%s3936 + $0xb0] sm:$0x1] %v4040
        %v4042 = vld [vmem:[%s3936 + $0xb4] sm:$0xf]
        %v4043 = vsel %vm775, %v3877, %v4042
        %4044 = vst [vmem:[%s3936 + $0xb4] sm:$0xf] %v4043
        %4045 = vst.msk [vmem:[%s3936 + $0xb8] sm:$0xf] %vm265, %v3886
        %v4046 = vld [vmem:[%s3936 + $0xbc] sm:$0x1]
        %v4047 = vsel %vm781, %v3887, %v4046
        %4048 = vst [vmem:[%s3936 + $0xbc] sm:$0x1] %v4047
        %v4049 = vld [vmem:[#allocation3] sm:$0xf]
        %v4050 = vld [vmem:[#allocation3 + $0x4] sm:$0xf]
        %v4051 = vld [vmem:[#allocation3 + $0x8] sm:$0x1]
        %v4052 = vld [vmem:[#allocation3 + $0xc] sm:$0xf]
        %v4053 = vld [vmem:[#allocation3 + $0x10] sm:$0xf]
        %v4054 = vld [vmem:[#allocation3 + $0x14] sm:$0x1]
        %v4055 = vld [vmem:[#allocation3 + $0x18] sm:$0xf]
        %v4056 = vld [vmem:[#allocation3 + $0x1c] sm:$0xf]
        %v4057 = vld [vmem:[#allocation3 + $0x20] sm:$0x1]
        %v4058 = vld [vmem:[#allocation3 + $0x24] sm:$0xf]
        %v4059 = vld [vmem:[#allocation3 + $0x28] sm:$0xf]
        %v4060 = vld [vmem:[#allocation3 + $0x2c] sm:$0x1]
        %v4061 = vld [vmem:[#allocation3 + $0x30] sm:$0xf]
        %v4062 = vld [vmem:[#allocation3 + $0x34] sm:$0xf]
        %v4063 = vld [vmem:[#allocation3 + $0x38] sm:$0x1]
        %v4064 = vld [vmem:[#allocation3 + $0x3c] sm:$0xf]
        %v4065 = vld [vmem:[#allocation3 + $0x40] sm:$0xf]
        %v4066 = vld [vmem:[#allocation3 + $0x44] sm:$0x1]
        %v4067 = vld [vmem:[#allocation3 + $0x48] sm:$0xf]
        %v4068 = vld [vmem:[#allocation3 + $0x4c] sm:$0xf]
        %v4069 = vld [vmem:[#allocation3 + $0x50] sm:$0x1]
        %v4070 = vld [vmem:[#allocation3 + $0x54] sm:$0xf]
        %v4071 = vld [vmem:[#allocation3 + $0x58] sm:$0xf]
        %v4072 = vld [vmem:[#allocation3 + $0x5c] sm:$0x1]
        %v4073 = vld [vmem:[#allocation3 + $0x60] sm:$0xf]
        %v4074 = vld [vmem:[#allocation3 + $0x64] sm:$0xf]
        %v4075 = vld [vmem:[#allocation3 + $0x68] sm:$0x1]
        %v4076 = vld [vmem:[#allocation3 + $0x6c] sm:$0xf]
        %v4077 = vld [vmem:[#allocation3 + $0x70] sm:$0xf]
        %v4078 = vld [vmem:[#allocation3 + $0x74] sm:$0x1]
        %v4079 = vld [vmem:[#allocation3 + $0x78] sm:$0xf]
        %v4080 = vld [vmem:[#allocation3 + $0x7c] sm:$0xf]
        %v4081 = vld [vmem:[#allocation3 + $0x80] sm:$0x1]
        %v4082 = vld [vmem:[#allocation3 + $0x84] sm:$0xf]
        %v4083 = vld [vmem:[#allocation3 + $0x88] sm:$0xf]
        %v4084 = vld [vmem:[#allocation3 + $0x8c] sm:$0x1]
        %v4085 = vld [vmem:[#allocation3 + $0x90] sm:$0xf]
        %v4086 = vld [vmem:[#allocation3 + $0x94] sm:$0xf]
        %v4087 = vld [vmem:[#allocation3 + $0x98] sm:$0x1]
        %v4088 = vld [vmem:[#allocation3 + $0x9c] sm:$0xf]
        %v4089 = vld [vmem:[#allocation3 + $0xa0] sm:$0xf]
        %v4090 = vld [vmem:[#allocation3 + $0xa4] sm:$0x1]
        %v4091 = vld [vmem:[#allocation3 + $0xa8] sm:$0xf]
        %v4092 = vld [vmem:[#allocation3 + $0xac] sm:$0xf]
        %v4093 = vld [vmem:[#allocation3 + $0xb0] sm:$0x1]
        %v4094 = vld [vmem:[#allocation3 + $0xb4] sm:$0xf]
        %v4095 = vld [vmem:[#allocation3 + $0xb8] sm:$0xf]
        %v4096 = vld [vmem:[#allocation3 + $0xbc] sm:$0x1]
        %v4129 = vunpack.c.l.b16 %v4049
        %v4130 = vunpack.c.l.b16 %v4050
        %v4131 = vunpack.c.l.b16 %v4052
        %v4132 = vunpack.c.l.b16 %v4053
        %v4133 = vunpack.c.l.b16 %v4055
        %v4134 = vunpack.c.l.b16 %v4056
        %v4135 = vunpack.c.l.b16 %v4058
        %v4136 = vunpack.c.l.b16 %v4059
        %v4137 = vunpack.c.l.b16 %v4061
        %v4138 = vunpack.c.l.b16 %v4062
        %v4139 = vunpack.c.l.b16 %v4064
        %v4140 = vunpack.c.l.b16 %v4065
        %v4141 = vunpack.c.l.b16 %v4067
        %v4142 = vunpack.c.l.b16 %v4068
        %v4143 = vunpack.c.l.b16 %v4070
        %v4144 = vunpack.c.l.b16 %v4071
        %v4145 = vunpack.c.l.b16 %v4073
        %v4146 = vunpack.c.l.b16 %v4074
        %v4147 = vunpack.c.l.b16 %v4076
        %v4148 = vunpack.c.l.b16 %v4077
        %v4149 = vunpack.c.l.b16 %v4079
        %v4150 = vunpack.c.l.b16 %v4080
        %v4151 = vunpack.c.l.b16 %v4082
        %v4152 = vunpack.c.l.b16 %v4083
        %v4153 = vunpack.c.l.b16 %v4085
        %v4154 = vunpack.c.l.b16 %v4086
        %v4155 = vunpack.c.l.b16 %v4088
        %v4156 = vunpack.c.l.b16 %v4089
        %v4157 = vunpack.c.l.b16 %v4091
        %v4158 = vunpack.c.l.b16 %v4092
        %v4159 = vunpack.c.l.b16 %v4094
        %v4160 = vunpack.c.l.b16 %v4095
        %v4161 = vpack.c.b16 %v4130, %v4129
        %v4162 = vpack.c.b16 %v4132, %v4131
        %v4163 = vpack.c.b16 %v4134, %v4133
        %v4164 = vpack.c.b16 %v4136, %v4135
        %v4165 = vpack.c.b16 %v4138, %v4137
        %v4166 = vpack.c.b16 %v4140, %v4139
        %v4167 = vpack.c.b16 %v4142, %v4141
        %v4168 = vpack.c.b16 %v4144, %v4143
        %v4169 = vpack.c.b16 %v4146, %v4145
        %v4170 = vpack.c.b16 %v4148, %v4147
        %v4171 = vpack.c.b16 %v4150, %v4149
        %v4172 = vpack.c.b16 %v4152, %v4151
        %v4173 = vpack.c.b16 %v4154, %v4153
        %v4174 = vpack.c.b16 %v4156, %v4155
        %v4175 = vpack.c.b16 %v4158, %v4157
        %v4176 = vpack.c.b16 %v4160, %v4159
        %v4193 = vunpack.c.l.b16 %v4051
        %v4194 = vunpack.c.l.b16 %v4054
        %v4195 = vunpack.c.l.b16 %v4057
        %v4196 = vunpack.c.l.b16 %v4060
        %v4197 = vunpack.c.l.b16 %v4063
        %v4198 = vunpack.c.l.b16 %v4066
        %v4199 = vunpack.c.l.b16 %v4069
        %v4200 = vunpack.c.l.b16 %v4072
        %v4201 = vunpack.c.l.b16 %v4075
        %v4202 = vunpack.c.l.b16 %v4078
        %v4203 = vunpack.c.l.b16 %v4081
        %v4204 = vunpack.c.l.b16 %v4084
        %v4205 = vunpack.c.l.b16 %v4087
        %v4206 = vunpack.c.l.b16 %v4090
        %v4207 = vunpack.c.l.b16 %v4093
        %v4208 = vunpack.c.l.b16 %v4096
        %v4209 = vpack.c.b16 %v4193, %v4193
        %v4210 = vpack.c.b16 %v4194, %v4194
        %v4211 = vpack.c.b16 %v4195, %v4195
        %v4212 = vpack.c.b16 %v4196, %v4196
        %v4213 = vpack.c.b16 %v4197, %v4197
        %v4214 = vpack.c.b16 %v4198, %v4198
        %v4215 = vpack.c.b16 %v4199, %v4199
        %v4216 = vpack.c.b16 %v4200, %v4200
        %v4217 = vpack.c.b16 %v4201, %v4201
        %v4218 = vpack.c.b16 %v4202, %v4202
        %v4219 = vpack.c.b16 %v4203, %v4203
        %v4220 = vpack.c.b16 %v4204, %v4204
        %v4221 = vpack.c.b16 %v4205, %v4205
        %v4222 = vpack.c.b16 %v4206, %v4206
        %v4223 = vpack.c.b16 %v4207, %v4207
        %v4224 = vpack.c.b16 %v4208, %v4208
        %v4226 = vshrl.u32 %v4161, 16
        %v4228 = vshll.u32 %v4161, 16
        %v4230 = vrot.slane %v4228, 1
        %v4231 = vor.u32 %v4226, %v4230
        %v4233 = vshll.u32 %v4209, 16
        %v4235 = vrot.slane %v4233, 1
        %v4236 = vsel %vm1066, %v4231, %v4235
        %v4238 = vshrl.u32 %v4162, 16
        %v4240 = vshll.u32 %v4162, 16
        %v4242 = vrot.slane %v4240, 1
        %v4243 = vor.u32 %v4238, %v4242
        %v4245 = vshll.u32 %v4210, 16
        %v4247 = vrot.slane %v4245, 1
        %v4248 = vsel %vm1066, %v4243, %v4247
        %v4250 = vshrl.u32 %v4163, 16
        %v4252 = vshll.u32 %v4163, 16
        %v4254 = vrot.slane %v4252, 1
        %v4255 = vor.u32 %v4250, %v4254
        %v4257 = vshll.u32 %v4211, 16
        %v4259 = vrot.slane %v4257, 1
        %v4260 = vsel %vm1066, %v4255, %v4259
        %v4262 = vshrl.u32 %v4164, 16
        %v4264 = vshll.u32 %v4164, 16
        %v4266 = vrot.slane %v4264, 1
        %v4267 = vor.u32 %v4262, %v4266
        %v4269 = vshll.u32 %v4212, 16
        %v4271 = vrot.slane %v4269, 1
        %v4272 = vsel %vm1066, %v4267, %v4271
        %v4274 = vshrl.u32 %v4165, 16
        %v4276 = vshll.u32 %v4165, 16
        %v4278 = vrot.slane %v4276, 1
        %v4279 = vor.u32 %v4274, %v4278
        %v4281 = vshll.u32 %v4213, 16
        %v4283 = vrot.slane %v4281, 1
        %v4284 = vsel %vm1066, %v4279, %v4283
        %v4286 = vshrl.u32 %v4166, 16
        %v4288 = vshll.u32 %v4166, 16
        %v4290 = vrot.slane %v4288, 1
        %v4291 = vor.u32 %v4286, %v4290
        %v4293 = vshll.u32 %v4214, 16
        %v4295 = vrot.slane %v4293, 1
        %v4296 = vsel %vm1066, %v4291, %v4295
        %v4298 = vshrl.u32 %v4167, 16
        %v4300 = vshll.u32 %v4167, 16
        %v4302 = vrot.slane %v4300, 1
        %v4303 = vor.u32 %v4298, %v4302
        %v4305 = vshll.u32 %v4215, 16
        %v4307 = vrot.slane %v4305, 1
        %v4308 = vsel %vm1066, %v4303, %v4307
        %v4310 = vshrl.u32 %v4168, 16
        %v4312 = vshll.u32 %v4168, 16
        %v4314 = vrot.slane %v4312, 1
        %v4315 = vor.u32 %v4310, %v4314
        %v4317 = vshll.u32 %v4216, 16
        %v4319 = vrot.slane %v4317, 1
        %v4320 = vsel %vm1066, %v4315, %v4319
        %v4322 = vshrl.u32 %v4169, 16
        %v4324 = vshll.u32 %v4169, 16
        %v4326 = vrot.slane %v4324, 1
        %v4327 = vor.u32 %v4322, %v4326
        %v4329 = vshll.u32 %v4217, 16
        %v4331 = vrot.slane %v4329, 1
        %v4332 = vsel %vm1066, %v4327, %v4331
        %v4334 = vshrl.u32 %v4170, 16
        %v4336 = vshll.u32 %v4170, 16
        %v4338 = vrot.slane %v4336, 1
        %v4339 = vor.u32 %v4334, %v4338
        %v4341 = vshll.u32 %v4218, 16
        %v4343 = vrot.slane %v4341, 1
        %v4344 = vsel %vm1066, %v4339, %v4343
        %v4346 = vshrl.u32 %v4171, 16
        %v4348 = vshll.u32 %v4171, 16
        %v4350 = vrot.slane %v4348, 1
        %v4351 = vor.u32 %v4346, %v4350
        %v4353 = vshll.u32 %v4219, 16
        %v4355 = vrot.slane %v4353, 1
        %v4356 = vsel %vm1066, %v4351, %v4355
        %v4358 = vshrl.u32 %v4172, 16
        %v4360 = vshll.u32 %v4172, 16
        %v4362 = vrot.slane %v4360, 1
        %v4363 = vor.u32 %v4358, %v4362
        %v4365 = vshll.u32 %v4220, 16
        %v4367 = vrot.slane %v4365, 1
        %v4368 = vsel %vm1066, %v4363, %v4367
        %v4370 = vshrl.u32 %v4173, 16
        %v4372 = vshll.u32 %v4173, 16
        %v4374 = vrot.slane %v4372, 1
        %v4375 = vor.u32 %v4370, %v4374
        %v4377 = vshll.u32 %v4221, 16
        %v4379 = vrot.slane %v4377, 1
        %v4380 = vsel %vm1066, %v4375, %v4379
        %v4382 = vshrl.u32 %v4174, 16
        %v4384 = vshll.u32 %v4174, 16
        %v4386 = vrot.slane %v4384, 1
        %v4387 = vor.u32 %v4382, %v4386
        %v4389 = vshll.u32 %v4222, 16
        %v4391 = vrot.slane %v4389, 1
        %v4392 = vsel %vm1066, %v4387, %v4391
        %v4394 = vshrl.u32 %v4175, 16
        %v4396 = vshll.u32 %v4175, 16
        %v4398 = vrot.slane %v4396, 1
        %v4399 = vor.u32 %v4394, %v4398
        %v4401 = vshll.u32 %v4223, 16
        %v4403 = vrot.slane %v4401, 1
        %v4404 = vsel %vm1066, %v4399, %v4403
        %v4406 = vshrl.u32 %v4176, 16
        %v4408 = vshll.u32 %v4176, 16
        %v4410 = vrot.slane %v4408, 1
        %v4411 = vor.u32 %v4406, %v4410
        %v4413 = vshll.u32 %v4224, 16
        %v4415 = vrot.slane %v4413, 1
        %v4416 = vsel %vm1066, %v4411, %v4415
        %4417 = vrot.lane.b32.xlu0 %v4236, 64
        %v4418 = vpop.permute.xlu0 %4417
        %4419 = vrot.lane.b32.xlu0 %v4248, 64
        %v4420 = vpop.permute.xlu0 %4419
        %4421 = vrot.lane.b32.xlu0 %v4260, 64
        %v4422 = vpop.permute.xlu0 %4421
        %4423 = vrot.lane.b32.xlu0 %v4272, 64
        %v4424 = vpop.permute.xlu0 %4423
        %4425 = vrot.lane.b32.xlu0 %v4284, 64
        %v4426 = vpop.permute.xlu0 %4425
        %4427 = vrot.lane.b32.xlu0 %v4296, 64
        %v4428 = vpop.permute.xlu0 %4427
        %4429 = vrot.lane.b32.xlu0 %v4308, 64
        %v4430 = vpop.permute.xlu0 %4429
        %4431 = vrot.lane.b32.xlu0 %v4320, 64
        %v4432 = vpop.permute.xlu0 %4431
        %4433 = vrot.lane.b32.xlu0 %v4332, 64
        %v4434 = vpop.permute.xlu0 %4433
        %4435 = vrot.lane.b32.xlu0 %v4344, 64
        %v4436 = vpop.permute.xlu0 %4435
        %4437 = vrot.lane.b32.xlu0 %v4356, 64
        %v4438 = vpop.permute.xlu0 %4437
        %4439 = vrot.lane.b32.xlu0 %v4368, 64
        %v4440 = vpop.permute.xlu0 %4439
        %4441 = vrot.lane.b32.xlu0 %v4380, 64
        %v4442 = vpop.permute.xlu0 %4441
        %4443 = vrot.lane.b32.xlu0 %v4392, 64
        %v4444 = vpop.permute.xlu0 %4443
        %4445 = vrot.lane.b32.xlu0 %v4404, 64
        %v4446 = vpop.permute.xlu0 %4445
        %4447 = vrot.lane.b32.xlu0 %v4416, 64
        %v4448 = vpop.permute.xlu0 %4447
        %v4449 = vrot.slane %v4161, 1
        %v4450 = vrot.slane %v4209, 1
        %v4451 = vsel %vm1291, %v4449, %v4450
        %v4452 = vrot.slane %v4162, 1
        %v4453 = vrot.slane %v4210, 1
        %v4454 = vsel %vm1291, %v4452, %v4453
        %v4455 = vrot.slane %v4163, 1
        %v4456 = vrot.slane %v4211, 1
        %v4457 = vsel %vm1291, %v4455, %v4456
        %v4458 = vrot.slane %v4164, 1
        %v4459 = vrot.slane %v4212, 1
        %v4460 = vsel %vm1291, %v4458, %v4459
        %v4461 = vrot.slane %v4165, 1
        %v4462 = vrot.slane %v4213, 1
        %v4463 = vsel %vm1291, %v4461, %v4462
        %v4464 = vrot.slane %v4166, 1
        %v4465 = vrot.slane %v4214, 1
        %v4466 = vsel %vm1291, %v4464, %v4465
        %v4467 = vrot.slane %v4167, 1
        %v4468 = vrot.slane %v4215, 1
        %v4469 = vsel %vm1291, %v4467, %v4468
        %v4470 = vrot.slane %v4168, 1
        %v4471 = vrot.slane %v4216, 1
        %v4472 = vsel %vm1291, %v4470, %v4471
        %v4473 = vrot.slane %v4169, 1
        %v4474 = vrot.slane %v4217, 1
        %v4475 = vsel %vm1291, %v4473, %v4474
        %v4476 = vrot.slane %v4170, 1
        %v4477 = vrot.slane %v4218, 1
        %v4478 = vsel %vm1291, %v4476, %v4477
        %v4479 = vrot.slane %v4171, 1
        %v4480 = vrot.slane %v4219, 1
        %v4481 = vsel %vm1291, %v4479, %v4480
        %v4482 = vrot.slane %v4172, 1
        %v4483 = vrot.slane %v4220, 1
        %v4484 = vsel %vm1291, %v4482, %v4483
        %v4485 = vrot.slane %v4173, 1
        %v4486 = vrot.slane %v4221, 1
        %v4487 = vsel %vm1291, %v4485, %v4486
        %v4488 = vrot.slane %v4174, 1
        %v4489 = vrot.slane %v4222, 1
        %v4490 = vsel %vm1291, %v4488, %v4489
        %v4491 = vrot.slane %v4175, 1
        %v4492 = vrot.slane %v4223, 1
        %v4493 = vsel %vm1291, %v4491, %v4492
        %v4494 = vrot.slane %v4176, 1
        %v4495 = vrot.slane %v4224, 1
        %v4496 = vsel %vm1291, %v4494, %v4495
        %v4498 = vsel %vm1340, %v4161, %v4418
        %v4501 = vsel %vm1340, %v4162, %v4420
        %v4504 = vsel %vm1340, %v4163, %v4422
        %v4507 = vsel %vm1340, %v4164, %v4424
        %v4510 = vsel %vm1340, %v4165, %v4426
        %v4513 = vsel %vm1340, %v4166, %v4428
        %v4516 = vsel %vm1340, %v4167, %v4430
        %v4519 = vsel %vm1340, %v4168, %v4432
        %v4522 = vsel %vm1340, %v4169, %v4434
        %v4525 = vsel %vm1340, %v4170, %v4436
        %v4528 = vsel %vm1340, %v4171, %v4438
        %v4531 = vsel %vm1340, %v4172, %v4440
        %v4534 = vsel %vm1340, %v4173, %v4442
        %v4537 = vsel %vm1340, %v4174, %v4444
        %v4540 = vsel %vm1340, %v4175, %v4446
        %v4543 = vsel %vm1340, %v4176, %v4448
        %v4545 = vld [vmem:[%s3] sm:$0xf]
        %v4546 = vld [vmem:[%s3 + $0x4] sm:$0xf]
        %v4547 = vld [vmem:[%s3 + $0x8] sm:$0xf]
        %v4548 = vld [vmem:[%s3 + $0xc] sm:$0xf]
        %v4549 = vld [vmem:[%s3 + $0x10] sm:$0xf]
        %v4550 = vld [vmem:[%s3 + $0x14] sm:$0xf]
        %v4551 = vld [vmem:[%s3 + $0x18] sm:$0xf]
        %v4552 = vld [vmem:[%s3 + $0x1c] sm:$0xf]
        %v4553 = vld [vmem:[%s3 + $0x20] sm:$0xf]
        %v4554 = vld [vmem:[%s3 + $0x24] sm:$0xf]
        %v4555 = vld [vmem:[%s3 + $0x28] sm:$0xf]
        %v4556 = vld [vmem:[%s3 + $0x2c] sm:$0xf]
        %v4557 = vld [vmem:[%s3 + $0x30] sm:$0xf]
        %v4558 = vld [vmem:[%s3 + $0x34] sm:$0xf]
        %v4559 = vld [vmem:[%s3 + $0x38] sm:$0xf]
        %v4560 = vld [vmem:[%s3 + $0x3c] sm:$0xf]
        %v4561 = vld [vmem:[%s3 + $0x40] sm:$0xf]
        %v4562 = vld [vmem:[%s3 + $0x44] sm:$0xf]
        %v4563 = vld [vmem:[%s3 + $0x48] sm:$0xf]
        %v4564 = vld [vmem:[%s3 + $0x4c] sm:$0xf]
        %v4565 = vld [vmem:[%s3 + $0x50] sm:$0xf]
        %v4566 = vld [vmem:[%s3 + $0x54] sm:$0xf]
        %v4567 = vld [vmem:[%s3 + $0x58] sm:$0xf]
        %v4568 = vld [vmem:[%s3 + $0x5c] sm:$0xf]
        %v4569 = vld [vmem:[%s3936] sm:$0xf]
        %v4570 = vld [vmem:[%s3936 + $0x4] sm:$0xf]
        %v4571 = vld [vmem:[%s3936 + $0x8] sm:$0x1]
        %v4572 = vld [vmem:[%s3936 + $0xc] sm:$0xf]
        %v4573 = vld [vmem:[%s3936 + $0x10] sm:$0xf]
        %v4574 = vld [vmem:[%s3936 + $0x14] sm:$0x1]
        %v4575 = vld [vmem:[%s3936 + $0x18] sm:$0xf]
        %v4576 = vld [vmem:[%s3936 + $0x1c] sm:$0xf]
        %v4577 = vld [vmem:[%s3936 + $0x20] sm:$0x1]
        %v4578 = vld [vmem:[%s3936 + $0x24] sm:$0xf]
        %v4579 = vld [vmem:[%s3936 + $0x28] sm:$0xf]
        %v4580 = vld [vmem:[%s3936 + $0x2c] sm:$0x1]
        %v4581 = vld [vmem:[%s3936 + $0x30] sm:$0xf]
        %v4582 = vld [vmem:[%s3936 + $0x34] sm:$0xf]
        %v4583 = vld [vmem:[%s3936 + $0x38] sm:$0x1]
        %v4584 = vld [vmem:[%s3936 + $0x3c] sm:$0xf]
        %v4585 = vld [vmem:[%s3936 + $0x40] sm:$0xf]
        %v4586 = vld [vmem:[%s3936 + $0x44] sm:$0x1]
        %v4587 = vld [vmem:[%s3936 + $0x48] sm:$0xf]
        %v4588 = vld [vmem:[%s3936 + $0x4c] sm:$0xf]
        %v4589 = vld [vmem:[%s3936 + $0x50] sm:$0x1]
        %v4590 = vld [vmem:[%s3936 + $0x54] sm:$0xf]
        %v4591 = vld [vmem:[%s3936 + $0x58] sm:$0xf]
        %v4592 = vld [vmem:[%s3936 + $0x5c] sm:$0x1]
        %v4593 = vld [vmem:[%s3936 + $0x60] sm:$0xf]
        %v4594 = vld [vmem:[%s3936 + $0x64] sm:$0xf]
        %v4595 = vld [vmem:[%s3936 + $0x68] sm:$0x1]
        %v4596 = vld [vmem:[%s3936 + $0x6c] sm:$0xf]
        %v4597 = vld [vmem:[%s3936 + $0x70] sm:$0xf]
        %v4598 = vld [vmem:[%s3936 + $0x74] sm:$0x1]
        %v4599 = vld [vmem:[%s3936 + $0x78] sm:$0xf]
        %v4600 = vld [vmem:[%s3936 + $0x7c] sm:$0xf]
        %v4601 = vld [vmem:[%s3936 + $0x80] sm:$0x1]
        %v4602 = vld [vmem:[%s3936 + $0x84] sm:$0xf]
        %v4603 = vld [vmem:[%s3936 + $0x88] sm:$0xf]
        %v4604 = vld [vmem:[%s3936 + $0x8c] sm:$0x1]
        %v4605 = vld [vmem:[%s3936 + $0x90] sm:$0xf]
        %v4606 = vld [vmem:[%s3936 + $0x94] sm:$0xf]
        %v4607 = vld [vmem:[%s3936 + $0x98] sm:$0x1]
        %v4608 = vld [vmem:[%s3936 + $0x9c] sm:$0xf]
        %v4609 = vld [vmem:[%s3936 + $0xa0] sm:$0xf]
        %v4610 = vld [vmem:[%s3936 + $0xa4] sm:$0x1]
        %v4611 = vld [vmem:[%s3936 + $0xa8] sm:$0xf]
        %v4612 = vld [vmem:[%s3936 + $0xac] sm:$0xf]
        %v4613 = vld [vmem:[%s3936 + $0xb0] sm:$0x1]
        %v4614 = vld [vmem:[%s3936 + $0xb4] sm:$0xf]
        %v4615 = vld [vmem:[%s3936 + $0xb8] sm:$0xf]
        %v4616 = vld [vmem:[%s3936 + $0xbc] sm:$0x1]
        %v4649 = vunpack.c.l.b16 %v4569
        %v4650 = vunpack.c.l.b16 %v4570
        %v4651 = vunpack.c.l.b16 %v4572
        %v4652 = vunpack.c.l.b16 %v4573
        %v4653 = vunpack.c.l.b16 %v4575
        %v4654 = vunpack.c.l.b16 %v4576
        %v4655 = vunpack.c.l.b16 %v4578
        %v4656 = vunpack.c.l.b16 %v4579
        %v4657 = vunpack.c.l.b16 %v4581
        %v4658 = vunpack.c.l.b16 %v4582
        %v4659 = vunpack.c.l.b16 %v4584
        %v4660 = vunpack.c.l.b16 %v4585
        %v4661 = vunpack.c.l.b16 %v4587
        %v4662 = vunpack.c.l.b16 %v4588
        %v4663 = vunpack.c.l.b16 %v4590
        %v4664 = vunpack.c.l.b16 %v4591
        %v4665 = vunpack.c.l.b16 %v4593
        %v4666 = vunpack.c.l.b16 %v4594
        %v4667 = vunpack.c.l.b16 %v4596
        %v4668 = vunpack.c.l.b16 %v4597
        %v4669 = vunpack.c.l.b16 %v4599
        %v4670 = vunpack.c.l.b16 %v4600
        %v4671 = vunpack.c.l.b16 %v4602
        %v4672 = vunpack.c.l.b16 %v4603
        %v4673 = vunpack.c.l.b16 %v4605
        %v4674 = vunpack.c.l.b16 %v4606
        %v4675 = vunpack.c.l.b16 %v4608
        %v4676 = vunpack.c.l.b16 %v4609
        %v4677 = vunpack.c.l.b16 %v4611
        %v4678 = vunpack.c.l.b16 %v4612
        %v4679 = vunpack.c.l.b16 %v4614
        %v4680 = vunpack.c.l.b16 %v4615
        %v4681 = vpack.c.b16 %v4650, %v4649
        %v4682 = vpack.c.b16 %v4652, %v4651
        %v4683 = vpack.c.b16 %v4654, %v4653
        %v4684 = vpack.c.b16 %v4656, %v4655
        %v4685 = vpack.c.b16 %v4658, %v4657
        %v4686 = vpack.c.b16 %v4660, %v4659
        %v4687 = vpack.c.b16 %v4662, %v4661
        %v4688 = vpack.c.b16 %v4664, %v4663
        %v4689 = vpack.c.b16 %v4666, %v4665
        %v4690 = vpack.c.b16 %v4668, %v4667
        %v4691 = vpack.c.b16 %v4670, %v4669
        %v4692 = vpack.c.b16 %v4672, %v4671
        %v4693 = vpack.c.b16 %v4674, %v4673
        %v4694 = vpack.c.b16 %v4676, %v4675
        %v4695 = vpack.c.b16 %v4678, %v4677
        %v4696 = vpack.c.b16 %v4680, %v4679
        %v4713 = vunpack.c.l.b16 %v4571
        %v4714 = vunpack.c.l.b16 %v4574
        %v4715 = vunpack.c.l.b16 %v4577
        %v4716 = vunpack.c.l.b16 %v4580
        %v4717 = vunpack.c.l.b16 %v4583
        %v4718 = vunpack.c.l.b16 %v4586
        %v4719 = vunpack.c.l.b16 %v4589
        %v4720 = vunpack.c.l.b16 %v4592
        %v4721 = vunpack.c.l.b16 %v4595
        %v4722 = vunpack.c.l.b16 %v4598
        %v4723 = vunpack.c.l.b16 %v4601
        %v4724 = vunpack.c.l.b16 %v4604
        %v4725 = vunpack.c.l.b16 %v4607
        %v4726 = vunpack.c.l.b16 %v4610
        %v4727 = vunpack.c.l.b16 %v4613
        %v4728 = vunpack.c.l.b16 %v4616
        %v4729 = vpack.c.b16 %v4713, %v4713
        %v4730 = vpack.c.b16 %v4714, %v4714
        %v4731 = vpack.c.b16 %v4715, %v4715
        %v4732 = vpack.c.b16 %v4716, %v4716
        %v4733 = vpack.c.b16 %v4717, %v4717
        %v4734 = vpack.c.b16 %v4718, %v4718
        %v4735 = vpack.c.b16 %v4719, %v4719
        %v4736 = vpack.c.b16 %v4720, %v4720
        %v4737 = vpack.c.b16 %v4721, %v4721
        %v4738 = vpack.c.b16 %v4722, %v4722
        %v4739 = vpack.c.b16 %v4723, %v4723
        %v4740 = vpack.c.b16 %v4724, %v4724
        %v4741 = vpack.c.b16 %v4725, %v4725
        %v4742 = vpack.c.b16 %v4726, %v4726
        %v4743 = vpack.c.b16 %v4727, %v4727
        %v4744 = vpack.c.b16 %v4728, %v4728
        %v4746 = vshrl.u32 %v4681, 16
        %v4748 = vshll.u32 %v4681, 16
        %v4750 = vrot.slane %v4748, 1
        %v4751 = vor.u32 %v4746, %v4750
        %v4753 = vshll.u32 %v4729, 16
        %v4755 = vrot.slane %v4753, 1
        %v4756 = vsel %vm1066, %v4751, %v4755
        %v4758 = vshrl.u32 %v4682, 16
        %v4760 = vshll.u32 %v4682, 16
        %v4762 = vrot.slane %v4760, 1
        %v4763 = vor.u32 %v4758, %v4762
        %v4765 = vshll.u32 %v4730, 16
        %v4767 = vrot.slane %v4765, 1
        %v4768 = vsel %vm1066, %v4763, %v4767
        %v4770 = vshrl.u32 %v4683, 16
        %v4772 = vshll.u32 %v4683, 16
        %v4774 = vrot.slane %v4772, 1
        %v4775 = vor.u32 %v4770, %v4774
        %v4777 = vshll.u32 %v4731, 16
        %v4779 = vrot.slane %v4777, 1
        %v4780 = vsel %vm1066, %v4775, %v4779
        %v4782 = vshrl.u32 %v4684, 16
        %v4784 = vshll.u32 %v4684, 16
        %v4786 = vrot.slane %v4784, 1
        %v4787 = vor.u32 %v4782, %v4786
        %v4789 = vshll.u32 %v4732, 16
        %v4791 = vrot.slane %v4789, 1
        %v4792 = vsel %vm1066, %v4787, %v4791
        %v4794 = vshrl.u32 %v4685, 16
        %v4796 = vshll.u32 %v4685, 16
        %v4798 = vrot.slane %v4796, 1
        %v4799 = vor.u32 %v4794, %v4798
        %v4801 = vshll.u32 %v4733, 16
        %v4803 = vrot.slane %v4801, 1
        %v4804 = vsel %vm1066, %v4799, %v4803
        %v4806 = vshrl.u32 %v4686, 16
        %v4808 = vshll.u32 %v4686, 16
        %v4810 = vrot.slane %v4808, 1
        %v4811 = vor.u32 %v4806, %v4810
        %v4813 = vshll.u32 %v4734, 16
        %v4815 = vrot.slane %v4813, 1
        %v4816 = vsel %vm1066, %v4811, %v4815
        %v4818 = vshrl.u32 %v4687, 16
        %v4820 = vshll.u32 %v4687, 16
        %v4822 = vrot.slane %v4820, 1
        %v4823 = vor.u32 %v4818, %v4822
        %v4825 = vshll.u32 %v4735, 16
        %v4827 = vrot.slane %v4825, 1
        %v4828 = vsel %vm1066, %v4823, %v4827
        %v4830 = vshrl.u32 %v4688, 16
        %v4832 = vshll.u32 %v4688, 16
        %v4834 = vrot.slane %v4832, 1
        %v4835 = vor.u32 %v4830, %v4834
        %v4837 = vshll.u32 %v4736, 16
        %v4839 = vrot.slane %v4837, 1
        %v4840 = vsel %vm1066, %v4835, %v4839
        %v4842 = vshrl.u32 %v4689, 16
        %v4844 = vshll.u32 %v4689, 16
        %v4846 = vrot.slane %v4844, 1
        %v4847 = vor.u32 %v4842, %v4846
        %v4849 = vshll.u32 %v4737, 16
        %v4851 = vrot.slane %v4849, 1
        %v4852 = vsel %vm1066, %v4847, %v4851
        %v4854 = vshrl.u32 %v4690, 16
        %v4856 = vshll.u32 %v4690, 16
        %v4858 = vrot.slane %v4856, 1
        %v4859 = vor.u32 %v4854, %v4858
        %v4861 = vshll.u32 %v4738, 16
        %v4863 = vrot.slane %v4861, 1
        %v4864 = vsel %vm1066, %v4859, %v4863
        %v4866 = vshrl.u32 %v4691, 16
        %v4868 = vshll.u32 %v4691, 16
        %v4870 = vrot.slane %v4868, 1
        %v4871 = vor.u32 %v4866, %v4870
        %v4873 = vshll.u32 %v4739, 16
        %v4875 = vrot.slane %v4873, 1
        %v4876 = vsel %vm1066, %v4871, %v4875
        %v4878 = vshrl.u32 %v4692, 16
        %v4880 = vshll.u32 %v4692, 16
        %v4882 = vrot.slane %v4880, 1
        %v4883 = vor.u32 %v4878, %v4882
        %v4885 = vshll.u32 %v4740, 16
        %v4887 = vrot.slane %v4885, 1
        %v4888 = vsel %vm1066, %v4883, %v4887
        %v4890 = vshrl.u32 %v4693, 16
        %v4892 = vshll.u32 %v4693, 16
        %v4894 = vrot.slane %v4892, 1
        %v4895 = vor.u32 %v4890, %v4894
        %v4897 = vshll.u32 %v4741, 16
        %v4899 = vrot.slane %v4897, 1
        %v4900 = vsel %vm1066, %v4895, %v4899
        %v4902 = vshrl.u32 %v4694, 16
        %v4904 = vshll.u32 %v4694, 16
        %v4906 = vrot.slane %v4904, 1
        %v4907 = vor.u32 %v4902, %v4906
        %v4909 = vshll.u32 %v4742, 16
        %v4911 = vrot.slane %v4909, 1
        %v4912 = vsel %vm1066, %v4907, %v4911
        %v4914 = vshrl.u32 %v4695, 16
        %v4916 = vshll.u32 %v4695, 16
        %v4918 = vrot.slane %v4916, 1
        %v4919 = vor.u32 %v4914, %v4918
        %v4921 = vshll.u32 %v4743, 16
        %v4923 = vrot.slane %v4921, 1
        %v4924 = vsel %vm1066, %v4919, %v4923
        %v4926 = vshrl.u32 %v4696, 16
        %v4928 = vshll.u32 %v4696, 16
        %v4930 = vrot.slane %v4928, 1
        %v4931 = vor.u32 %v4926, %v4930
        %v4933 = vshll.u32 %v4744, 16
        %v4935 = vrot.slane %v4933, 1
        %v4936 = vsel %vm1066, %v4931, %v4935
        %4937 = vrot.lane.b32.xlu0 %v4756, 64
        %v4938 = vpop.permute.xlu0 %4937
        %4939 = vrot.lane.b32.xlu0 %v4768, 64
        %v4940 = vpop.permute.xlu0 %4939
        %4941 = vrot.lane.b32.xlu0 %v4780, 64
        %v4942 = vpop.permute.xlu0 %4941
        %4943 = vrot.lane.b32.xlu0 %v4792, 64
        %v4944 = vpop.permute.xlu0 %4943
        %4945 = vrot.lane.b32.xlu0 %v4804, 64
        %v4946 = vpop.permute.xlu0 %4945
        %4947 = vrot.lane.b32.xlu0 %v4816, 64
        %v4948 = vpop.permute.xlu0 %4947
        %4949 = vrot.lane.b32.xlu0 %v4828, 64
        %v4950 = vpop.permute.xlu0 %4949
        %4951 = vrot.lane.b32.xlu0 %v4840, 64
        %v4952 = vpop.permute.xlu0 %4951
        %4953 = vrot.lane.b32.xlu0 %v4852, 64
        %v4954 = vpop.permute.xlu0 %4953
        %4955 = vrot.lane.b32.xlu0 %v4864, 64
        %v4956 = vpop.permute.xlu0 %4955
        %4957 = vrot.lane.b32.xlu0 %v4876, 64
        %v4958 = vpop.permute.xlu0 %4957
        %4959 = vrot.lane.b32.xlu0 %v4888, 64
        %v4960 = vpop.permute.xlu0 %4959
        %4961 = vrot.lane.b32.xlu0 %v4900, 64
        %v4962 = vpop.permute.xlu0 %4961
        %4963 = vrot.lane.b32.xlu0 %v4912, 64
        %v4964 = vpop.permute.xlu0 %4963
        %4965 = vrot.lane.b32.xlu0 %v4924, 64
        %v4966 = vpop.permute.xlu0 %4965
        %4967 = vrot.lane.b32.xlu0 %v4936, 64
        %v4968 = vpop.permute.xlu0 %4967
        %v4969 = vrot.slane %v4681, 1
        %v4970 = vrot.slane %v4729, 1
        %v4971 = vsel %vm1291, %v4969, %v4970
        %v4972 = vrot.slane %v4682, 1
        %v4973 = vrot.slane %v4730, 1
        %v4974 = vsel %vm1291, %v4972, %v4973
        %v4975 = vrot.slane %v4683, 1
        %v4976 = vrot.slane %v4731, 1
        %v4977 = vsel %vm1291, %v4975, %v4976
        %v4978 = vrot.slane %v4684, 1
        %v4979 = vrot.slane %v4732, 1
        %v4980 = vsel %vm1291, %v4978, %v4979
        %v4981 = vrot.slane %v4685, 1
        %v4982 = vrot.slane %v4733, 1
        %v4983 = vsel %vm1291, %v4981, %v4982
        %v4984 = vrot.slane %v4686, 1
        %v4985 = vrot.slane %v4734, 1
        %v4986 = vsel %vm1291, %v4984, %v4985
        %v4987 = vrot.slane %v4687, 1
        %v4988 = vrot.slane %v4735, 1
        %v4989 = vsel %vm1291, %v4987, %v4988
        %v4990 = vrot.slane %v4688, 1
        %v4991 = vrot.slane %v4736, 1
        %v4992 = vsel %vm1291, %v4990, %v4991
        %v4993 = vrot.slane %v4689, 1
        %v4994 = vrot.slane %v4737, 1
        %v4995 = vsel %vm1291, %v4993, %v4994
        %v4996 = vrot.slane %v4690, 1
        %v4997 = vrot.slane %v4738, 1
        %v4998 = vsel %vm1291, %v4996, %v4997
        %v4999 = vrot.slane %v4691, 1
        %v5000 = vrot.slane %v4739, 1
        %v5001 = vsel %vm1291, %v4999, %v5000
        %v5002 = vrot.slane %v4692, 1
        %v5003 = vrot.slane %v4740, 1
        %v5004 = vsel %vm1291, %v5002, %v5003
        %v5005 = vrot.slane %v4693, 1
        %v5006 = vrot.slane %v4741, 1
        %v5007 = vsel %vm1291, %v5005, %v5006
        %v5008 = vrot.slane %v4694, 1
        %v5009 = vrot.slane %v4742, 1
        %v5010 = vsel %vm1291, %v5008, %v5009
        %v5011 = vrot.slane %v4695, 1
        %v5012 = vrot.slane %v4743, 1
        %v5013 = vsel %vm1291, %v5011, %v5012
        %v5014 = vrot.slane %v4696, 1
        %v5015 = vrot.slane %v4744, 1
        %v5016 = vsel %vm1291, %v5014, %v5015
        %v5018 = vsel %vm1340, %v4681, %v4938
        %v5021 = vsel %vm1340, %v4682, %v4940
        %v5024 = vsel %vm1340, %v4683, %v4942
        %v5027 = vsel %vm1340, %v4684, %v4944
        %v5030 = vsel %vm1340, %v4685, %v4946
        %v5033 = vsel %vm1340, %v4686, %v4948
        %v5036 = vsel %vm1340, %v4687, %v4950
        %v5039 = vsel %vm1340, %v4688, %v4952
        %v5042 = vsel %vm1340, %v4689, %v4954
        %v5045 = vsel %vm1340, %v4690, %v4956
        %v5048 = vsel %vm1340, %v4691, %v4958
        %v5051 = vsel %vm1340, %v4692, %v4960
        %v5054 = vsel %vm1340, %v4693, %v4962
        %v5057 = vsel %vm1340, %v4694, %v4964
        %v5060 = vsel %vm1340, %v4695, %v4966
        %v5063 = vsel %vm1340, %v4696, %v4968
        %s5065 = scalar_lea.vmem %s3, 96
        %v5066 = vld [vmem:[%s5065] sm:$0xf]
        %v5067 = vld [vmem:[%s5065 + $0x4] sm:$0xf]
        %v5068 = vld [vmem:[%s5065 + $0x8] sm:$0xf]
        %v5069 = vld [vmem:[%s5065 + $0xc] sm:$0xf]
        %v5070 = vld [vmem:[%s5065 + $0x10] sm:$0xf]
        %v5071 = vld [vmem:[%s5065 + $0x14] sm:$0xf]
        %v5072 = vld [vmem:[%s5065 + $0x18] sm:$0xf]
        %v5073 = vld [vmem:[%s5065 + $0x1c] sm:$0xf]
        %v5074 = vld [vmem:[%s5065 + $0x20] sm:$0xf]
        %v5075 = vld [vmem:[%s5065 + $0x24] sm:$0xf]
        %v5076 = vld [vmem:[%s5065 + $0x28] sm:$0xf]
        %v5077 = vld [vmem:[%s5065 + $0x2c] sm:$0xf]
        %v5078 = vld [vmem:[%s5065 + $0x30] sm:$0xf]
        %v5079 = vld [vmem:[%s5065 + $0x34] sm:$0xf]
        %v5080 = vld [vmem:[%s5065 + $0x38] sm:$0xf]
        %v5081 = vld [vmem:[%s5065 + $0x3c] sm:$0xf]
        %v5082 = vld [vmem:[%s5065 + $0x40] sm:$0xf]
        %v5083 = vld [vmem:[%s5065 + $0x44] sm:$0xf]
        %v5084 = vld [vmem:[%s5065 + $0x48] sm:$0xf]
        %v5085 = vld [vmem:[%s5065 + $0x4c] sm:$0xf]
        %v5086 = vld [vmem:[%s5065 + $0x50] sm:$0xf]
        %v5087 = vld [vmem:[%s5065 + $0x54] sm:$0xf]
        %v5088 = vld [vmem:[%s5065 + $0x58] sm:$0xf]
        %v5089 = vld [vmem:[%s5065 + $0x5c] sm:$0xf]
        %v5114 = vunpack.c.l.b16 %v5066
        %v5115 = vunpack.c.l.b16 %v5067
        %v5116 = vunpack.c.l.b16 %v5068
        %v5117 = vunpack.c.l.b16 %v5069
        %v5118 = vunpack.c.l.b16 %v5070
        %v5119 = vunpack.c.l.b16 %v5071
        %v5120 = vunpack.c.l.b16 %v5072
        %v5121 = vunpack.c.l.b16 %v5073
        %v5122 = vunpack.c.l.b16 %v5074
        %v5123 = vunpack.c.l.b16 %v5075
        %v5124 = vunpack.c.l.b16 %v5076
        %v5125 = vunpack.c.l.b16 %v5077
        %v5126 = vunpack.c.l.b16 %v5078
        %v5127 = vunpack.c.l.b16 %v5079
        %v5128 = vunpack.c.l.b16 %v5080
        %v5129 = vunpack.c.l.b16 %v5081
        %v5130 = vunpack.c.l.b16 %v5082
        %v5131 = vunpack.c.l.b16 %v5083
        %v5132 = vunpack.c.l.b16 %v5084
        %v5133 = vunpack.c.l.b16 %v5085
        %v5134 = vunpack.c.l.b16 %v5086
        %v5135 = vunpack.c.l.b16 %v5087
        %v5136 = vunpack.c.l.b16 %v5088
        %v5137 = vunpack.c.l.b16 %v5089
        %v5138 = vpack.c.b16 %v5115, %v5114
        %v5139 = vpack.c.b16 %v5117, %v5116
        %v5140 = vpack.c.b16 %v5119, %v5118
        %v5141 = vpack.c.b16 %v5121, %v5120
        %v5142 = vpack.c.b16 %v5123, %v5122
        %v5143 = vpack.c.b16 %v5125, %v5124
        %v5144 = vpack.c.b16 %v5127, %v5126
        %v5145 = vpack.c.b16 %v5129, %v5128
        %v5146 = vpack.c.b16 %v5131, %v5130
        %v5147 = vpack.c.b16 %v5133, %v5132
        %v5148 = vpack.c.b16 %v5135, %v5134
        %v5149 = vpack.c.b16 %v5137, %v5136
        %v5163 = vsel %vm1340, %v4971, 0
        %v5166 = vsel %vm1340, %v4974, 0
        %v5169 = vsel %vm1340, %v4977, 0
        %v5172 = vsel %vm1340, %v4980, 0
        %v5175 = vsel %vm1340, %v4983, 0
        %v5178 = vsel %vm1340, %v4986, 0
        %v5181 = vsel %vm1340, %v4989, 0
        %v5184 = vsel %vm1340, %v4992, 0
        %v5187 = vsel %vm1340, %v4995, 0
        %v5190 = vsel %vm1340, %v4998, 0
        %v5193 = vsel %vm1340, %v5001, 0
        %v5196 = vsel %vm1340, %v5004, 0
        %v5199 = vsel %vm1340, %v5007, 0
        %v5202 = vsel %vm1340, %v5010, 0
        %v5205 = vsel %vm1340, %v5013, 0
        %v5208 = vsel %vm1340, %v5016, 0
        %5210 = vmatprep.subr.bf16.mxu0 0
        %5211 = vmatpush1.bf16.msra.mxu0 %v5138
        %5212 = vmatprep.subr.bf16.mxu0 0
        %5213 = vmatpush1.bf16.msra.mxu0 %v5139
        %5214 = vmatprep.subr.bf16.mxu0 0
        %5215 = vmatpush1.bf16.msra.mxu0 %v5140
        %5216 = vmatprep.subr.bf16.mxu0 0
        %5217 = vmatpush1.bf16.msra.mxu0 %v5141
        %5218 = vmatprep.subr.bf16.mxu0 0
        %5219 = vmatpush1.bf16.msra.mxu0 %v5142
        %5220 = vmatprep.subr.bf16.mxu0 0
        %5221 = vmatpush1.bf16.msra.mxu0 %v5143
        %5222 = vmatprep.subr.bf16.mxu0 0
        %5223 = vmatpush1.bf16.msra.mxu0 %v5144
        %5224 = vmatprep.subr.bf16.mxu0 0
        %5225 = vmatpush1.bf16.msra.mxu0 %v5145
        %5226 = vmatprep.subr.bf16.mxu0 0
        %5227 = vmatpush1.bf16.msra.mxu0 %v5146
        %5228 = vmatprep.subr.bf16.mxu0 0
        %5229 = vmatpush1.bf16.msra.mxu0 %v5147
        %5230 = vmatprep.subr.bf16.mxu0 0
        %5231 = vmatpush1.bf16.msra.mxu0 %v5148
        %5232 = vmatprep.subr.bf16.mxu0 0
        %5233 = vmatpush1.bf16.msra.mxu0 %v5149
        %5234 = vmatprep.subr.bf16.mxu0 0
        %5235 = vmatpush1.bf16.msra.mxu0 0
        %5236 = vmatprep.subr.bf16.mxu0 0
        %5237 = vmatpush1.bf16.msra.mxu0 0
        %5238 = vmatprep.subr.bf16.mxu0 0
        %5239 = vmatpush1.bf16.msra.mxu0 0
        %5240 = vmatprep.subr.bf16.mxu0 0
        %5241 = vmatpush1.bf16.msra.mxu0 0
        %5242 = vmatprep.mubr.bf16.mxu0 %v5163
        %5243 = vmatmul.mubr.bf16.gmra.mrb[0].mxu0 %v5018
        %v5244 = vpop.f32.mrb[0].mxu0
        %v5245 = vadd.f32 0.0, %v5244
        %v5246 = vpop.f32.mrb[0].mxu0
        %v5247 = vpop.f32.mrb[0].mxu0
        %v5248 = vadd.f32 0.0, %v5247
        %v5249 = vpop.f32.mrb[0].mxu0
        %5250 = vmatprep.mubr.bf16.mxu0 %v5166
        %5251 = vmatmul.mubr.bf16.gmra.mrb[0].mxu0 %v5021
        %v5252 = vpop.f32.mrb[0].mxu0
        %v5253 = vadd.f32 0.0, %v5252
        %v5254 = vpop.f32.mrb[0].mxu0
        %v5255 = vpop.f32.mrb[0].mxu0
        %v5256 = vadd.f32 0.0, %v5255
        %v5257 = vpop.f32.mrb[0].mxu0
        %5258 = vmatprep.mubr.bf16.mxu0 %v5169
        %5259 = vmatmul.mubr.bf16.gmra.mrb[0].mxu0 %v5024
        %v5260 = vpop.f32.mrb[0].mxu0
        %v5261 = vadd.f32 0.0, %v5260
        %v5262 = vpop.f32.mrb[0].mxu0
        %v5263 = vpop.f32.mrb[0].mxu0
        %v5264 = vadd.f32 0.0, %v5263
        %v5265 = vpop.f32.mrb[0].mxu0
        %5266 = vmatprep.mubr.bf16.mxu0 %v5172
        %5267 = vmatmul.mubr.bf16.gmra.mrb[0].mxu0 %v5027
        %v5268 = vpop.f32.mrb[0].mxu0
        %v5269 = vadd.f32 0.0, %v5268
        %v5270 = vpop.f32.mrb[0].mxu0
        %v5271 = vpop.f32.mrb[0].mxu0
        %v5272 = vadd.f32 0.0, %v5271
        %v5273 = vpop.f32.mrb[0].mxu0
        %5274 = vmatprep.mubr.bf16.mxu0 %v5175
        %5275 = vmatmul.mubr.bf16.gmra.mrb[0].mxu0 %v5030
        %v5276 = vpop.f32.mrb[0].mxu0
        %v5277 = vadd.f32 0.0, %v5276
        %v5278 = vpop.f32.mrb[0].mxu0
        %v5279 = vpop.f32.mrb[0].mxu0
        %v5280 = vadd.f32 0.0, %v5279
        %v5281 = vpop.f32.mrb[0].mxu0
        %5282 = vmatprep.mubr.bf16.mxu0 %v5178
        %5283 = vmatmul.mubr.bf16.gmra.mrb[0].mxu0 %v5033
        %v5284 = vpop.f32.mrb[0].mxu0
        %v5285 = vadd.f32 0.0, %v5284
        %v5286 = vpop.f32.mrb[0].mxu0
        %v5287 = vpop.f32.mrb[0].mxu0
        %v5288 = vadd.f32 0.0, %v5287
        %v5289 = vpop.f32.mrb[0].mxu0
        %5290 = vmatprep.mubr.bf16.mxu0 %v5181
        %5291 = vmatmul.mubr.bf16.gmra.mrb[0].mxu0 %v5036
        %v5292 = vpop.f32.mrb[0].mxu0
        %v5293 = vadd.f32 0.0, %v5292
        %v5294 = vpop.f32.mrb[0].mxu0
        %v5295 = vpop.f32.mrb[0].mxu0
        %v5296 = vadd.f32 0.0, %v5295
        %v5297 = vpop.f32.mrb[0].mxu0
        %5298 = vmatprep.mubr.bf16.mxu0 %v5184
        %5299 = vmatmul.mubr.bf16.gmra.mrb[0].mxu0 %v5039
        %v5300 = vpop.f32.mrb[0].mxu0
        %v5301 = vadd.f32 0.0, %v5300
        %v5302 = vpop.f32.mrb[0].mxu0
        %v5303 = vpop.f32.mrb[0].mxu0
        %v5304 = vadd.f32 0.0, %v5303
        %v5305 = vpop.f32.mrb[0].mxu0
        %5306 = vmatprep.mubr.bf16.mxu0 %v5187
        %5307 = vmatmul.mubr.bf16.gmra.mrb[0].mxu0 %v5042
        %v5308 = vpop.f32.mrb[0].mxu0
        %v5309 = vadd.f32 0.0, %v5308
        %v5310 = vpop.f32.mrb[0].mxu0
        %v5311 = vpop.f32.mrb[0].mxu0
        %v5312 = vadd.f32 0.0, %v5311
        %v5313 = vpop.f32.mrb[0].mxu0
        %5314 = vmatprep.mubr.bf16.mxu0 %v5190
        %5315 = vmatmul.mubr.bf16.gmra.mrb[0].mxu0 %v5045
        %v5316 = vpop.f32.mrb[0].mxu0
        %v5317 = vadd.f32 0.0, %v5316
        %v5318 = vpop.f32.mrb[0].mxu0
        %v5319 = vpop.f32.mrb[0].mxu0
        %v5320 = vadd.f32 0.0, %v5319
        %v5321 = vpop.f32.mrb[0].mxu0
        %5322 = vmatprep.mubr.bf16.mxu0 %v5193
        %5323 = vmatmul.mubr.bf16.gmra.mrb[0].mxu0 %v5048
        %v5324 = vpop.f32.mrb[0].mxu0
        %v5325 = vadd.f32 0.0, %v5324
        %v5326 = vpop.f32.mrb[0].mxu0
        %v5327 = vpop.f32.mrb[0].mxu0
        %v5328 = vadd.f32 0.0, %v5327
        %v5329 = vpop.f32.mrb[0].mxu0
        %5330 = vmatprep.mubr.bf16.mxu0 %v5196
        %5331 = vmatmul.mubr.bf16.gmra.mrb[0].mxu0 %v5051
        %v5332 = vpop.f32.mrb[0].mxu0
        %v5333 = vadd.f32 0.0, %v5332
        %v5334 = vpop.f32.mrb[0].mxu0
        %v5335 = vpop.f32.mrb[0].mxu0
        %v5336 = vadd.f32 0.0, %v5335
        %v5337 = vpop.f32.mrb[0].mxu0
        %5338 = vmatprep.mubr.bf16.mxu0 %v5199
        %5339 = vmatmul.mubr.bf16.gmra.mrb[0].mxu0 %v5054
        %v5340 = vpop.f32.mrb[0].mxu0
        %v5341 = vadd.f32 0.0, %v5340
        %v5342 = vpop.f32.mrb[0].mxu0
        %v5343 = vpop.f32.mrb[0].mxu0
        %v5344 = vadd.f32 0.0, %v5343
        %v5345 = vpop.f32.mrb[0].mxu0
        %5346 = vmatprep.mubr.bf16.mxu0 %v5202
        %5347 = vmatmul.mubr.bf16.gmra.mrb[0].mxu0 %v5057
        %v5348 = vpop.f32.mrb[0].mxu0
        %v5349 = vadd.f32 0.0, %v5348
        %v5350 = vpop.f32.mrb[0].mxu0
        %v5351 = vpop.f32.mrb[0].mxu0
        %v5352 = vadd.f32 0.0, %v5351
        %v5353 = vpop.f32.mrb[0].mxu0
        %5354 = vmatprep.mubr.bf16.mxu0 %v5205
        %5355 = vmatmul.mubr.bf16.gmra.mrb[0].mxu0 %v5060
        %v5356 = vpop.f32.mrb[0].mxu0
        %v5357 = vadd.f32 0.0, %v5356
        %v5358 = vpop.f32.mrb[0].mxu0
        %v5359 = vpop.f32.mrb[0].mxu0
        %v5360 = vadd.f32 0.0, %v5359
        %v5361 = vpop.f32.mrb[0].mxu0
        %5362 = vmatprep.mubr.bf16.mxu0 %v5208
        %5363 = vmatmul.mubr.bf16.gmra.mrb[0].mxu0 %v5063
        %v5364 = vpop.f32.mrb[0].mxu0
        %v5365 = vadd.f32 0.0, %v5364
        %v5366 = vpop.f32.mrb[0].mxu0
        %v5367 = vpop.f32.mrb[0].mxu0
        %v5368 = vadd.f32 0.0, %v5367
        %v5369 = vpop.f32.mrb[0].mxu0
        %5370 = vdwg.mxu0
        %v5395 = vunpack.c.l.b16 %v4545
        %v5396 = vunpack.c.l.b16 %v4546
        %v5397 = vunpack.c.l.b16 %v4547
        %v5398 = vunpack.c.l.b16 %v4548
        %v5399 = vunpack.c.l.b16 %v4549
        %v5400 = vunpack.c.l.b16 %v4550
        %v5401 = vunpack.c.l.b16 %v4551
        %v5402 = vunpack.c.l.b16 %v4552
        %v5403 = vunpack.c.l.b16 %v4553
        %v5404 = vunpack.c.l.b16 %v4554
        %v5405 = vunpack.c.l.b16 %v4555
        %v5406 = vunpack.c.l.b16 %v4556
        %v5407 = vunpack.c.l.b16 %v4557
        %v5408 = vunpack.c.l.b16 %v4558
        %v5409 = vunpack.c.l.b16 %v4559
        %v5410 = vunpack.c.l.b16 %v4560
        %v5411 = vunpack.c.l.b16 %v4561
        %v5412 = vunpack.c.l.b16 %v4562
        %v5413 = vunpack.c.l.b16 %v4563
        %v5414 = vunpack.c.l.b16 %v4564
        %v5415 = vunpack.c.l.b16 %v4565
        %v5416 = vunpack.c.l.b16 %v4566
        %v5417 = vunpack.c.l.b16 %v4567
        %v5418 = vunpack.c.l.b16 %v4568
        %v5419 = vpack.c.b16 %v5396, %v5395
        %v5420 = vpack.c.b16 %v5398, %v5397
        %v5421 = vpack.c.b16 %v5400, %v5399
        %v5422 = vpack.c.b16 %v5402, %v5401
        %v5423 = vpack.c.b16 %v5404, %v5403
        %v5424 = vpack.c.b16 %v5406, %v5405
        %v5425 = vpack.c.b16 %v5408, %v5407
        %v5426 = vpack.c.b16 %v5410, %v5409
        %v5427 = vpack.c.b16 %v5412, %v5411
        %v5428 = vpack.c.b16 %v5414, %v5413
        %v5429 = vpack.c.b16 %v5416, %v5415
        %v5430 = vpack.c.b16 %v5418, %v5417
        %v5444 = vsel %vm1340, %v4451, 0
        %v5447 = vsel %vm1340, %v4454, 0
        %v5450 = vsel %vm1340, %v4457, 0
        %v5453 = vsel %vm1340, %v4460, 0
        %v5456 = vsel %vm1340, %v4463, 0
        %v5459 = vsel %vm1340, %v4466, 0
        %v5462 = vsel %vm1340, %v4469, 0
        %v5465 = vsel %vm1340, %v4472, 0
        %v5468 = vsel %vm1340, %v4475, 0
        %v5471 = vsel %vm1340, %v4478, 0
        %v5474 = vsel %vm1340, %v4481, 0
        %v5477 = vsel %vm1340, %v4484, 0
        %v5480 = vsel %vm1340, %v4487, 0
        %v5483 = vsel %vm1340, %v4490, 0
        %v5486 = vsel %vm1340, %v4493, 0
        %v5489 = vsel %vm1340, %v4496, 0
        %5491 = vmatprep.subr.bf16.mxu0 0
        %5492 = vmatpush1.bf16.msra.mxu0 %v5419
        %5493 = vmatprep.subr.bf16.mxu0 0
        %5494 = vmatpush1.bf16.msra.mxu0 %v5420
        %5495 = vmatprep.subr.bf16.mxu0 0
        %5496 = vmatpush1.bf16.msra.mxu0 %v5421
        %5497 = vmatprep.subr.bf16.mxu0 0
        %5498 = vmatpush1.bf16.msra.mxu0 %v5422
        %5499 = vmatprep.subr.bf16.mxu0 0
        %5500 = vmatpush1.bf16.msra.mxu0 %v5423
        %5501 = vmatprep.subr.bf16.mxu0 0
        %5502 = vmatpush1.bf16.msra.mxu0 %v5424
        %5503 = vmatprep.subr.bf16.mxu0 0
        %5504 = vmatpush1.bf16.msra.mxu0 %v5425
        %5505 = vmatprep.subr.bf16.mxu0 0
        %5506 = vmatpush1.bf16.msra.mxu0 %v5426
        %5507 = vmatprep.subr.bf16.mxu0 0
        %5508 = vmatpush1.bf16.msra.mxu0 %v5427
        %5509 = vmatprep.subr.bf16.mxu0 0
        %5510 = vmatpush1.bf16.msra.mxu0 %v5428
        %5511 = vmatprep.subr.bf16.mxu0 0
        %5512 = vmatpush1.bf16.msra.mxu0 %v5429
        %5513 = vmatprep.subr.bf16.mxu0 0
        %5514 = vmatpush1.bf16.msra.mxu0 %v5430
        %5515 = vmatprep.subr.bf16.mxu0 0
        %5516 = vmatpush1.bf16.msra.mxu0 0
        %5517 = vmatprep.subr.bf16.mxu0 0
        %5518 = vmatpush1.bf16.msra.mxu0 0
        %5519 = vmatprep.subr.bf16.mxu0 0
        %5520 = vmatpush1.bf16.msra.mxu0 0
        %5521 = vmatprep.subr.bf16.mxu0 0
        %5522 = vmatpush1.bf16.msra.mxu0 0
        %5523 = vmatprep.mubr.bf16.mxu0 %v5444
        %5524 = vmatmul.mubr.bf16.gmra.mrb[0].mxu0 %v4498
        %v5525 = vpop.f32.mrb[0].mxu0
        %v5526 = vadd.f32 %v5245, %v5525
        %v5527 = vpop.f32.mrb[0].mxu0
        %v5528 = vpop.f32.mrb[0].mxu0
        %v5529 = vadd.f32 %v5248, %v5528
        %v5530 = vpop.f32.mrb[0].mxu0
        %5531 = vmatprep.mubr.bf16.mxu0 %v5447
        %5532 = vmatmul.mubr.bf16.gmra.mrb[0].mxu0 %v4501
        %v5533 = vpop.f32.mrb[0].mxu0
        %v5534 = vadd.f32 %v5253, %v5533
        %v5535 = vpop.f32.mrb[0].mxu0
        %v5536 = vpop.f32.mrb[0].mxu0
        %v5537 = vadd.f32 %v5256, %v5536
        %v5538 = vpop.f32.mrb[0].mxu0
        %5539 = vmatprep.mubr.bf16.mxu0 %v5450
        %5540 = vmatmul.mubr.bf16.gmra.mrb[0].mxu0 %v4504
        %v5541 = vpop.f32.mrb[0].mxu0
        %v5542 = vadd.f32 %v5261, %v5541
        %v5543 = vpop.f32.mrb[0].mxu0
        %v5544 = vpop.f32.mrb[0].mxu0
        %v5545 = vadd.f32 %v5264, %v5544
        %v5546 = vpop.f32.mrb[0].mxu0
        %5547 = vmatprep.mubr.bf16.mxu0 %v5453
        %5548 = vmatmul.mubr.bf16.gmra.mrb[0].mxu0 %v4507
        %v5549 = vpop.f32.mrb[0].mxu0
        %v5550 = vadd.f32 %v5269, %v5549
        %v5551 = vpop.f32.mrb[0].mxu0
        %v5552 = vpop.f32.mrb[0].mxu0
        %v5553 = vadd.f32 %v5272, %v5552
        %v5554 = vpop.f32.mrb[0].mxu0
        %5555 = vmatprep.mubr.bf16.mxu0 %v5456
        %5556 = vmatmul.mubr.bf16.gmra.mrb[0].mxu0 %v4510
        %v5557 = vpop.f32.mrb[0].mxu0
        %v5558 = vadd.f32 %v5277, %v5557
        %v5559 = vpop.f32.mrb[0].mxu0
        %v5560 = vpop.f32.mrb[0].mxu0
        %v5561 = vadd.f32 %v5280, %v5560
        %v5562 = vpop.f32.mrb[0].mxu0
        %5563 = vmatprep.mubr.bf16.mxu0 %v5459
        %5564 = vmatmul.mubr.bf16.gmra.mrb[0].mxu0 %v4513
        %v5565 = vpop.f32.mrb[0].mxu0
        %v5566 = vadd.f32 %v5285, %v5565
        %v5567 = vpop.f32.mrb[0].mxu0
        %v5568 = vpop.f32.mrb[0].mxu0
        %v5569 = vadd.f32 %v5288, %v5568
        %v5570 = vpop.f32.mrb[0].mxu0
        %5571 = vmatprep.mubr.bf16.mxu0 %v5462
        %5572 = vmatmul.mubr.bf16.gmra.mrb[0].mxu0 %v4516
        %v5573 = vpop.f32.mrb[0].mxu0
        %v5574 = vadd.f32 %v5293, %v5573
        %v5575 = vpop.f32.mrb[0].mxu0
        %v5576 = vpop.f32.mrb[0].mxu0
        %v5577 = vadd.f32 %v5296, %v5576
        %v5578 = vpop.f32.mrb[0].mxu0
        %5579 = vmatprep.mubr.bf16.mxu0 %v5465
        %5580 = vmatmul.mubr.bf16.gmra.mrb[0].mxu0 %v4519
        %v5581 = vpop.f32.mrb[0].mxu0
        %v5582 = vadd.f32 %v5301, %v5581
        %v5583 = vpop.f32.mrb[0].mxu0
        %v5584 = vpop.f32.mrb[0].mxu0
        %v5585 = vadd.f32 %v5304, %v5584
        %v5586 = vpop.f32.mrb[0].mxu0
        %5587 = vmatprep.mubr.bf16.mxu0 %v5468
        %5588 = vmatmul.mubr.bf16.gmra.mrb[0].mxu0 %v4522
        %v5589 = vpop.f32.mrb[0].mxu0
        %v5590 = vadd.f32 %v5309, %v5589
        %v5591 = vpop.f32.mrb[0].mxu0
        %v5592 = vpop.f32.mrb[0].mxu0
        %v5593 = vadd.f32 %v5312, %v5592
        %v5594 = vpop.f32.mrb[0].mxu0
        %5595 = vmatprep.mubr.bf16.mxu0 %v5471
        %5596 = vmatmul.mubr.bf16.gmra.mrb[0].mxu0 %v4525
        %v5597 = vpop.f32.mrb[0].mxu0
        %v5598 = vadd.f32 %v5317, %v5597
        %v5599 = vpop.f32.mrb[0].mxu0
        %v5600 = vpop.f32.mrb[0].mxu0
        %v5601 = vadd.f32 %v5320, %v5600
        %v5602 = vpop.f32.mrb[0].mxu0
        %5603 = vmatprep.mubr.bf16.mxu0 %v5474
        %5604 = vmatmul.mubr.bf16.gmra.mrb[0].mxu0 %v4528
        %v5605 = vpop.f32.mrb[0].mxu0
        %v5606 = vadd.f32 %v5325, %v5605
        %v5607 = vpop.f32.mrb[0].mxu0
        %v5608 = vpop.f32.mrb[0].mxu0
        %v5609 = vadd.f32 %v5328, %v5608
        %v5610 = vpop.f32.mrb[0].mxu0
        %5611 = vmatprep.mubr.bf16.mxu0 %v5477
        %5612 = vmatmul.mubr.bf16.gmra.mrb[0].mxu0 %v4531
        %v5613 = vpop.f32.mrb[0].mxu0
        %v5614 = vadd.f32 %v5333, %v5613
        %v5615 = vpop.f32.mrb[0].mxu0
        %v5616 = vpop.f32.mrb[0].mxu0
        %v5617 = vadd.f32 %v5336, %v5616
        %v5618 = vpop.f32.mrb[0].mxu0
        %5619 = vmatprep.mubr.bf16.mxu0 %v5480
        %5620 = vmatmul.mubr.bf16.gmra.mrb[0].mxu0 %v4534
        %v5621 = vpop.f32.mrb[0].mxu0
        %v5622 = vadd.f32 %v5341, %v5621
        %v5623 = vpop.f32.mrb[0].mxu0
        %v5624 = vpop.f32.mrb[0].mxu0
        %v5625 = vadd.f32 %v5344, %v5624
        %v5626 = vpop.f32.mrb[0].mxu0
        %5627 = vmatprep.mubr.bf16.mxu0 %v5483
        %5628 = vmatmul.mubr.bf16.gmra.mrb[0].mxu0 %v4537
        %v5629 = vpop.f32.mrb[0].mxu0
        %v5630 = vadd.f32 %v5349, %v5629
        %v5631 = vpop.f32.mrb[0].mxu0
        %v5632 = vpop.f32.mrb[0].mxu0
        %v5633 = vadd.f32 %v5352, %v5632
        %v5634 = vpop.f32.mrb[0].mxu0
        %5635 = vmatprep.mubr.bf16.mxu0 %v5486
        %5636 = vmatmul.mubr.bf16.gmra.mrb[0].mxu0 %v4540
        %v5637 = vpop.f32.mrb[0].mxu0
        %v5638 = vadd.f32 %v5357, %v5637
        %v5639 = vpop.f32.mrb[0].mxu0
        %v5640 = vpop.f32.mrb[0].mxu0
        %v5641 = vadd.f32 %v5360, %v5640
        %v5642 = vpop.f32.mrb[0].mxu0
        %5643 = vmatprep.mubr.bf16.mxu0 %v5489
        %5644 = vmatmul.mubr.bf16.gmra.mrb[0].mxu0 %v4543
        %v5645 = vpop.f32.mrb[0].mxu0
        %v5646 = vadd.f32 %v5365, %v5645
        %v5647 = vpop.f32.mrb[0].mxu0
        %v5648 = vpop.f32.mrb[0].mxu0
        %v5649 = vadd.f32 %v5368, %v5648
        %v5650 = vpop.f32.mrb[0].mxu0
        %5651 = vdwg.mxu0
        %s5652 = scalar_lea.vmem [#allocation3], 24
        %v5653 = vld [vmem:[%s5652] sm:$0xf]
        %v5654 = vld [vmem:[%s5652 + $0x4] sm:$0xf]
        %v5655 = vld [vmem:[%s5652 + $0x8] sm:$0x1]
        %v5656 = vld [vmem:[%s5652 + $0xc] sm:$0xf]
        %v5657 = vld [vmem:[%s5652 + $0x10] sm:$0xf]
        %v5658 = vld [vmem:[%s5652 + $0x14] sm:$0x1]
        %v5659 = vld [vmem:[%s5652 + $0x18] sm:$0xf]
        %v5660 = vld [vmem:[%s5652 + $0x1c] sm:$0xf]
        %v5661 = vld [vmem:[%s5652 + $0x20] sm:$0x1]
        %v5662 = vld [vmem:[%s5652 + $0x24] sm:$0xf]
        %v5663 = vld [vmem:[%s5652 + $0x28] sm:$0xf]
        %v5664 = vld [vmem:[%s5652 + $0x2c] sm:$0x1]
        %v5665 = vld [vmem:[%s5652 + $0x30] sm:$0xf]
        %v5666 = vld [vmem:[%s5652 + $0x34] sm:$0xf]
        %v5667 = vld [vmem:[%s5652 + $0x38] sm:$0x1]
        %v5668 = vld [vmem:[%s5652 + $0x3c] sm:$0xf]
        %v5669 = vld [vmem:[%s5652 + $0x40] sm:$0xf]
        %v5670 = vld [vmem:[%s5652 + $0x44] sm:$0x1]
        %v5671 = vld [vmem:[%s5652 + $0x48] sm:$0xf]
        %v5672 = vld [vmem:[%s5652 + $0x4c] sm:$0xf]
        %v5673 = vld [vmem:[%s5652 + $0x50] sm:$0x1]
        %v5674 = vld [vmem:[%s5652 + $0x54] sm:$0xf]
        %v5675 = vld [vmem:[%s5652 + $0x58] sm:$0xf]
        %v5676 = vld [vmem:[%s5652 + $0x5c] sm:$0x1]
        %v5677 = vld [vmem:[%s5652 + $0x60] sm:$0xf]
        %v5678 = vld [vmem:[%s5652 + $0x64] sm:$0xf]
        %v5679 = vld [vmem:[%s5652 + $0x68] sm:$0x1]
        %v5680 = vld [vmem:[%s5652 + $0x6c] sm:$0xf]
        %v5681 = vld [vmem:[%s5652 + $0x70] sm:$0xf]
        %v5682 = vld [vmem:[%s5652 + $0x74] sm:$0x1]
        %v5683 = vld [vmem:[%s5652 + $0x78] sm:$0xf]
        %v5684 = vld [vmem:[%s5652 + $0x7c] sm:$0xf]
        %v5685 = vld [vmem:[%s5652 + $0x80] sm:$0x1]
        %v5686 = vld [vmem:[%s5652 + $0x84] sm:$0xf]
        %v5687 = vld [vmem:[%s5652 + $0x88] sm:$0xf]
        %v5688 = vld [vmem:[%s5652 + $0x8c] sm:$0x1]
        %v5689 = vld [vmem:[%s5652 + $0x90] sm:$0xf]
        %v5690 = vld [vmem:[%s5652 + $0x94] sm:$0xf]
        %v5691 = vld [vmem:[%s5652 + $0x98] sm:$0x1]
        %v5692 = vld [vmem:[%s5652 + $0x9c] sm:$0xf]
        %v5693 = vld [vmem:[%s5652 + $0xa0] sm:$0xf]
        %v5694 = vld [vmem:[%s5652 + $0xa4] sm:$0x1]
        %v5695 = vld [vmem:[%s5652 + $0xa8] sm:$0xf]
        %v5696 = vld [vmem:[%s5652 + $0xac] sm:$0xf]
        %v5697 = vld [vmem:[%s5652 + $0xb0] sm:$0x1]
        %v5698 = vld [vmem:[%s5652 + $0xb4] sm:$0xf]
        %v5699 = vld [vmem:[%s5652 + $0xb8] sm:$0xf]
        %v5700 = vld [vmem:[%s5652 + $0xbc] sm:$0x1]
        %v5733 = vunpack.c.l.b16 %v5653
        %v5734 = vunpack.c.l.b16 %v5654
        %v5735 = vunpack.c.l.b16 %v5656
        %v5736 = vunpack.c.l.b16 %v5657
        %v5737 = vunpack.c.l.b16 %v5659
        %v5738 = vunpack.c.l.b16 %v5660
        %v5739 = vunpack.c.l.b16 %v5662
        %v5740 = vunpack.c.l.b16 %v5663
        %v5741 = vunpack.c.l.b16 %v5665
        %v5742 = vunpack.c.l.b16 %v5666
        %v5743 = vunpack.c.l.b16 %v5668
        %v5744 = vunpack.c.l.b16 %v5669
        %v5745 = vunpack.c.l.b16 %v5671
        %v5746 = vunpack.c.l.b16 %v5672
        %v5747 = vunpack.c.l.b16 %v5674
        %v5748 = vunpack.c.l.b16 %v5675
        %v5749 = vunpack.c.l.b16 %v5677
        %v5750 = vunpack.c.l.b16 %v5678
        %v5751 = vunpack.c.l.b16 %v5680
        %v5752 = vunpack.c.l.b16 %v5681
        %v5753 = vunpack.c.l.b16 %v5683
        %v5754 = vunpack.c.l.b16 %v5684
        %v5755 = vunpack.c.l.b16 %v5686
        %v5756 = vunpack.c.l.b16 %v5687
        %v5757 = vunpack.c.l.b16 %v5689
        %v5758 = vunpack.c.l.b16 %v5690
        %v5759 = vunpack.c.l.b16 %v5692
        %v5760 = vunpack.c.l.b16 %v5693
        %v5761 = vunpack.c.l.b16 %v5695
        %v5762 = vunpack.c.l.b16 %v5696
        %v5763 = vunpack.c.l.b16 %v5698
        %v5764 = vunpack.c.l.b16 %v5699
        %v5765 = vpack.c.b16 %v5734, %v5733
        %v5766 = vpack.c.b16 %v5736, %v5735
        %v5767 = vpack.c.b16 %v5738, %v5737
        %v5768 = vpack.c.b16 %v5740, %v5739
        %v5769 = vpack.c.b16 %v5742, %v5741
        %v5770 = vpack.c.b16 %v5744, %v5743
        %v5771 = vpack.c.b16 %v5746, %v5745
        %v5772 = vpack.c.b16 %v5748, %v5747
        %v5773 = vpack.c.b16 %v5750, %v5749
        %v5774 = vpack.c.b16 %v5752, %v5751
        %v5775 = vpack.c.b16 %v5754, %v5753
        %v5776 = vpack.c.b16 %v5756, %v5755
        %v5777 = vpack.c.b16 %v5758, %v5757
        %v5778 = vpack.c.b16 %v5760, %v5759
        %v5779 = vpack.c.b16 %v5762, %v5761
        %v5780 = vpack.c.b16 %v5764, %v5763
        %v5797 = vunpack.c.l.b16 %v5655
        %v5798 = vunpack.c.l.b16 %v5658
        %v5799 = vunpack.c.l.b16 %v5661
        %v5800 = vunpack.c.l.b16 %v5664
        %v5801 = vunpack.c.l.b16 %v5667
        %v5802 = vunpack.c.l.b16 %v5670
        %v5803 = vunpack.c.l.b16 %v5673
        %v5804 = vunpack.c.l.b16 %v5676
        %v5805 = vunpack.c.l.b16 %v5679
        %v5806 = vunpack.c.l.b16 %v5682
        %v5807 = vunpack.c.l.b16 %v5685
        %v5808 = vunpack.c.l.b16 %v5688
        %v5809 = vunpack.c.l.b16 %v5691
        %v5810 = vunpack.c.l.b16 %v5694
        %v5811 = vunpack.c.l.b16 %v5697
        %v5812 = vunpack.c.l.b16 %v5700
        %v5813 = vpack.c.b16 %v5797, %v5797
        %v5814 = vpack.c.b16 %v5798, %v5798
        %v5815 = vpack.c.b16 %v5799, %v5799
        %v5816 = vpack.c.b16 %v5800, %v5800
        %v5817 = vpack.c.b16 %v5801, %v5801
        %v5818 = vpack.c.b16 %v5802, %v5802
        %v5819 = vpack.c.b16 %v5803, %v5803
        %v5820 = vpack.c.b16 %v5804, %v5804
        %v5821 = vpack.c.b16 %v5805, %v5805
        %v5822 = vpack.c.b16 %v5806, %v5806
        %v5823 = vpack.c.b16 %v5807, %v5807
        %v5824 = vpack.c.b16 %v5808, %v5808
        %v5825 = vpack.c.b16 %v5809, %v5809
        %v5826 = vpack.c.b16 %v5810, %v5810
        %v5827 = vpack.c.b16 %v5811, %v5811
        %v5828 = vpack.c.b16 %v5812, %v5812
        %v5830 = vshrl.u32 %v5765, 16
        %v5832 = vshll.u32 %v5765, 16
        %v5834 = vrot.slane %v5832, 1
        %v5835 = vor.u32 %v5830, %v5834
        %v5837 = vshll.u32 %v5813, 16
        %v5839 = vrot.slane %v5837, 1
        %v5840 = vsel %vm1066, %v5835, %v5839
        %v5842 = vshrl.u32 %v5766, 16
        %v5844 = vshll.u32 %v5766, 16
        %v5846 = vrot.slane %v5844, 1
        %v5847 = vor.u32 %v5842, %v5846
        %v5849 = vshll.u32 %v5814, 16
        %v5851 = vrot.slane %v5849, 1
        %v5852 = vsel %vm1066, %v5847, %v5851
        %v5854 = vshrl.u32 %v5767, 16
        %v5856 = vshll.u32 %v5767, 16
        %v5858 = vrot.slane %v5856, 1
        %v5859 = vor.u32 %v5854, %v5858
        %v5861 = vshll.u32 %v5815, 16
        %v5863 = vrot.slane %v5861, 1
        %v5864 = vsel %vm1066, %v5859, %v5863
        %v5866 = vshrl.u32 %v5768, 16
        %v5868 = vshll.u32 %v5768, 16
        %v5870 = vrot.slane %v5868, 1
        %v5871 = vor.u32 %v5866, %v5870
        %v5873 = vshll.u32 %v5816, 16
        %v5875 = vrot.slane %v5873, 1
        %v5876 = vsel %vm1066, %v5871, %v5875
        %v5878 = vshrl.u32 %v5769, 16
        %v5880 = vshll.u32 %v5769, 16
        %v5882 = vrot.slane %v5880, 1
        %v5883 = vor.u32 %v5878, %v5882
        %v5885 = vshll.u32 %v5817, 16
        %v5887 = vrot.slane %v5885, 1
        %v5888 = vsel %vm1066, %v5883, %v5887
        %v5890 = vshrl.u32 %v5770, 16
        %v5892 = vshll.u32 %v5770, 16
        %v5894 = vrot.slane %v5892, 1
        %v5895 = vor.u32 %v5890, %v5894
        %v5897 = vshll.u32 %v5818, 16
        %v5899 = vrot.slane %v5897, 1
        %v5900 = vsel %vm1066, %v5895, %v5899
        %v5902 = vshrl.u32 %v5771, 16
        %v5904 = vshll.u32 %v5771, 16
        %v5906 = vrot.slane %v5904, 1
        %v5907 = vor.u32 %v5902, %v5906
        %v5909 = vshll.u32 %v5819, 16
        %v5911 = vrot.slane %v5909, 1
        %v5912 = vsel %vm1066, %v5907, %v5911
        %v5914 = vshrl.u32 %v5772, 16
        %v5916 = vshll.u32 %v5772, 16
        %v5918 = vrot.slane %v5916, 1
        %v5919 = vor.u32 %v5914, %v5918
        %v5921 = vshll.u32 %v5820, 16
        %v5923 = vrot.slane %v5921, 1
        %v5924 = vsel %vm1066, %v5919, %v5923
        %v5926 = vshrl.u32 %v5773, 16
        %v5928 = vshll.u32 %v5773, 16
        %v5930 = vrot.slane %v5928, 1
        %v5931 = vor.u32 %v5926, %v5930
        %v5933 = vshll.u32 %v5821, 16
        %v5935 = vrot.slane %v5933, 1
        %v5936 = vsel %vm1066, %v5931, %v5935
        %v5938 = vshrl.u32 %v5774, 16
        %v5940 = vshll.u32 %v5774, 16
        %v5942 = vrot.slane %v5940, 1
        %v5943 = vor.u32 %v5938, %v5942
        %v5945 = vshll.u32 %v5822, 16
        %v5947 = vrot.slane %v5945, 1
        %v5948 = vsel %vm1066, %v5943, %v5947
        %v5950 = vshrl.u32 %v5775, 16
        %v5952 = vshll.u32 %v5775, 16
        %v5954 = vrot.slane %v5952, 1
        %v5955 = vor.u32 %v5950, %v5954
        %v5957 = vshll.u32 %v5823, 16
        %v5959 = vrot.slane %v5957, 1
        %v5960 = vsel %vm1066, %v5955, %v5959
        %v5962 = vshrl.u32 %v5776, 16
        %v5964 = vshll.u32 %v5776, 16
        %v5966 = vrot.slane %v5964, 1
        %v5967 = vor.u32 %v5962, %v5966
        %v5969 = vshll.u32 %v5824, 16
        %v5971 = vrot.slane %v5969, 1
        %v5972 = vsel %vm1066, %v5967, %v5971
        %v5974 = vshrl.u32 %v5777, 16
        %v5976 = vshll.u32 %v5777, 16
        %v5978 = vrot.slane %v5976, 1
        %v5979 = vor.u32 %v5974, %v5978
        %v5981 = vshll.u32 %v5825, 16
        %v5983 = vrot.slane %v5981, 1
        %v5984 = vsel %vm1066, %v5979, %v5983
        %v5986 = vshrl.u32 %v5778, 16
        %v5988 = vshll.u32 %v5778, 16
        %v5990 = vrot.slane %v5988, 1
        %v5991 = vor.u32 %v5986, %v5990
        %v5993 = vshll.u32 %v5826, 16
        %v5995 = vrot.slane %v5993, 1
        %v5996 = vsel %vm1066, %v5991, %v5995
        %v5998 = vshrl.u32 %v5779, 16
        %v6000 = vshll.u32 %v5779, 16
        %v6002 = vrot.slane %v6000, 1
        %v6003 = vor.u32 %v5998, %v6002
        %v6005 = vshll.u32 %v5827, 16
        %v6007 = vrot.slane %v6005, 1
        %v6008 = vsel %vm1066, %v6003, %v6007
        %v6010 = vshrl.u32 %v5780, 16
        %v6012 = vshll.u32 %v5780, 16
        %v6014 = vrot.slane %v6012, 1
        %v6015 = vor.u32 %v6010, %v6014
        %v6017 = vshll.u32 %v5828, 16
        %v6019 = vrot.slane %v6017, 1
        %v6020 = vsel %vm1066, %v6015, %v6019
        %6021 = vrot.lane.b32.xlu0 %v5840, 64
        %v6022 = vpop.permute.xlu0 %6021
        %6023 = vrot.lane.b32.xlu0 %v5852, 64
        %v6024 = vpop.permute.xlu0 %6023
        %6025 = vrot.lane.b32.xlu0 %v5864, 64
        %v6026 = vpop.permute.xlu0 %6025
        %6027 = vrot.lane.b32.xlu0 %v5876, 64
        %v6028 = vpop.permute.xlu0 %6027
        %6029 = vrot.lane.b32.xlu0 %v5888, 64
        %v6030 = vpop.permute.xlu0 %6029
        %6031 = vrot.lane.b32.xlu0 %v5900, 64
        %v6032 = vpop.permute.xlu0 %6031
        %6033 = vrot.lane.b32.xlu0 %v5912, 64
        %v6034 = vpop.permute.xlu0 %6033
        %6035 = vrot.lane.b32.xlu0 %v5924, 64
        %v6036 = vpop.permute.xlu0 %6035
        %6037 = vrot.lane.b32.xlu0 %v5936, 64
        %v6038 = vpop.permute.xlu0 %6037
        %6039 = vrot.lane.b32.xlu0 %v5948, 64
        %v6040 = vpop.permute.xlu0 %6039
        %6041 = vrot.lane.b32.xlu0 %v5960, 64
        %v6042 = vpop.permute.xlu0 %6041
        %6043 = vrot.lane.b32.xlu0 %v5972, 64
        %v6044 = vpop.permute.xlu0 %6043
        %6045 = vrot.lane.b32.xlu0 %v5984, 64
        %v6046 = vpop.permute.xlu0 %6045
        %6047 = vrot.lane.b32.xlu0 %v5996, 64
        %v6048 = vpop.permute.xlu0 %6047
        %6049 = vrot.lane.b32.xlu0 %v6008, 64
        %v6050 = vpop.permute.xlu0 %6049
        %6051 = vrot.lane.b32.xlu0 %v6020, 64
        %v6052 = vpop.permute.xlu0 %6051
        %v6053 = vrot.slane %v5765, 1
        %v6054 = vrot.slane %v5813, 1
        %v6055 = vsel %vm1291, %v6053, %v6054
        %v6056 = vrot.slane %v5766, 1
        %v6057 = vrot.slane %v5814, 1
        %v6058 = vsel %vm1291, %v6056, %v6057
        %v6059 = vrot.slane %v5767, 1
        %v6060 = vrot.slane %v5815, 1
        %v6061 = vsel %vm1291, %v6059, %v6060
        %v6062 = vrot.slane %v5768, 1
        %v6063 = vrot.slane %v5816, 1
        %v6064 = vsel %vm1291, %v6062, %v6063
        %v6065 = vrot.slane %v5769, 1
        %v6066 = vrot.slane %v5817, 1
        %v6067 = vsel %vm1291, %v6065, %v6066
        %v6068 = vrot.slane %v5770, 1
        %v6069 = vrot.slane %v5818, 1
        %v6070 = vsel %vm1291, %v6068, %v6069
        %v6071 = vrot.slane %v5771, 1
        %v6072 = vrot.slane %v5819, 1
        %v6073 = vsel %vm1291, %v6071, %v6072
        %v6074 = vrot.slane %v5772, 1
        %v6075 = vrot.slane %v5820, 1
        %v6076 = vsel %vm1291, %v6074, %v6075
        %v6077 = vrot.slane %v5773, 1
        %v6078 = vrot.slane %v5821, 1
        %v6079 = vsel %vm1291, %v6077, %v6078
        %v6080 = vrot.slane %v5774, 1
        %v6081 = vrot.slane %v5822, 1
        %v6082 = vsel %vm1291, %v6080, %v6081
        %v6083 = vrot.slane %v5775, 1
        %v6084 = vrot.slane %v5823, 1
        %v6085 = vsel %vm1291, %v6083, %v6084
        %v6086 = vrot.slane %v5776, 1
        %v6087 = vrot.slane %v5824, 1
        %v6088 = vsel %vm1291, %v6086, %v6087
        %v6089 = vrot.slane %v5777, 1
        %v6090 = vrot.slane %v5825, 1
        %v6091 = vsel %vm1291, %v6089, %v6090
        %v6092 = vrot.slane %v5778, 1
        %v6093 = vrot.slane %v5826, 1
        %v6094 = vsel %vm1291, %v6092, %v6093
        %v6095 = vrot.slane %v5779, 1
        %v6096 = vrot.slane %v5827, 1
        %v6097 = vsel %vm1291, %v6095, %v6096
        %v6098 = vrot.slane %v5780, 1
        %v6099 = vrot.slane %v5828, 1
        %v6100 = vsel %vm1291, %v6098, %v6099
        %v6102 = vsel %vm1340, %v5765, %v6022
        %v6105 = vsel %vm1340, %v5766, %v6024
        %v6108 = vsel %vm1340, %v5767, %v6026
        %v6111 = vsel %vm1340, %v5768, %v6028
        %v6114 = vsel %vm1340, %v5769, %v6030
        %v6117 = vsel %vm1340, %v5770, %v6032
        %v6120 = vsel %vm1340, %v5771, %v6034
        %v6123 = vsel %vm1340, %v5772, %v6036
        %v6126 = vsel %vm1340, %v5773, %v6038
        %v6129 = vsel %vm1340, %v5774, %v6040
        %v6132 = vsel %vm1340, %v5775, %v6042
        %v6135 = vsel %vm1340, %v5776, %v6044
        %v6138 = vsel %vm1340, %v5777, %v6046
        %v6141 = vsel %vm1340, %v5778, %v6048
        %v6144 = vsel %vm1340, %v5779, %v6050
        %v6147 = vsel %vm1340, %v5780, %v6052
        %s6149 = scalar_lea.vmem %s3, 192
        %v6150 = vld [vmem:[%s6149] sm:$0xf]
        %v6151 = vld [vmem:[%s6149 + $0x4] sm:$0xf]
        %v6152 = vld [vmem:[%s6149 + $0x8] sm:$0xf]
        %v6153 = vld [vmem:[%s6149 + $0xc] sm:$0xf]
        %v6154 = vld [vmem:[%s6149 + $0x10] sm:$0xf]
        %v6155 = vld [vmem:[%s6149 + $0x14] sm:$0xf]
        %v6156 = vld [vmem:[%s6149 + $0x18] sm:$0xf]
        %v6157 = vld [vmem:[%s6149 + $0x1c] sm:$0xf]
        %v6158 = vld [vmem:[%s6149 + $0x20] sm:$0xf]
        %v6159 = vld [vmem:[%s6149 + $0x24] sm:$0xf]
        %v6160 = vld [vmem:[%s6149 + $0x28] sm:$0xf]
        %v6161 = vld [vmem:[%s6149 + $0x2c] sm:$0xf]
        %v6162 = vld [vmem:[%s6149 + $0x30] sm:$0xf]
        %v6163 = vld [vmem:[%s6149 + $0x34] sm:$0xf]
        %v6164 = vld [vmem:[%s6149 + $0x38] sm:$0xf]
        %v6165 = vld [vmem:[%s6149 + $0x3c] sm:$0xf]
        %v6166 = vld [vmem:[%s6149 + $0x40] sm:$0xf]
        %v6167 = vld [vmem:[%s6149 + $0x44] sm:$0xf]
        %v6168 = vld [vmem:[%s6149 + $0x48] sm:$0xf]
        %v6169 = vld [vmem:[%s6149 + $0x4c] sm:$0xf]
        %v6170 = vld [vmem:[%s6149 + $0x50] sm:$0xf]
        %v6171 = vld [vmem:[%s6149 + $0x54] sm:$0xf]
        %v6172 = vld [vmem:[%s6149 + $0x58] sm:$0xf]
        %v6173 = vld [vmem:[%s6149 + $0x5c] sm:$0xf]
        %v6198 = vunpack.c.l.b16 %v6150
        %v6199 = vunpack.c.l.b16 %v6151
        %v6200 = vunpack.c.l.b16 %v6152
        %v6201 = vunpack.c.l.b16 %v6153
        %v6202 = vunpack.c.l.b16 %v6154
        %v6203 = vunpack.c.l.b16 %v6155
        %v6204 = vunpack.c.l.b16 %v6156
        %v6205 = vunpack.c.l.b16 %v6157
        %v6206 = vunpack.c.l.b16 %v6158
        %v6207 = vunpack.c.l.b16 %v6159
        %v6208 = vunpack.c.l.b16 %v6160
        %v6209 = vunpack.c.l.b16 %v6161
        %v6210 = vunpack.c.l.b16 %v6162
        %v6211 = vunpack.c.l.b16 %v6163
        %v6212 = vunpack.c.l.b16 %v6164
        %v6213 = vunpack.c.l.b16 %v6165
        %v6214 = vunpack.c.l.b16 %v6166
        %v6215 = vunpack.c.l.b16 %v6167
        %v6216 = vunpack.c.l.b16 %v6168
        %v6217 = vunpack.c.l.b16 %v6169
        %v6218 = vunpack.c.l.b16 %v6170
        %v6219 = vunpack.c.l.b16 %v6171
        %v6220 = vunpack.c.l.b16 %v6172
        %v6221 = vunpack.c.l.b16 %v6173
        %v6222 = vpack.c.b16 %v6199, %v6198
        %v6223 = vpack.c.b16 %v6201, %v6200
        %v6224 = vpack.c.b16 %v6203, %v6202
        %v6225 = vpack.c.b16 %v6205, %v6204
        %v6226 = vpack.c.b16 %v6207, %v6206
        %v6227 = vpack.c.b16 %v6209, %v6208
        %v6228 = vpack.c.b16 %v6211, %v6210
        %v6229 = vpack.c.b16 %v6213, %v6212
        %v6230 = vpack.c.b16 %v6215, %v6214
        %v6231 = vpack.c.b16 %v6217, %v6216
        %v6232 = vpack.c.b16 %v6219, %v6218
        %v6233 = vpack.c.b16 %v6221, %v6220
        %v6247 = vsel %vm1340, %v6055, 0
        %v6250 = vsel %vm1340, %v6058, 0
        %v6253 = vsel %vm1340, %v6061, 0
        %v6256 = vsel %vm1340, %v6064, 0
        %v6259 = vsel %vm1340, %v6067, 0
        %v6262 = vsel %vm1340, %v6070, 0
        %v6265 = vsel %vm1340, %v6073, 0
        %v6268 = vsel %vm1340, %v6076, 0
        %v6271 = vsel %vm1340, %v6079, 0
        %v6274 = vsel %vm1340, %v6082, 0
        %v6277 = vsel %vm1340, %v6085, 0
        %v6280 = vsel %vm1340, %v6088, 0
        %v6283 = vsel %vm1340, %v6091, 0
        %v6286 = vsel %vm1340, %v6094, 0
        %v6289 = vsel %vm1340, %v6097, 0
        %v6292 = vsel %vm1340, %v6100, 0
        %6294 = vmatprep.subr.bf16.mxu0 0
        %6295 = vmatpush1.bf16.msra.mxu0 %v6222
        %6296 = vmatprep.subr.bf16.mxu0 0
        %6297 = vmatpush1.bf16.msra.mxu0 %v6223
        %6298 = vmatprep.subr.bf16.mxu0 0
        %6299 = vmatpush1.bf16.msra.mxu0 %v6224
        %6300 = vmatprep.subr.bf16.mxu0 0
        %6301 = vmatpush1.bf16.msra.mxu0 %v6225
        %6302 = vmatprep.subr.bf16.mxu0 0
        %6303 = vmatpush1.bf16.msra.mxu0 %v6226
        %6304 = vmatprep.subr.bf16.mxu0 0
        %6305 = vmatpush1.bf16.msra.mxu0 %v6227
        %6306 = vmatprep.subr.bf16.mxu0 0
        %6307 = vmatpush1.bf16.msra.mxu0 %v6228
        %6308 = vmatprep.subr.bf16.mxu0 0
        %6309 = vmatpush1.bf16.msra.mxu0 %v6229
        %6310 = vmatprep.subr.bf16.mxu0 0
        %6311 = vmatpush1.bf16.msra.mxu0 %v6230
        %6312 = vmatprep.subr.bf16.mxu0 0
        %6313 = vmatpush1.bf16.msra.mxu0 %v6231
        %6314 = vmatprep.subr.bf16.mxu0 0
        %6315 = vmatpush1.bf16.msra.mxu0 %v6232
        %6316 = vmatprep.subr.bf16.mxu0 0
        %6317 = vmatpush1.bf16.msra.mxu0 %v6233
        %6318 = vmatprep.subr.bf16.mxu0 0
        %6319 = vmatpush1.bf16.msra.mxu0 0
        %6320 = vmatprep.subr.bf16.mxu0 0
        %6321 = vmatpush1.bf16.msra.mxu0 0
        %6322 = vmatprep.subr.bf16.mxu0 0
        %6323 = vmatpush1.bf16.msra.mxu0 0
        %6324 = vmatprep.subr.bf16.mxu0 0
        %6325 = vmatpush1.bf16.msra.mxu0 0
        %6326 = vmatprep.mubr.bf16.mxu0 %v6247
        %6327 = vmatmul.mubr.bf16.gmra.mrb[0].mxu0 %v6102
        %v6328 = vpop.f32.mrb[0].mxu0
        %v6329 = vadd.f32 0.0, %v6328
        %v6330 = vpop.f32.mrb[0].mxu0
        %v6331 = vpop.f32.mrb[0].mxu0
        %v6332 = vadd.f32 0.0, %v6331
        %v6333 = vpop.f32.mrb[0].mxu0
        %6334 = vmatprep.mubr.bf16.mxu0 %v6250
        %6335 = vmatmul.mubr.bf16.gmra.mrb[0].mxu0 %v6105
        %v6336 = vpop.f32.mrb[0].mxu0
        %v6337 = vadd.f32 0.0, %v6336
        %v6338 = vpop.f32.mrb[0].mxu0
        %v6339 = vpop.f32.mrb[0].mxu0
        %v6340 = vadd.f32 0.0, %v6339
        %v6341 = vpop.f32.mrb[0].mxu0
        %6342 = vmatprep.mubr.bf16.mxu0 %v6253
        %6343 = vmatmul.mubr.bf16.gmra.mrb[0].mxu0 %v6108
        %v6344 = vpop.f32.mrb[0].mxu0
        %v6345 = vadd.f32 0.0, %v6344
        %v6346 = vpop.f32.mrb[0].mxu0
        %v6347 = vpop.f32.mrb[0].mxu0
        %v6348 = vadd.f32 0.0, %v6347
        %v6349 = vpop.f32.mrb[0].mxu0
        %6350 = vmatprep.mubr.bf16.mxu0 %v6256
        %6351 = vmatmul.mubr.bf16.gmra.mrb[0].mxu0 %v6111
        %v6352 = vpop.f32.mrb[0].mxu0
        %v6353 = vadd.f32 0.0, %v6352
        %v6354 = vpop.f32.mrb[0].mxu0
        %v6355 = vpop.f32.mrb[0].mxu0
        %v6356 = vadd.f32 0.0, %v6355
        %v6357 = vpop.f32.mrb[0].mxu0
        %6358 = vmatprep.mubr.bf16.mxu0 %v6259
        %6359 = vmatmul.mubr.bf16.gmra.mrb[0].mxu0 %v6114
        %v6360 = vpop.f32.mrb[0].mxu0
        %v6361 = vadd.f32 0.0, %v6360
        %v6362 = vpop.f32.mrb[0].mxu0
        %v6363 = vpop.f32.mrb[0].mxu0
        %v6364 = vadd.f32 0.0, %v6363
        %v6365 = vpop.f32.mrb[0].mxu0
        %6366 = vmatprep.mubr.bf16.mxu0 %v6262
        %6367 = vmatmul.mubr.bf16.gmra.mrb[0].mxu0 %v6117
        %v6368 = vpop.f32.mrb[0].mxu0
        %v6369 = vadd.f32 0.0, %v6368
        %v6370 = vpop.f32.mrb[0].mxu0
        %v6371 = vpop.f32.mrb[0].mxu0
        %v6372 = vadd.f32 0.0, %v6371
        %v6373 = vpop.f32.mrb[0].mxu0
        %6374 = vmatprep.mubr.bf16.mxu0 %v6265
        %6375 = vmatmul.mubr.bf16.gmra.mrb[0].mxu0 %v6120
        %v6376 = vpop.f32.mrb[0].mxu0
        %v6377 = vadd.f32 0.0, %v6376
        %v6378 = vpop.f32.mrb[0].mxu0
        %v6379 = vpop.f32.mrb[0].mxu0
        %v6380 = vadd.f32 0.0, %v6379
        %v6381 = vpop.f32.mrb[0].mxu0
        %6382 = vmatprep.mubr.bf16.mxu0 %v6268
        %6383 = vmatmul.mubr.bf16.gmra.mrb[0].mxu0 %v6123
        %v6384 = vpop.f32.mrb[0].mxu0
        %v6385 = vadd.f32 0.0, %v6384
        %v6386 = vpop.f32.mrb[0].mxu0
        %v6387 = vpop.f32.mrb[0].mxu0
        %v6388 = vadd.f32 0.0, %v6387
        %v6389 = vpop.f32.mrb[0].mxu0
        %6390 = vmatprep.mubr.bf16.mxu0 %v6271
        %6391 = vmatmul.mubr.bf16.gmra.mrb[0].mxu0 %v6126
        %v6392 = vpop.f32.mrb[0].mxu0
        %v6393 = vadd.f32 0.0, %v6392
        %v6394 = vpop.f32.mrb[0].mxu0
        %v6395 = vpop.f32.mrb[0].mxu0
        %v6396 = vadd.f32 0.0, %v6395
        %v6397 = vpop.f32.mrb[0].mxu0
        %6398 = vmatprep.mubr.bf16.mxu0 %v6274
        %6399 = vmatmul.mubr.bf16.gmra.mrb[0].mxu0 %v6129
        %v6400 = vpop.f32.mrb[0].mxu0
        %v6401 = vadd.f32 0.0, %v6400
        %v6402 = vpop.f32.mrb[0].mxu0
        %v6403 = vpop.f32.mrb[0].mxu0
        %v6404 = vadd.f32 0.0, %v6403
        %v6405 = vpop.f32.mrb[0].mxu0
        %6406 = vmatprep.mubr.bf16.mxu0 %v6277
        %6407 = vmatmul.mubr.bf16.gmra.mrb[0].mxu0 %v6132
        %v6408 = vpop.f32.mrb[0].mxu0
        %v6409 = vadd.f32 0.0, %v6408
        %v6410 = vpop.f32.mrb[0].mxu0
        %v6411 = vpop.f32.mrb[0].mxu0
        %v6412 = vadd.f32 0.0, %v6411
        %v6413 = vpop.f32.mrb[0].mxu0
        %6414 = vmatprep.mubr.bf16.mxu0 %v6280
        %6415 = vmatmul.mubr.bf16.gmra.mrb[0].mxu0 %v6135
        %v6416 = vpop.f32.mrb[0].mxu0
        %v6417 = vadd.f32 0.0, %v6416
        %v6418 = vpop.f32.mrb[0].mxu0
        %v6419 = vpop.f32.mrb[0].mxu0
        %v6420 = vadd.f32 0.0, %v6419
        %v6421 = vpop.f32.mrb[0].mxu0
        %6422 = vmatprep.mubr.bf16.mxu0 %v6283
        %6423 = vmatmul.mubr.bf16.gmra.mrb[0].mxu0 %v6138
        %v6424 = vpop.f32.mrb[0].mxu0
        %v6425 = vadd.f32 0.0, %v6424
        %v6426 = vpop.f32.mrb[0].mxu0
        %v6427 = vpop.f32.mrb[0].mxu0
        %v6428 = vadd.f32 0.0, %v6427
        %v6429 = vpop.f32.mrb[0].mxu0
        %6430 = vmatprep.mubr.bf16.mxu0 %v6286
        %6431 = vmatmul.mubr.bf16.gmra.mrb[0].mxu0 %v6141
        %v6432 = vpop.f32.mrb[0].mxu0
        %v6433 = vadd.f32 0.0, %v6432
        %v6434 = vpop.f32.mrb[0].mxu0
        %v6435 = vpop.f32.mrb[0].mxu0
        %v6436 = vadd.f32 0.0, %v6435
        %v6437 = vpop.f32.mrb[0].mxu0
        %6438 = vmatprep.mubr.bf16.mxu0 %v6289
        %6439 = vmatmul.mubr.bf16.gmra.mrb[0].mxu0 %v6144
        %v6440 = vpop.f32.mrb[0].mxu0
        %v6441 = vadd.f32 0.0, %v6440
        %v6442 = vpop.f32.mrb[0].mxu0
        %v6443 = vpop.f32.mrb[0].mxu0
        %v6444 = vadd.f32 0.0, %v6443
        %v6445 = vpop.f32.mrb[0].mxu0
        %6446 = vmatprep.mubr.bf16.mxu0 %v6292
        %6447 = vmatmul.mubr.bf16.gmra.mrb[0].mxu0 %v6147
        %v6448 = vpop.f32.mrb[0].mxu0
        %v6449 = vadd.f32 0.0, %v6448
        %v6450 = vpop.f32.mrb[0].mxu0
        %v6451 = vpop.f32.mrb[0].mxu0
        %v6452 = vadd.f32 0.0, %v6451
        %v6453 = vpop.f32.mrb[0].mxu0
        %6454 = vdwg.mxu0
        %v6455 = vadd.f32 %v5526, %v6329
        %v6456 = vadd.f32 %v5529, %v6332
        %v6457 = vadd.f32 %v5534, %v6337
        %v6458 = vadd.f32 %v5537, %v6340
        %v6459 = vadd.f32 %v5542, %v6345
        %v6460 = vadd.f32 %v5545, %v6348
        %v6461 = vadd.f32 %v5550, %v6353
        %v6462 = vadd.f32 %v5553, %v6356
        %v6463 = vadd.f32 %v5558, %v6361
        %v6464 = vadd.f32 %v5561, %v6364
        %v6465 = vadd.f32 %v5566, %v6369
        %v6466 = vadd.f32 %v5569, %v6372
        %v6467 = vadd.f32 %v5574, %v6377
        %v6468 = vadd.f32 %v5577, %v6380
        %v6469 = vadd.f32 %v5582, %v6385
        %v6470 = vadd.f32 %v5585, %v6388
        %v6471 = vadd.f32 %v5590, %v6393
        %v6472 = vadd.f32 %v5593, %v6396
        %v6473 = vadd.f32 %v5598, %v6401
        %v6474 = vadd.f32 %v5601, %v6404
        %v6475 = vadd.f32 %v5606, %v6409
        %v6476 = vadd.f32 %v5609, %v6412
        %v6477 = vadd.f32 %v5614, %v6417
        %v6478 = vadd.f32 %v5617, %v6420
        %v6479 = vadd.f32 %v5622, %v6425
        %v6480 = vadd.f32 %v5625, %v6428
        %v6481 = vadd.f32 %v5630, %v6433
        %v6482 = vadd.f32 %v5633, %v6436
        %v6483 = vadd.f32 %v5638, %v6441
        %v6484 = vadd.f32 %v5641, %v6444
        %v6485 = vadd.f32 %v5646, %v6449
        %v6486 = vadd.f32 %v5649, %v6452
        %v6487 = vld [vmem:[%s4] sm:$0x1]
        %v6489 = vlaneseq
        %v6490 = vshrl.u32 %v6489, 7
        %v6491 = vsub.s32 0, %v6490
        %v6492 = vrot.slane %v6487, %v6491
        %v6494 = vadd.f32 %v6455, %v6492
        %v6495 = vadd.f32 %v6456, %v6492
        %v6496 = vadd.f32 %v6457, %v6492
        %v6497 = vadd.f32 %v6458, %v6492
        %v6498 = vadd.f32 %v6459, %v6492
        %v6499 = vadd.f32 %v6460, %v6492
        %v6500 = vadd.f32 %v6461, %v6492
        %v6501 = vadd.f32 %v6462, %v6492
        %v6502 = vadd.f32 %v6463, %v6492
        %v6503 = vadd.f32 %v6464, %v6492
        %v6504 = vadd.f32 %v6465, %v6492
        %v6505 = vadd.f32 %v6466, %v6492
        %v6506 = vadd.f32 %v6467, %v6492
        %v6507 = vadd.f32 %v6468, %v6492
        %v6508 = vadd.f32 %v6469, %v6492
        %v6509 = vadd.f32 %v6470, %v6492
        %v6510 = vadd.f32 %v6471, %v6492
        %v6511 = vadd.f32 %v6472, %v6492
        %v6512 = vadd.f32 %v6473, %v6492
        %v6513 = vadd.f32 %v6474, %v6492
        %v6514 = vadd.f32 %v6475, %v6492
        %v6515 = vadd.f32 %v6476, %v6492
        %v6516 = vadd.f32 %v6477, %v6492
        %v6517 = vadd.f32 %v6478, %v6492
        %v6518 = vadd.f32 %v6479, %v6492
        %v6519 = vadd.f32 %v6480, %v6492
        %v6520 = vadd.f32 %v6481, %v6492
        %v6521 = vadd.f32 %v6482, %v6492
        %v6522 = vadd.f32 %v6483, %v6492
        %v6523 = vadd.f32 %v6484, %v6492
        %v6524 = vadd.f32 %v6485, %v6492
        %v6525 = vadd.f32 %v6486, %v6492
        %vm6526 = vcmp.ge.f32.partialorder %v6494, 0.0
        %vm6527 = vcmp.ge.f32.partialorder %v6495, 0.0
        %vm6528 = vcmp.ge.f32.partialorder %v6496, 0.0
        %vm6529 = vcmp.ge.f32.partialorder %v6497, 0.0
        %vm6530 = vcmp.ge.f32.partialorder %v6498, 0.0
        %vm6531 = vcmp.ge.f32.partialorder %v6499, 0.0
        %vm6532 = vcmp.ge.f32.partialorder %v6500, 0.0
        %vm6533 = vcmp.ge.f32.partialorder %v6501, 0.0
        %vm6534 = vcmp.ge.f32.partialorder %v6502, 0.0
        %vm6535 = vcmp.ge.f32.partialorder %v6503, 0.0
        %vm6536 = vcmp.ge.f32.partialorder %v6504, 0.0
        %vm6537 = vcmp.ge.f32.partialorder %v6505, 0.0
        %vm6538 = vcmp.ge.f32.partialorder %v6506, 0.0
        %vm6539 = vcmp.ge.f32.partialorder %v6507, 0.0
        %vm6540 = vcmp.ge.f32.partialorder %v6508, 0.0
        %vm6541 = vcmp.ge.f32.partialorder %v6509, 0.0
        %vm6542 = vcmp.ge.f32.partialorder %v6510, 0.0
        %vm6543 = vcmp.ge.f32.partialorder %v6511, 0.0
        %vm6544 = vcmp.ge.f32.partialorder %v6512, 0.0
        %vm6545 = vcmp.ge.f32.partialorder %v6513, 0.0
        %vm6546 = vcmp.ge.f32.partialorder %v6514, 0.0
        %vm6547 = vcmp.ge.f32.partialorder %v6515, 0.0
        %vm6548 = vcmp.ge.f32.partialorder %v6516, 0.0
        %vm6549 = vcmp.ge.f32.partialorder %v6517, 0.0
        %vm6550 = vcmp.ge.f32.partialorder %v6518, 0.0
        %vm6551 = vcmp.ge.f32.partialorder %v6519, 0.0
        %vm6552 = vcmp.ge.f32.partialorder %v6520, 0.0
        %vm6553 = vcmp.ge.f32.partialorder %v6521, 0.0
        %vm6554 = vcmp.ge.f32.partialorder %v6522, 0.0
        %vm6555 = vcmp.ge.f32.partialorder %v6523, 0.0
        %vm6556 = vcmp.ge.f32.partialorder %v6524, 0.0
        %vm6557 = vcmp.ge.f32.partialorder %v6525, 0.0
        %v6558 = vmul.f32 %v6494, 0.1
        %v6559 = vmul.f32 %v6495, 0.1
        %v6560 = vmul.f32 %v6496, 0.1
        %v6561 = vmul.f32 %v6497, 0.1
        %v6562 = vmul.f32 %v6498, 0.1
        %v6563 = vmul.f32 %v6499, 0.1
        %v6564 = vmul.f32 %v6500, 0.1
        %v6565 = vmul.f32 %v6501, 0.1
        %v6566 = vmul.f32 %v6502, 0.1
        %v6567 = vmul.f32 %v6503, 0.1
        %v6568 = vmul.f32 %v6504, 0.1
        %v6569 = vmul.f32 %v6505, 0.1
        %v6570 = vmul.f32 %v6506, 0.1
        %v6571 = vmul.f32 %v6507, 0.1
        %v6572 = vmul.f32 %v6508, 0.1
        %v6573 = vmul.f32 %v6509, 0.1
        %v6574 = vmul.f32 %v6510, 0.1
        %v6575 = vmul.f32 %v6511, 0.1
        %v6576 = vmul.f32 %v6512, 0.1
        %v6577 = vmul.f32 %v6513, 0.1
        %v6578 = vmul.f32 %v6514, 0.1
        %v6579 = vmul.f32 %v6515, 0.1
        %v6580 = vmul.f32 %v6516, 0.1
        %v6581 = vmul.f32 %v6517, 0.1
        %v6582 = vmul.f32 %v6518, 0.1
        %v6583 = vmul.f32 %v6519, 0.1
        %v6584 = vmul.f32 %v6520, 0.1
        %v6585 = vmul.f32 %v6521, 0.1
        %v6586 = vmul.f32 %v6522, 0.1
        %v6587 = vmul.f32 %v6523, 0.1
        %v6588 = vmul.f32 %v6524, 0.1
        %v6589 = vmul.f32 %v6525, 0.1
        %v6590 = vsel %vm6526, %v6494, %v6558
        %v6591 = vsel %vm6527, %v6495, %v6559
        %v6592 = vsel %vm6528, %v6496, %v6560
        %v6593 = vsel %vm6529, %v6497, %v6561
        %v6594 = vsel %vm6530, %v6498, %v6562
        %v6595 = vsel %vm6531, %v6499, %v6563
        %v6596 = vsel %vm6532, %v6500, %v6564
        %v6597 = vsel %vm6533, %v6501, %v6565
        %v6598 = vsel %vm6534, %v6502, %v6566
        %v6599 = vsel %vm6535, %v6503, %v6567
        %v6600 = vsel %vm6536, %v6504, %v6568
        %v6601 = vsel %vm6537, %v6505, %v6569
        %v6602 = vsel %vm6538, %v6506, %v6570
        %v6603 = vsel %vm6539, %v6507, %v6571
        %v6604 = vsel %vm6540, %v6508, %v6572
        %v6605 = vsel %vm6541, %v6509, %v6573
        %v6606 = vsel %vm6542, %v6510, %v6574
        %v6607 = vsel %vm6543, %v6511, %v6575
        %v6608 = vsel %vm6544, %v6512, %v6576
        %v6609 = vsel %vm6545, %v6513, %v6577
        %v6610 = vsel %vm6546, %v6514, %v6578
        %v6611 = vsel %vm6547, %v6515, %v6579
        %v6612 = vsel %vm6548, %v6516, %v6580
        %v6613 = vsel %vm6549, %v6517, %v6581
        %v6614 = vsel %vm6550, %v6518, %v6582
        %v6615 = vsel %vm6551, %v6519, %v6583
        %v6616 = vsel %vm6552, %v6520, %v6584
        %v6617 = vsel %vm6553, %v6521, %v6585
        %v6618 = vsel %vm6554, %v6522, %v6586
        %v6619 = vsel %vm6555, %v6523, %v6587
        %v6620 = vsel %vm6556, %v6524, %v6588
        %v6621 = vsel %vm6557, %v6525, %v6589
        %v6622 = vld [vmem:[%s263] sm:$0x1]
        %v6624 = vlaneseq
        %v6625 = vshrl.u32 %v6624, 7
        %v6626 = vsub.s32 0, %v6625
        %v6627 = vrot.slane %v6622, %v6626
        %v6629 = vmul.f32 %v6590, %v6627
        %v6630 = vmul.f32 %v6591, %v6627
        %v6631 = vmul.f32 %v6592, %v6627
        %v6632 = vmul.f32 %v6593, %v6627
        %v6633 = vmul.f32 %v6594, %v6627
        %v6634 = vmul.f32 %v6595, %v6627
        %v6635 = vmul.f32 %v6596, %v6627
        %v6636 = vmul.f32 %v6597, %v6627
        %v6637 = vmul.f32 %v6598, %v6627
        %v6638 = vmul.f32 %v6599, %v6627
        %v6639 = vmul.f32 %v6600, %v6627
        %v6640 = vmul.f32 %v6601, %v6627
        %v6641 = vmul.f32 %v6602, %v6627
        %v6642 = vmul.f32 %v6603, %v6627
        %v6643 = vmul.f32 %v6604, %v6627
        %v6644 = vmul.f32 %v6605, %v6627
        %v6645 = vmul.f32 %v6606, %v6627
        %v6646 = vmul.f32 %v6607, %v6627
        %v6647 = vmul.f32 %v6608, %v6627
        %v6648 = vmul.f32 %v6609, %v6627
        %v6649 = vmul.f32 %v6610, %v6627
        %v6650 = vmul.f32 %v6611, %v6627
        %v6651 = vmul.f32 %v6612, %v6627
        %v6652 = vmul.f32 %v6613, %v6627
        %v6653 = vmul.f32 %v6614, %v6627
        %v6654 = vmul.f32 %v6615, %v6627
        %v6655 = vmul.f32 %v6616, %v6627
        %v6656 = vmul.f32 %v6617, %v6627
        %v6657 = vmul.f32 %v6618, %v6627
        %v6658 = vmul.f32 %v6619, %v6627
        %v6659 = vmul.f32 %v6620, %v6627
        %v6660 = vmul.f32 %v6621, %v6627
        %6661 = vst.msk [vmem:[%s255] sm:$0xff] %vm1340, %v6629
        %6662 = vst.msk [vmem:[%s255 + $0x8] sm:$0xff] %vm1340, %v6630
        %6663 = vst.msk [vmem:[%s255 + $0x10] sm:$0xff] %vm1340, %v6631
        %6664 = vst.msk [vmem:[%s255 + $0x18] sm:$0xff] %vm1340, %v6632
        %6665 = vst.msk [vmem:[%s255 + $0x20] sm:$0xff] %vm1340, %v6633
        %6666 = vst.msk [vmem:[%s255 + $0x28] sm:$0xff] %vm1340, %v6634
        %6667 = vst.msk [vmem:[%s255 + $0x30] sm:$0xff] %vm1340, %v6635
        %6668 = vst.msk [vmem:[%s255 + $0x38] sm:$0xff] %vm1340, %v6636
        %6669 = vst.msk [vmem:[%s255 + $0x40] sm:$0xff] %vm1340, %v6637
        %6670 = vst.msk [vmem:[%s255 + $0x48] sm:$0xff] %vm1340, %v6638
        %6671 = vst.msk [vmem:[%s255 + $0x50] sm:$0xff] %vm1340, %v6639
        %6672 = vst.msk [vmem:[%s255 + $0x58] sm:$0xff] %vm1340, %v6640
        %6673 = vst.msk [vmem:[%s255 + $0x60] sm:$0xff] %vm1340, %v6641
        %6674 = vst.msk [vmem:[%s255 + $0x68] sm:$0xff] %vm1340, %v6642
        %6675 = vst.msk [vmem:[%s255 + $0x70] sm:$0xff] %vm1340, %v6643
        %6676 = vst.msk [vmem:[%s255 + $0x78] sm:$0xff] %vm1340, %v6644
        %6677 = vst.msk [vmem:[%s255 + $0x80] sm:$0xff] %vm1340, %v6645
        %6678 = vst.msk [vmem:[%s255 + $0x88] sm:$0xff] %vm1340, %v6646
        %6679 = vst.msk [vmem:[%s255 + $0x90] sm:$0xff] %vm1340, %v6647
        %6680 = vst.msk [vmem:[%s255 + $0x98] sm:$0xff] %vm1340, %v6648
        %6681 = vst.msk [vmem:[%s255 + $0xa0] sm:$0xff] %vm1340, %v6649
        %6682 = vst.msk [vmem:[%s255 + $0xa8] sm:$0xff] %vm1340, %v6650
        %6683 = vst.msk [vmem:[%s255 + $0xb0] sm:$0xff] %vm1340, %v6651
        %6684 = vst.msk [vmem:[%s255 + $0xb8] sm:$0xff] %vm1340, %v6652
        %6685 = vst.msk [vmem:[%s255 + $0xc0] sm:$0xff] %vm1340, %v6653
        %6686 = vst.msk [vmem:[%s255 + $0xc8] sm:$0xff] %vm1340, %v6654
        %6687 = vst.msk [vmem:[%s255 + $0xd0] sm:$0xff] %vm1340, %v6655
        %6688 = vst.msk [vmem:[%s255 + $0xd8] sm:$0xff] %vm1340, %v6656
        %6689 = vst.msk [vmem:[%s255 + $0xe0] sm:$0xff] %vm1340, %v6657
        %6690 = vst.msk [vmem:[%s255 + $0xe8] sm:$0xff] %vm1340, %v6658
        %6691 = vst.msk [vmem:[%s255 + $0xf0] sm:$0xff] %vm1340, %v6659
        %6692 = vst.msk [vmem:[%s255 + $0xf8] sm:$0xff] %vm1340, %v6660
        %s6693 = sand.u32 %s164, 1
        %s6694 = scalar_lea.sflag [#allocation5], %s6693
        %s6695 = sand.u32 %s164, 1
        %s6696 = smul.addr %s6695, 256
        %s6697 = scalar_lea.vmem [#allocation4], %s6696
        // Predicated region
        $region45: #{tpu_custom_call.1} parent=43 // pred_check
          %p6698 = pneg %p174
        $region46: #{tpu_custom_call.1} parent=43 // pred_check_branch
          %6700 = sbr.rel (%p6698) target = $region48
        $region47: #{tpu_custom_call.1} parent=43 // pred_region
          %s6702 = ssub.s32 4096, 4096
          %6703 = vsyncadd %s6694, %s6702
          %s6704 = smul.addr %s20, 32
          %s6705 = smul.addr %s6704, 128
          %s6706 = scalar_lea.hbm %s6, %s6705
          %s6707 = sshll.u32 %s6697, 4
          %s6708 = int_to_ptr.vmem [resolvable:$true] %s6707
          %6713 = dma.vmem_to_hbm [thread:$0]  %s6708, 4096, %s6706, %s6694, 128, 128, 8
        $region48: #{tpu_custom_call.1} parent=43 // pred_fallthru
          _
      $region44: #{tpu_custom_call.1} parent=5 // pred_fallthru
        _
      %p6714 = scmp.le.s32.totalorder 2, %s15
      // Predicated region
      $region49: #{tpu_custom_call.1} parent=5 // pred_check
        %p6715 = pneg %p6714
      $region50: #{tpu_custom_call.1} parent=5 // pred_check_branch
        %6717 = sbr.rel (%p6715) target = $region52
      $region51: #{tpu_custom_call.1} parent=5 // pred_region
        %s6718 = ssub.s32 %s15, 2
        // Predicated region
        $region53: #{tpu_custom_call.1} parent=51 // pred_check
          %p6719 = pneg %p180
        $region54: #{tpu_custom_call.1} parent=51 // pred_check_branch
          %6721 = sbr.rel (%p6719) target = $region56
        $region55: #{tpu_custom_call.1} parent=51 // pred_region
          %s6722 = sand.u32 %s165, 1
          %s6723 = scalar_lea.sflag [#allocation5], %s6722
          %s6724 = sand.u32 %s165, 1
          %s6725 = smul.addr %s6724, 256
          %s6726 = scalar_lea.vmem [#allocation4], %s6725
          %6727 = dma.done %s6723, 4096
        $region56: #{tpu_custom_call.1} parent=51 // pred_fallthru
          _
      $region52: #{tpu_custom_call.1} parent=5 // pred_fallthru
        _
    $region6: #{tpu_custom_call.1} parent=1 // loop_footer
      %s19 = sadd.s32 1, %s15
    $region7: #{tpu_custom_call.1} parent=1 // loop_footer_branch
      %14 = sbr.rel target = $region3
    $region8: #{tpu_custom_call.1} parent=1 // loop_exit
      _
    %6728 = vsyncpa [#allocation5], 1
    %s6729 = scalar_lea.sflag [#allocation5], 1
    %6730 = vsyncpa %s6729, 1

</llo_original>
